<compile_context>
chip_gen: v7x
topology: tpu7x:2x2x1
jax: 0.10.0
libtpu: 0.0.40
codegen_flags: <defaults>
</compile_context>

<pallas_src>
import jax
import jax.numpy as jnp
import numpy as np
from jax.experimental import pallas as pl
from jax.experimental.pallas import tpu as pltpu

_EPS = 1e-5      # nn.InstanceNorm2d default eps
_SLOPE = 0.01    # nn.LeakyReLU default negative_slope


# ---------------------------------------------------------------------------
# Constant 0/1 selection matrices for a LANE-PACKED PAIR of samples
# (numpy, trace-time only).  Lane layout: [sample A | sample B].
# ---------------------------------------------------------------------------
def _pool_select_pair(h, w):
    """(4, 2*H*W, 2*Hh*Wh): corner b of each 2x2 window -> packed pooled pos."""
    hh, wh = h // 2, w // 2
    hw, sp = h * w, hh * wh
    s = np.zeros((4, 2 * hw, 2 * sp), np.float32)
    for ky in range(2):
        for kx in range(2):
            b = 2 * ky + kx
            for smp in range(2):
                for hy in range(hh):
                    for wx in range(wh):
                        src = smp * hw + (2 * hy + ky) * w + (2 * wx + kx)
                        dst = smp * sp + hy * wh + wx
                        s[b, src, dst] = 1.0
    return s


def _shift_select_pair(hh, wh):
    """(9, 2*Sp, 2*Sp): block-diagonal zero-padded shifts for 3x3 SAME conv."""
    sp = hh * wh
    t = np.zeros((9, 2 * sp, 2 * sp), np.float32)
    for k in range(9):
        dy, dx = k // 3 - 1, k % 3 - 1
        for smp in range(2):
            for hy in range(hh):
                for wx in range(wh):
                    yy, xx = hy + dy, wx + dx
                    if 0 <= yy < hh and 0 <= xx < wh:
                        t[k, smp * sp + yy * wh + xx, smp * sp + hy * wh + wx] = 1.0
    return t


def _mean_pair(sp):
    """(2*Sp, 2*Sp): block-diagonal per-sample lane-mean (broadcasts the mean)."""
    m = np.zeros((2 * sp, 2 * sp), np.float32)
    for smp in range(2):
        m[smp * sp:(smp + 1) * sp, smp * sp:(smp + 1) * sp] = 1.0 / sp
    return m


def _scatter_select_pair(hh, wh, h, w):
    """(4, 2*Sp, 2*H*W): stride-2 transpose-conv pixel scatter, both samples."""
    sp, hw = hh * wh, h * w
    g = np.zeros((4, 2 * sp, 2 * hw), np.float32)
    for ky in range(2):
        for kx in range(2):
            kk = 2 * ky + kx
            for smp in range(2):
                for hy in range(hh):
                    for wx in range(wh):
                        g[kk, smp * sp + hy * wh + wx,
                          smp * hw + (2 * hy + ky) * w + (2 * wx + kx)] = 1.0
    return g


# ---------------------------------------------------------------------------
# Fused Pallas kernel: TWO samples per grid step, everything stays in VMEM
# ---------------------------------------------------------------------------
def _unet_block_kernel(x_ref, pool_ref, shift_ref, mean_ref,
                       w1_ref, w2_ref, btw_ref, gsc_ref, btp_ref, o_ref):
    cin = x_ref.shape[1]                       # e.g. 4
    hw = x_ref.shape[2]                        # H*W (lane-dense, 256)
    cout = w1_ref.shape[0] // 9                # e.g. 8

    xa = x_ref[0]                              # (Cin, H*W)  sample 2i
    xb = x_ref[1]                              # (Cin, H*W)  sample 2i+1
    xcat = jnp.concatenate([xa, xb], axis=1)   # (Cin, 2*H*W) lane concat (512)

    # ---- MaxPool2d(2,2): corner gathers via MXU selection + VPU max ----------
    # result is lane-packed: (Cin, 2*Sp) = (Cin, 128), full-lane vregs.
    p = jnp.dot(xcat, pool_ref[0], preferred_element_type=jnp.float32)
    for k in range(1, 4):
        p = jnp.maximum(
            p, jnp.dot(xcat, pool_ref[k], preferred_element_type=jnp.float32))

    # ---- Conv2d(3x3, pad=1) + InstanceNorm2d + LeakyReLU (C, 2*Sp) layout ----
    def conv3_in_lrelu(hin, ws_ref):
        a = jnp.dot(ws_ref[...], hin, preferred_element_type=jnp.float32)  # (9*Cout, 128)
        y = jnp.dot(a[0:cout, :], shift_ref[0], preferred_element_type=jnp.float32)
        for k in range(1, 9):
            y = y + jnp.dot(a[k * cout:(k + 1) * cout, :], shift_ref[k],
                            preferred_element_type=jnp.float32)
        # Conv bias intentionally omitted: InstanceNorm2d(affine=False) cancels
        # it exactly ((y+b) - mean(y+b) == y - mean(y), var unchanged).
        mu = jnp.dot(y, mean_ref[...], preferred_element_type=jnp.float32)       # per-sample mean
        ey2 = jnp.dot(y * y, mean_ref[...], preferred_element_type=jnp.float32)  # per-sample E[y^2]
        y = (y - mu) * jax.lax.rsqrt(ey2 - mu * mu + _EPS)                        # biased var, f32
        return jnp.where(y > 0, y, _SLOPE * y)

    h1 = conv3_in_lrelu(p, w1_ref)             # (Cout, 128)
    h2 = conv3_in_lrelu(h1, w2_ref)            # (Cout, 128)

    # ---- ConvTranspose2d(k=2, s=2): weight matmul + fused pixel scatter ------
    z = jnp.dot(btw_ref[...], h2, preferred_element_type=jnp.float32)   # (4*Cin, 128)
    up = jnp.dot(z[0:cin, :], gsc_ref[0], preferred_element_type=jnp.float32)  # (Cin, 2*H*W)
    for kk in range(1, 4):
        up = up + jnp.dot(z[kk * cin:(kk + 1) * cin, :], gsc_ref[kk],
                          preferred_element_type=jnp.float32)
    up = up + btp_ref[...]                     # (Cin,1) bias broadcast

    # ---- channel concat [x, up] for both samples: direct row-range stores ----
    o_ref[0, 0:cin, :] = xa
    o_ref[1, 0:cin, :] = xb
    o_ref[0, cin:2 * cin, :] = up[:, 0:hw]
    o_ref[1, cin:2 * cin, :] = up[:, hw:2 * hw]


# ---------------------------------------------------------------------------
# Wrapper
# ---------------------------------------------------------------------------
@jax.jit
def unet_innermost_forward(x_nchw, params):
    """Forward pass of UnetSkipConnectionBlock(innermost=True).  x: (N, Cin, H, W)."""
    w1, b1, w2, b2, wt, bt = params
    del b1, b2  # conv biases cancel under InstanceNorm2d(affine=False)
    n, cin, h, w = x_nchw.shape
    cout = w1.shape[0]
    hh, wh = h // 2, w // 2
    hw, sp = h * w, hh * wh
    assert cout == 2 * cin and h % 2 == 0 and w % 2 == 0
    assert n % 2 == 0, "kernel packs 2 samples per grid step"

    f32 = jnp.float32
    # constant gather / shift / mean / scatter matrices (pair-packed, 0/1)
    pool = jnp.asarray(_pool_select_pair(h, w))           # (4, 2*hw, 2*sp)
    shift = jnp.asarray(_shift_select_pair(hh, wh))       # (9, 2*sp, 2*sp)
    mean_m = jnp.asarray(_mean_pair(sp))                  # (2*sp, 2*sp)
    gsc = jnp.asarray(_scatter_select_pair(hh, wh, h, w)) # (4, 2*sp, 2*hw)

    # weight rearrangement (tiny, trace-time)
    w1s = jnp.transpose(w1, (2, 3, 0, 1)).reshape(9 * cout, cin).astype(f32)
    w2s = jnp.transpose(w2, (2, 3, 0, 1)).reshape(9 * cout, cout).astype(f32)
    btw = jnp.transpose(wt, (2, 3, 1, 0)).reshape(4 * cin, cout).astype(f32)  # no zero padding
    btp = bt.reshape(cin, 1).astype(f32)

    x_flat = x_nchw.reshape(n, cin, hw).astype(f32)        # free reshape, lane-dense

    out = pl.pallas_call(
        _unet_block_kernel,
        out_shape=jax.ShapeDtypeStruct((n, 2 * cin, hw), f32),
        grid=(n // 2,),
        in_specs=[
            pl.BlockSpec((2, cin, hw), lambda i: (i, 0, 0)),           # x (2 samples / step)
            pl.BlockSpec((4, 2 * hw, 2 * sp), lambda i: (0, 0, 0)),    # pool corner selects
            pl.BlockSpec((9, 2 * sp, 2 * sp), lambda i: (0, 0, 0)),    # 3x3 shift matrices
            pl.BlockSpec((2 * sp, 2 * sp), lambda i: (0, 0)),          # per-sample mean matrix
            pl.BlockSpec((9 * cout, cin), lambda i: (0, 0)),           # conv1 weights (stacked)
            pl.BlockSpec((9 * cout, cout), lambda i: (0, 0)),          # conv2 weights (stacked)
            pl.BlockSpec((4 * cin, cout), lambda i: (0, 0)),           # convT weights (no pad)
            pl.BlockSpec((4, 2 * sp, 2 * hw), lambda i: (0, 0, 0)),    # convT scatter matrices
            pl.BlockSpec((cin, 1), lambda i: (0, 0)),                  # convT bias
        ],
        out_specs=pl.BlockSpec((2, 2 * cin, hw), lambda i: (i, 0, 0)),
        compiler_params=pltpu.CompilerParams(
            dimension_semantics=("parallel",),
            vmem_limit_bytes=32 * 1024 * 1024),
    )(x_flat, pool, shift, mean_m, w1s, w2s, btw, gsc, btp)

    return out.reshape(n, 2 * cin, h, w)                   # free reshape -> NCHW


# ---------------------------------------------------------------------------
# Pure-JAX reference (for self-check)
# ---------------------------------------------------------------------------
def reference_forward(x, params):
    w1, b1, w2, b2, wt, bt = params

    def conv3(z, w, b):
        y = jax.lax.conv_general_dilated(
            z, w, (1, 1), ((1, 1), (1, 1)),
            dimension_numbers=('NCHW', 'OIHW', 'NCHW'))
        return y + b[None, :, None, None]

    def inorm(y):
        mu = jnp.mean(y, axis=(2, 3), keepdims=True)
        var = jnp.mean((y - mu) ** 2, axis=(2, 3), keepdims=True)
        return (y - mu) / jnp.sqrt(var + _EPS)

    def lrelu(y):
        return jnp.where(y > 0, y, _SLOPE * y)

    p = jax.lax.reduce_window(x, -jnp.inf, jax.lax.max,
                              (1, 1, 2, 2), (1, 1, 2, 2), 'VALID')
    h = lrelu(inorm(conv3(p, w1, b1)))
    h = lrelu(inorm(conv3(h, w2, b2)))
    wflip = jnp.transpose(wt, (1, 0, 2, 3))[:, :, ::-1, ::-1]
    up = jax.lax.conv_general_dilated(
        h, wflip, (1, 1), ((1, 1), (1, 1)), lhs_dilation=(2, 2),
        dimension_numbers=('NCHW', 'OIHW', 'NCHW'))
    up = up + bt[None, :, None, None]
    return jnp.concatenate([x, up], axis=1)


# ---------------------------------------------------------------------------
if __name__ == "__main__":
    N, CIN, H, W = 2, 4, 16, 16
    COUT = 2 * CIN  # innermost block requires out_channels == 2 * in_channels

    key = jax.random.PRNGKey(0)
    kx, k1, k2, k3, k4, k5, k6 = jax.random.split(key, 7)

    x = jax.random.normal(kx, (N, CIN, H, W), jnp.float32)

    # Deterministic synthetic parameters (shapes follow the nn.Module __init__).
    w1 = 0.1 * jax.random.normal(k1, (COUT, CIN, 3, 3), jnp.float32)   # conv1
    b1 = 0.1 * jax.random.normal(k2, (COUT,), jnp.float32)
    w2 = 0.1 * jax.random.normal(k3, (COUT, COUT, 3, 3), jnp.float32)  # conv2
    b2 = 0.1 * jax.random.normal(k4, (COUT,), jnp.float32)
    wt = 0.1 * jax.random.normal(k5, (COUT, CIN, 2, 2), jnp.float32)   # ConvTranspose2d(2*Cin, Cin, 2, 2)
    bt = 0.1 * jax.random.normal(k6, (CIN,), jnp.float32)
    params = (w1, b1, w2, b2, wt, bt)

    out = unet_innermost_forward(x, params)
    out = jax.block_until_ready(out)

    assert out.shape == (N, 2 * CIN, H, W), out.shape

    ref = reference_forward(x, params)
    np.testing.assert_allclose(np.asarray(out), np.asarray(ref), rtol=2e-3, atol=2e-3)

    print("KERNEL_OK")
</pallas_src>

<mosaic_0001>
module attributes {stable_mosaic.version = 11 : i64} {
  func.func @_unet_block_kernel(%arg0: i32, %arg1: memref<2x4x256xf32, #tpu.memory_space<vmem>>, %arg2: memref<4x512x128xf32, #tpu.memory_space<vmem>>, %arg3: memref<9x128x128xf32, #tpu.memory_space<vmem>>, %arg4: memref<128x128xf32, #tpu.memory_space<vmem>>, %arg5: memref<72x4xf32, #tpu.memory_space<vmem>>, %arg6: memref<72x8xf32, #tpu.memory_space<vmem>>, %arg7: memref<16x8xf32, #tpu.memory_space<vmem>>, %arg8: memref<4x128x512xf32, #tpu.memory_space<vmem>>, %arg9: memref<4x1xf32, #tpu.memory_space<vmem>>, %arg10: memref<2x8x256xf32, #tpu.memory_space<vmem>>) attributes {dimension_semantics = [#tpu.dimension_semantics<parallel>], iteration_bounds = array<i64: 1>, scalar_prefetch = 0 : i64, scratch_operands = 0 : i64, tpu.core_type = #tpu.core_type<tc>, window_params = [{transform_indices = @transform_0, window_bounds = array<i64: 2, 4, 256>}, {pipeline_mode = #tpu.pipeline_mode<synchronous>, transform_indices = @transform_1, window_bounds = array<i64: 4, 512, 128>}, {pipeline_mode = #tpu.pipeline_mode<synchronous>, transform_indices = @transform_2, window_bounds = array<i64: 9, 128, 128>}, {pipeline_mode = #tpu.pipeline_mode<synchronous>, transform_indices = @transform_3, window_bounds = array<i64: 128, 128>}, {pipeline_mode = #tpu.pipeline_mode<synchronous>, transform_indices = @transform_4, window_bounds = array<i64: 72, 4>}, {pipeline_mode = #tpu.pipeline_mode<synchronous>, transform_indices = @transform_5, window_bounds = array<i64: 72, 8>}, {pipeline_mode = #tpu.pipeline_mode<synchronous>, transform_indices = @transform_6, window_bounds = array<i64: 16, 8>}, {pipeline_mode = #tpu.pipeline_mode<synchronous>, transform_indices = @transform_7, window_bounds = array<i64: 4, 128, 512>}, {pipeline_mode = #tpu.pipeline_mode<synchronous>, transform_indices = @transform_8, window_bounds = array<i64: 4, 1>}, {transform_indices = @transform_9, window_bounds = array<i64: 2, 8, 256>}]} {
    %c0 = arith.constant 0 : index
    %c0_0 = arith.constant 0 : index
    %c0_1 = arith.constant 0 : index
    %0 = vector.load %arg1[%c0, %c0_0, %c0_1] : memref<2x4x256xf32, #tpu.memory_space<vmem>>, vector<1x4x256xf32>
    %1 = vector.shape_cast %0 : vector<1x4x256xf32> to vector<4x256xf32>
    %c1 = arith.constant 1 : index
    %c0_2 = arith.constant 0 : index
    %c0_3 = arith.constant 0 : index
    %2 = vector.load %arg1[%c1, %c0_2, %c0_3] : memref<2x4x256xf32, #tpu.memory_space<vmem>>, vector<1x4x256xf32>
    %3 = vector.shape_cast %2 : vector<1x4x256xf32> to vector<4x256xf32>
    %4 = tpu.concatenate %1, %3 in 1 : vector<4x256xf32>, vector<4x256xf32> -> vector<4x512xf32>
    %c0_4 = arith.constant 0 : index
    %c0_5 = arith.constant 0 : index
    %c0_6 = arith.constant 0 : index
    %5 = vector.load %arg2[%c0_4, %c0_5, %c0_6] : memref<4x512x128xf32, #tpu.memory_space<vmem>>, vector<1x512x128xf32>
    %6 = vector.shape_cast %5 : vector<1x512x128xf32> to vector<512x128xf32>
    %cst = arith.constant dense<0.000000e+00> : vector<4x128xf32>
    %7 = tpu.matmul %4, %6, %cst {dimension_numbers = #tpu.dot_dimension_numbers<[1], [0], [0], [1], [0, 0, 1, 1], [], []>} : vector<4x512xf32>, vector<512x128xf32>, vector<4x128xf32> -> vector<4x128xf32>
    %c1_7 = arith.constant 1 : index
    %c0_8 = arith.constant 0 : index
    %c0_9 = arith.constant 0 : index
    %8 = vector.load %arg2[%c1_7, %c0_8, %c0_9] : memref<4x512x128xf32, #tpu.memory_space<vmem>>, vector<1x512x128xf32>
    %9 = vector.shape_cast %8 : vector<1x512x128xf32> to vector<512x128xf32>
    %cst_10 = arith.constant dense<0.000000e+00> : vector<4x128xf32>
    %10 = tpu.matmul %4, %9, %cst_10 {dimension_numbers = #tpu.dot_dimension_numbers<[1], [0], [0], [1], [0, 0, 1, 1], [], []>} : vector<4x512xf32>, vector<512x128xf32>, vector<4x128xf32> -> vector<4x128xf32>
    %11 = arith.maximumf %7, %10 : vector<4x128xf32>
    %c2 = arith.constant 2 : index
    %c0_11 = arith.constant 0 : index
    %c0_12 = arith.constant 0 : index
    %12 = vector.load %arg2[%c2, %c0_11, %c0_12] : memref<4x512x128xf32, #tpu.memory_space<vmem>>, vector<1x512x128xf32>
    %13 = vector.shape_cast %12 : vector<1x512x128xf32> to vector<512x128xf32>
    %cst_13 = arith.constant dense<0.000000e+00> : vector<4x128xf32>
    %14 = tpu.matmul %4, %13, %cst_13 {dimension_numbers = #tpu.dot_dimension_numbers<[1], [0], [0], [1], [0, 0, 1, 1], [], []>} : vector<4x512xf32>, vector<512x128xf32>, vector<4x128xf32> -> vector<4x128xf32>
    %15 = arith.maximumf %11, %14 : vector<4x128xf32>
    %c3 = arith.constant 3 : index
    %c0_14 = arith.constant 0 : index
    %c0_15 = arith.constant 0 : index
    %16 = vector.load %arg2[%c3, %c0_14, %c0_15] : memref<4x512x128xf32, #tpu.memory_space<vmem>>, vector<1x512x128xf32>
    %17 = vector.shape_cast %16 : vector<1x512x128xf32> to vector<512x128xf32>
    %cst_16 = arith.constant dense<0.000000e+00> : vector<4x128xf32>
    %18 = tpu.matmul %4, %17, %cst_16 {dimension_numbers = #tpu.dot_dimension_numbers<[1], [0], [0], [1], [0, 0, 1, 1], [], []>} : vector<4x512xf32>, vector<512x128xf32>, vector<4x128xf32> -> vector<4x128xf32>
    %19 = arith.maximumf %15, %18 : vector<4x128xf32>
    %c0_17 = arith.constant 0 : index
    %c0_18 = arith.constant 0 : index
    %20 = vector.load %arg5[%c0_17, %c0_18] : memref<72x4xf32, #tpu.memory_space<vmem>>, vector<72x4xf32>
    %cst_19 = arith.constant dense<0.000000e+00> : vector<72x128xf32>
    %21 = tpu.matmul %20, %19, %cst_19 {dimension_numbers = #tpu.dot_dimension_numbers<[1], [0], [0], [1], [0, 0, 1, 1], [], []>} : vector<72x4xf32>, vector<4x128xf32>, vector<72x128xf32> -> vector<72x128xf32>
    %22 = vector.extract_strided_slice %21 {offsets = [0, 0], sizes = [8, 128], strides = [1, 1]} : vector<72x128xf32> to vector<8x128xf32>
    %c0_20 = arith.constant 0 : index
    %c0_21 = arith.constant 0 : index
    %c0_22 = arith.constant 0 : index
    %23 = vector.load %arg3[%c0_20, %c0_21, %c0_22] : memref<9x128x128xf32, #tpu.memory_space<vmem>>, vector<1x128x128xf32>
    %24 = vector.shape_cast %23 : vector<1x128x128xf32> to vector<128x128xf32>
    %cst_23 = arith.constant dense<0.000000e+00> : vector<8x128xf32>
    %25 = tpu.matmul %22, %24, %cst_23 {dimension_numbers = #tpu.dot_dimension_numbers<[1], [0], [0], [1], [0, 0, 1, 1], [], []>} : vector<8x128xf32>, vector<128x128xf32>, vector<8x128xf32> -> vector<8x128xf32>
    %26 = vector.extract_strided_slice %21 {offsets = [8, 0], sizes = [8, 128], strides = [1, 1]} : vector<72x128xf32> to vector<8x128xf32>
    %c1_24 = arith.constant 1 : index
    %c0_25 = arith.constant 0 : index
    %c0_26 = arith.constant 0 : index
    %27 = vector.load %arg3[%c1_24, %c0_25, %c0_26] : memref<9x128x128xf32, #tpu.memory_space<vmem>>, vector<1x128x128xf32>
    %28 = vector.shape_cast %27 : vector<1x128x128xf32> to vector<128x128xf32>
    %cst_27 = arith.constant dense<0.000000e+00> : vector<8x128xf32>
    %29 = tpu.matmul %26, %28, %cst_27 {dimension_numbers = #tpu.dot_dimension_numbers<[1], [0], [0], [1], [0, 0, 1, 1], [], []>} : vector<8x128xf32>, vector<128x128xf32>, vector<8x128xf32> -> vector<8x128xf32>
    %30 = arith.addf %25, %29 : vector<8x128xf32>
    %31 = vector.extract_strided_slice %21 {offsets = [16, 0], sizes = [8, 128], strides = [1, 1]} : vector<72x128xf32> to vector<8x128xf32>
    %c2_28 = arith.constant 2 : index
    %c0_29 = arith.constant 0 : index
    %c0_30 = arith.constant 0 : index
    %32 = vector.load %arg3[%c2_28, %c0_29, %c0_30] : memref<9x128x128xf32, #tpu.memory_space<vmem>>, vector<1x128x128xf32>
    %33 = vector.shape_cast %32 : vector<1x128x128xf32> to vector<128x128xf32>
    %cst_31 = arith.constant dense<0.000000e+00> : vector<8x128xf32>
    %34 = tpu.matmul %31, %33, %cst_31 {dimension_numbers = #tpu.dot_dimension_numbers<[1], [0], [0], [1], [0, 0, 1, 1], [], []>} : vector<8x128xf32>, vector<128x128xf32>, vector<8x128xf32> -> vector<8x128xf32>
    %35 = arith.addf %30, %34 : vector<8x128xf32>
    %36 = vector.extract_strided_slice %21 {offsets = [24, 0], sizes = [8, 128], strides = [1, 1]} : vector<72x128xf32> to vector<8x128xf32>
    %c3_32 = arith.constant 3 : index
    %c0_33 = arith.constant 0 : index
    %c0_34 = arith.constant 0 : index
    %37 = vector.load %arg3[%c3_32, %c0_33, %c0_34] : memref<9x128x128xf32, #tpu.memory_space<vmem>>, vector<1x128x128xf32>
    %38 = vector.shape_cast %37 : vector<1x128x128xf32> to vector<128x128xf32>
    %cst_35 = arith.constant dense<0.000000e+00> : vector<8x128xf32>
    %39 = tpu.matmul %36, %38, %cst_35 {dimension_numbers = #tpu.dot_dimension_numbers<[1], [0], [0], [1], [0, 0, 1, 1], [], []>} : vector<8x128xf32>, vector<128x128xf32>, vector<8x128xf32> -> vector<8x128xf32>
    %40 = arith.addf %35, %39 : vector<8x128xf32>
    %41 = vector.extract_strided_slice %21 {offsets = [32, 0], sizes = [8, 128], strides = [1, 1]} : vector<72x128xf32> to vector<8x128xf32>
    %c4 = arith.constant 4 : index
    %c0_36 = arith.constant 0 : index
    %c0_37 = arith.constant 0 : index
    %42 = vector.load %arg3[%c4, %c0_36, %c0_37] : memref<9x128x128xf32, #tpu.memory_space<vmem>>, vector<1x128x128xf32>
    %43 = vector.shape_cast %42 : vector<1x128x128xf32> to vector<128x128xf32>
    %cst_38 = arith.constant dense<0.000000e+00> : vector<8x128xf32>
    %44 = tpu.matmul %41, %43, %cst_38 {dimension_numbers = #tpu.dot_dimension_numbers<[1], [0], [0], [1], [0, 0, 1, 1], [], []>} : vector<8x128xf32>, vector<128x128xf32>, vector<8x128xf32> -> vector<8x128xf32>
    %45 = arith.addf %40, %44 : vector<8x128xf32>
    %46 = vector.extract_strided_slice %21 {offsets = [40, 0], sizes = [8, 128], strides = [1, 1]} : vector<72x128xf32> to vector<8x128xf32>
    %c5 = arith.constant 5 : index
    %c0_39 = arith.constant 0 : index
    %c0_40 = arith.constant 0 : index
    %47 = vector.load %arg3[%c5, %c0_39, %c0_40] : memref<9x128x128xf32, #tpu.memory_space<vmem>>, vector<1x128x128xf32>
    %48 = vector.shape_cast %47 : vector<1x128x128xf32> to vector<128x128xf32>
    %cst_41 = arith.constant dense<0.000000e+00> : vector<8x128xf32>
    %49 = tpu.matmul %46, %48, %cst_41 {dimension_numbers = #tpu.dot_dimension_numbers<[1], [0], [0], [1], [0, 0, 1, 1], [], []>} : vector<8x128xf32>, vector<128x128xf32>, vector<8x128xf32> -> vector<8x128xf32>
    %50 = arith.addf %45, %49 : vector<8x128xf32>
    %51 = vector.extract_strided_slice %21 {offsets = [48, 0], sizes = [8, 128], strides = [1, 1]} : vector<72x128xf32> to vector<8x128xf32>
    %c6 = arith.constant 6 : index
    %c0_42 = arith.constant 0 : index
    %c0_43 = arith.constant 0 : index
    %52 = vector.load %arg3[%c6, %c0_42, %c0_43] : memref<9x128x128xf32, #tpu.memory_space<vmem>>, vector<1x128x128xf32>
    %53 = vector.shape_cast %52 : vector<1x128x128xf32> to vector<128x128xf32>
    %cst_44 = arith.constant dense<0.000000e+00> : vector<8x128xf32>
    %54 = tpu.matmul %51, %53, %cst_44 {dimension_numbers = #tpu.dot_dimension_numbers<[1], [0], [0], [1], [0, 0, 1, 1], [], []>} : vector<8x128xf32>, vector<128x128xf32>, vector<8x128xf32> -> vector<8x128xf32>
    %55 = arith.addf %50, %54 : vector<8x128xf32>
    %56 = vector.extract_strided_slice %21 {offsets = [56, 0], sizes = [8, 128], strides = [1, 1]} : vector<72x128xf32> to vector<8x128xf32>
    %c7 = arith.constant 7 : index
    %c0_45 = arith.constant 0 : index
    %c0_46 = arith.constant 0 : index
    %57 = vector.load %arg3[%c7, %c0_45, %c0_46] : memref<9x128x128xf32, #tpu.memory_space<vmem>>, vector<1x128x128xf32>
    %58 = vector.shape_cast %57 : vector<1x128x128xf32> to vector<128x128xf32>
    %cst_47 = arith.constant dense<0.000000e+00> : vector<8x128xf32>
    %59 = tpu.matmul %56, %58, %cst_47 {dimension_numbers = #tpu.dot_dimension_numbers<[1], [0], [0], [1], [0, 0, 1, 1], [], []>} : vector<8x128xf32>, vector<128x128xf32>, vector<8x128xf32> -> vector<8x128xf32>
    %60 = arith.addf %55, %59 : vector<8x128xf32>
    %61 = vector.extract_strided_slice %21 {offsets = [64, 0], sizes = [8, 128], strides = [1, 1]} : vector<72x128xf32> to vector<8x128xf32>
    %c8 = arith.constant 8 : index
    %c0_48 = arith.constant 0 : index
    %c0_49 = arith.constant 0 : index
    %62 = vector.load %arg3[%c8, %c0_48, %c0_49] : memref<9x128x128xf32, #tpu.memory_space<vmem>>, vector<1x128x128xf32>
    %63 = vector.shape_cast %62 : vector<1x128x128xf32> to vector<128x128xf32>
    %cst_50 = arith.constant dense<0.000000e+00> : vector<8x128xf32>
    %64 = tpu.matmul %61, %63, %cst_50 {dimension_numbers = #tpu.dot_dimension_numbers<[1], [0], [0], [1], [0, 0, 1, 1], [], []>} : vector<8x128xf32>, vector<128x128xf32>, vector<8x128xf32> -> vector<8x128xf32>
    %65 = arith.addf %60, %64 : vector<8x128xf32>
    %c0_51 = arith.constant 0 : index
    %c0_52 = arith.constant 0 : index
    %66 = vector.load %arg4[%c0_51, %c0_52] : memref<128x128xf32, #tpu.memory_space<vmem>>, vector<128x128xf32>
    %cst_53 = arith.constant dense<0.000000e+00> : vector<8x128xf32>
    %67 = tpu.matmul %65, %66, %cst_53 {dimension_numbers = #tpu.dot_dimension_numbers<[1], [0], [0], [1], [0, 0, 1, 1], [], []>} : vector<8x128xf32>, vector<128x128xf32>, vector<8x128xf32> -> vector<8x128xf32>
    %68 = arith.mulf %65, %65 : vector<8x128xf32>
    %c0_54 = arith.constant 0 : index
    %c0_55 = arith.constant 0 : index
    %69 = vector.load %arg4[%c0_54, %c0_55] : memref<128x128xf32, #tpu.memory_space<vmem>>, vector<128x128xf32>
    %cst_56 = arith.constant dense<0.000000e+00> : vector<8x128xf32>
    %70 = tpu.matmul %68, %69, %cst_56 {dimension_numbers = #tpu.dot_dimension_numbers<[1], [0], [0], [1], [0, 0, 1, 1], [], []>} : vector<8x128xf32>, vector<128x128xf32>, vector<8x128xf32> -> vector<8x128xf32>
    %71 = arith.subf %65, %67 : vector<8x128xf32>
    %72 = arith.mulf %67, %67 : vector<8x128xf32>
    %73 = arith.subf %70, %72 : vector<8x128xf32>
    %cst_57 = arith.constant 9.99999974E-6 : f32
    %74 = vector.broadcast %cst_57 : f32 to vector<8x128xf32>
    %75 = arith.addf %73, %74 : vector<8x128xf32>
    %76 = math.rsqrt %75 : vector<8x128xf32>
    %77 = arith.mulf %71, %76 : vector<8x128xf32>
    %cst_58 = arith.constant 0.000000e+00 : f32
    %78 = vector.broadcast %cst_58 : f32 to vector<8x128xf32>
    %79 = arith.cmpf ogt, %77, %78 : vector<8x128xf32>
    %cst_59 = arith.constant 0.00999999977 : f32
    %80 = vector.broadcast %cst_59 : f32 to vector<8x128xf32>
    %81 = arith.mulf %80, %77 : vector<8x128xf32>
    %82 = arith.select %79, %77, %81 : vector<8x128xi1>, vector<8x128xf32>
    %c0_60 = arith.constant 0 : index
    %c0_61 = arith.constant 0 : index
    %83 = vector.load %arg6[%c0_60, %c0_61] : memref<72x8xf32, #tpu.memory_space<vmem>>, vector<72x8xf32>
    %cst_62 = arith.constant dense<0.000000e+00> : vector<72x128xf32>
    %84 = tpu.matmul %83, %82, %cst_62 {dimension_numbers = #tpu.dot_dimension_numbers<[1], [0], [0], [1], [0, 0, 1, 1], [], []>} : vector<72x8xf32>, vector<8x128xf32>, vector<72x128xf32> -> vector<72x128xf32>
    %85 = vector.extract_strided_slice %84 {offsets = [0, 0], sizes = [8, 128], strides = [1, 1]} : vector<72x128xf32> to vector<8x128xf32>
    %c0_63 = arith.constant 0 : index
    %c0_64 = arith.constant 0 : index
    %c0_65 = arith.constant 0 : index
    %86 = vector.load %arg3[%c0_63, %c0_64, %c0_65] : memref<9x128x128xf32, #tpu.memory_space<vmem>>, vector<1x128x128xf32>
    %87 = vector.shape_cast %86 : vector<1x128x128xf32> to vector<128x128xf32>
    %cst_66 = arith.constant dense<0.000000e+00> : vector<8x128xf32>
    %88 = tpu.matmul %85, %87, %cst_66 {dimension_numbers = #tpu.dot_dimension_numbers<[1], [0], [0], [1], [0, 0, 1, 1], [], []>} : vector<8x128xf32>, vector<128x128xf32>, vector<8x128xf32> -> vector<8x128xf32>
    %89 = vector.extract_strided_slice %84 {offsets = [8, 0], sizes = [8, 128], strides = [1, 1]} : vector<72x128xf32> to vector<8x128xf32>
    %c1_67 = arith.constant 1 : index
    %c0_68 = arith.constant 0 : index
    %c0_69 = arith.constant 0 : index
    %90 = vector.load %arg3[%c1_67, %c0_68, %c0_69] : memref<9x128x128xf32, #tpu.memory_space<vmem>>, vector<1x128x128xf32>
    %91 = vector.shape_cast %90 : vector<1x128x128xf32> to vector<128x128xf32>
    %cst_70 = arith.constant dense<0.000000e+00> : vector<8x128xf32>
    %92 = tpu.matmul %89, %91, %cst_70 {dimension_numbers = #tpu.dot_dimension_numbers<[1], [0], [0], [1], [0, 0, 1, 1], [], []>} : vector<8x128xf32>, vector<128x128xf32>, vector<8x128xf32> -> vector<8x128xf32>
    %93 = arith.addf %88, %92 : vector<8x128xf32>
    %94 = vector.extract_strided_slice %84 {offsets = [16, 0], sizes = [8, 128], strides = [1, 1]} : vector<72x128xf32> to vector<8x128xf32>
    %c2_71 = arith.constant 2 : index
    %c0_72 = arith.constant 0 : index
    %c0_73 = arith.constant 0 : index
    %95 = vector.load %arg3[%c2_71, %c0_72, %c0_73] : memref<9x128x128xf32, #tpu.memory_space<vmem>>, vector<1x128x128xf32>
    %96 = vector.shape_cast %95 : vector<1x128x128xf32> to vector<128x128xf32>
    %cst_74 = arith.constant dense<0.000000e+00> : vector<8x128xf32>
    %97 = tpu.matmul %94, %96, %cst_74 {dimension_numbers = #tpu.dot_dimension_numbers<[1], [0], [0], [1], [0, 0, 1, 1], [], []>} : vector<8x128xf32>, vector<128x128xf32>, vector<8x128xf32> -> vector<8x128xf32>
    %98 = arith.addf %93, %97 : vector<8x128xf32>
    %99 = vector.extract_strided_slice %84 {offsets = [24, 0], sizes = [8, 128], strides = [1, 1]} : vector<72x128xf32> to vector<8x128xf32>
    %c3_75 = arith.constant 3 : index
    %c0_76 = arith.constant 0 : index
    %c0_77 = arith.constant 0 : index
    %100 = vector.load %arg3[%c3_75, %c0_76, %c0_77] : memref<9x128x128xf32, #tpu.memory_space<vmem>>, vector<1x128x128xf32>
    %101 = vector.shape_cast %100 : vector<1x128x128xf32> to vector<128x128xf32>
    %cst_78 = arith.constant dense<0.000000e+00> : vector<8x128xf32>
    %102 = tpu.matmul %99, %101, %cst_78 {dimension_numbers = #tpu.dot_dimension_numbers<[1], [0], [0], [1], [0, 0, 1, 1], [], []>} : vector<8x128xf32>, vector<128x128xf32>, vector<8x128xf32> -> vector<8x128xf32>
    %103 = arith.addf %98, %102 : vector<8x128xf32>
    %104 = vector.extract_strided_slice %84 {offsets = [32, 0], sizes = [8, 128], strides = [1, 1]} : vector<72x128xf32> to vector<8x128xf32>
    %c4_79 = arith.constant 4 : index
    %c0_80 = arith.constant 0 : index
    %c0_81 = arith.constant 0 : index
    %105 = vector.load %arg3[%c4_79, %c0_80, %c0_81] : memref<9x128x128xf32, #tpu.memory_space<vmem>>, vector<1x128x128xf32>
    %106 = vector.shape_cast %105 : vector<1x128x128xf32> to vector<128x128xf32>
    %cst_82 = arith.constant dense<0.000000e+00> : vector<8x128xf32>
    %107 = tpu.matmul %104, %106, %cst_82 {dimension_numbers = #tpu.dot_dimension_numbers<[1], [0], [0], [1], [0, 0, 1, 1], [], []>} : vector<8x128xf32>, vector<128x128xf32>, vector<8x128xf32> -> vector<8x128xf32>
    %108 = arith.addf %103, %107 : vector<8x128xf32>
    %109 = vector.extract_strided_slice %84 {offsets = [40, 0], sizes = [8, 128], strides = [1, 1]} : vector<72x128xf32> to vector<8x128xf32>
    %c5_83 = arith.constant 5 : index
    %c0_84 = arith.constant 0 : index
    %c0_85 = arith.constant 0 : index
    %110 = vector.load %arg3[%c5_83, %c0_84, %c0_85] : memref<9x128x128xf32, #tpu.memory_space<vmem>>, vector<1x128x128xf32>
    %111 = vector.shape_cast %110 : vector<1x128x128xf32> to vector<128x128xf32>
    %cst_86 = arith.constant dense<0.000000e+00> : vector<8x128xf32>
    %112 = tpu.matmul %109, %111, %cst_86 {dimension_numbers = #tpu.dot_dimension_numbers<[1], [0], [0], [1], [0, 0, 1, 1], [], []>} : vector<8x128xf32>, vector<128x128xf32>, vector<8x128xf32> -> vector<8x128xf32>
    %113 = arith.addf %108, %112 : vector<8x128xf32>
    %114 = vector.extract_strided_slice %84 {offsets = [48, 0], sizes = [8, 128], strides = [1, 1]} : vector<72x128xf32> to vector<8x128xf32>
    %c6_87 = arith.constant 6 : index
    %c0_88 = arith.constant 0 : index
    %c0_89 = arith.constant 0 : index
    %115 = vector.load %arg3[%c6_87, %c0_88, %c0_89] : memref<9x128x128xf32, #tpu.memory_space<vmem>>, vector<1x128x128xf32>
    %116 = vector.shape_cast %115 : vector<1x128x128xf32> to vector<128x128xf32>
    %cst_90 = arith.constant dense<0.000000e+00> : vector<8x128xf32>
    %117 = tpu.matmul %114, %116, %cst_90 {dimension_numbers = #tpu.dot_dimension_numbers<[1], [0], [0], [1], [0, 0, 1, 1], [], []>} : vector<8x128xf32>, vector<128x128xf32>, vector<8x128xf32> -> vector<8x128xf32>
    %118 = arith.addf %113, %117 : vector<8x128xf32>
    %119 = vector.extract_strided_slice %84 {offsets = [56, 0], sizes = [8, 128], strides = [1, 1]} : vector<72x128xf32> to vector<8x128xf32>
    %c7_91 = arith.constant 7 : index
    %c0_92 = arith.constant 0 : index
    %c0_93 = arith.constant 0 : index
    %120 = vector.load %arg3[%c7_91, %c0_92, %c0_93] : memref<9x128x128xf32, #tpu.memory_space<vmem>>, vector<1x128x128xf32>
    %121 = vector.shape_cast %120 : vector<1x128x128xf32> to vector<128x128xf32>
    %cst_94 = arith.constant dense<0.000000e+00> : vector<8x128xf32>
    %122 = tpu.matmul %119, %121, %cst_94 {dimension_numbers = #tpu.dot_dimension_numbers<[1], [0], [0], [1], [0, 0, 1, 1], [], []>} : vector<8x128xf32>, vector<128x128xf32>, vector<8x128xf32> -> vector<8x128xf32>
    %123 = arith.addf %118, %122 : vector<8x128xf32>
    %124 = vector.extract_strided_slice %84 {offsets = [64, 0], sizes = [8, 128], strides = [1, 1]} : vector<72x128xf32> to vector<8x128xf32>
    %c8_95 = arith.constant 8 : index
    %c0_96 = arith.constant 0 : index
    %c0_97 = arith.constant 0 : index
    %125 = vector.load %arg3[%c8_95, %c0_96, %c0_97] : memref<9x128x128xf32, #tpu.memory_space<vmem>>, vector<1x128x128xf32>
    %126 = vector.shape_cast %125 : vector<1x128x128xf32> to vector<128x128xf32>
    %cst_98 = arith.constant dense<0.000000e+00> : vector<8x128xf32>
    %127 = tpu.matmul %124, %126, %cst_98 {dimension_numbers = #tpu.dot_dimension_numbers<[1], [0], [0], [1], [0, 0, 1, 1], [], []>} : vector<8x128xf32>, vector<128x128xf32>, vector<8x128xf32> -> vector<8x128xf32>
    %128 = arith.addf %123, %127 : vector<8x128xf32>
    %c0_99 = arith.constant 0 : index
    %c0_100 = arith.constant 0 : index
    %129 = vector.load %arg4[%c0_99, %c0_100] : memref<128x128xf32, #tpu.memory_space<vmem>>, vector<128x128xf32>
    %cst_101 = arith.constant dense<0.000000e+00> : vector<8x128xf32>
    %130 = tpu.matmul %128, %129, %cst_101 {dimension_numbers = #tpu.dot_dimension_numbers<[1], [0], [0], [1], [0, 0, 1, 1], [], []>} : vector<8x128xf32>, vector<128x128xf32>, vector<8x128xf32> -> vector<8x128xf32>
    %131 = arith.mulf %128, %128 : vector<8x128xf32>
    %c0_102 = arith.constant 0 : index
    %c0_103 = arith.constant 0 : index
    %132 = vector.load %arg4[%c0_102, %c0_103] : memref<128x128xf32, #tpu.memory_space<vmem>>, vector<128x128xf32>
    %cst_104 = arith.constant dense<0.000000e+00> : vector<8x128xf32>
    %133 = tpu.matmul %131, %132, %cst_104 {dimension_numbers = #tpu.dot_dimension_numbers<[1], [0], [0], [1], [0, 0, 1, 1], [], []>} : vector<8x128xf32>, vector<128x128xf32>, vector<8x128xf32> -> vector<8x128xf32>
    %134 = arith.subf %128, %130 : vector<8x128xf32>
    %135 = arith.mulf %130, %130 : vector<8x128xf32>
    %136 = arith.subf %133, %135 : vector<8x128xf32>
    %cst_105 = arith.constant 9.99999974E-6 : f32
    %137 = vector.broadcast %cst_105 : f32 to vector<8x128xf32>
    %138 = arith.addf %136, %137 : vector<8x128xf32>
    %139 = math.rsqrt %138 : vector<8x128xf32>
    %140 = arith.mulf %134, %139 : vector<8x128xf32>
    %cst_106 = arith.constant 0.000000e+00 : f32
    %141 = vector.broadcast %cst_106 : f32 to vector<8x128xf32>
    %142 = arith.cmpf ogt, %140, %141 : vector<8x128xf32>
    %cst_107 = arith.constant 0.00999999977 : f32
    %143 = vector.broadcast %cst_107 : f32 to vector<8x128xf32>
    %144 = arith.mulf %143, %140 : vector<8x128xf32>
    %145 = arith.select %142, %140, %144 : vector<8x128xi1>, vector<8x128xf32>
    %c0_108 = arith.constant 0 : index
    %c0_109 = arith.constant 0 : index
    %146 = vector.load %arg7[%c0_108, %c0_109] : memref<16x8xf32, #tpu.memory_space<vmem>>, vector<16x8xf32>
    %cst_110 = arith.constant dense<0.000000e+00> : vector<16x128xf32>
    %147 = tpu.matmul %146, %145, %cst_110 {dimension_numbers = #tpu.dot_dimension_numbers<[1], [0], [0], [1], [0, 0, 1, 1], [], []>} : vector<16x8xf32>, vector<8x128xf32>, vector<16x128xf32> -> vector<16x128xf32>
    %148 = vector.extract_strided_slice %147 {offsets = [0, 0], sizes = [4, 128], strides = [1, 1]} : vector<16x128xf32> to vector<4x128xf32>
    %c0_111 = arith.constant 0 : index
    %c0_112 = arith.constant 0 : index
    %c0_113 = arith.constant 0 : index
    %149 = vector.load %arg8[%c0_111, %c0_112, %c0_113] : memref<4x128x512xf32, #tpu.memory_space<vmem>>, vector<1x128x512xf32>
    %150 = vector.shape_cast %149 : vector<1x128x512xf32> to vector<128x512xf32>
    %cst_114 = arith.constant dense<0.000000e+00> : vector<4x512xf32>
    %151 = tpu.matmul %148, %150, %cst_114 {dimension_numbers = #tpu.dot_dimension_numbers<[1], [0], [0], [1], [0, 0, 1, 1], [], []>} : vector<4x128xf32>, vector<128x512xf32>, vector<4x512xf32> -> vector<4x512xf32>
    %152 = vector.extract_strided_slice %147 {offsets = [4, 0], sizes = [4, 128], strides = [1, 1]} : vector<16x128xf32> to vector<4x128xf32>
    %c1_115 = arith.constant 1 : index
    %c0_116 = arith.constant 0 : index
    %c0_117 = arith.constant 0 : index
    %153 = vector.load %arg8[%c1_115, %c0_116, %c0_117] : memref<4x128x512xf32, #tpu.memory_space<vmem>>, vector<1x128x512xf32>
    %154 = vector.shape_cast %153 : vector<1x128x512xf32> to vector<128x512xf32>
    %cst_118 = arith.constant dense<0.000000e+00> : vector<4x512xf32>
    %155 = tpu.matmul %152, %154, %cst_118 {dimension_numbers = #tpu.dot_dimension_numbers<[1], [0], [0], [1], [0, 0, 1, 1], [], []>} : vector<4x128xf32>, vector<128x512xf32>, vector<4x512xf32> -> vector<4x512xf32>
    %156 = arith.addf %151, %155 : vector<4x512xf32>
    %157 = vector.extract_strided_slice %147 {offsets = [8, 0], sizes = [4, 128], strides = [1, 1]} : vector<16x128xf32> to vector<4x128xf32>
    %c2_119 = arith.constant 2 : index
    %c0_120 = arith.constant 0 : index
    %c0_121 = arith.constant 0 : index
    %158 = vector.load %arg8[%c2_119, %c0_120, %c0_121] : memref<4x128x512xf32, #tpu.memory_space<vmem>>, vector<1x128x512xf32>
    %159 = vector.shape_cast %158 : vector<1x128x512xf32> to vector<128x512xf32>
    %cst_122 = arith.constant dense<0.000000e+00> : vector<4x512xf32>
    %160 = tpu.matmul %157, %159, %cst_122 {dimension_numbers = #tpu.dot_dimension_numbers<[1], [0], [0], [1], [0, 0, 1, 1], [], []>} : vector<4x128xf32>, vector<128x512xf32>, vector<4x512xf32> -> vector<4x512xf32>
    %161 = arith.addf %156, %160 : vector<4x512xf32>
    %162 = vector.extract_strided_slice %147 {offsets = [12, 0], sizes = [4, 128], strides = [1, 1]} : vector<16x128xf32> to vector<4x128xf32>
    %c3_123 = arith.constant 3 : index
    %c0_124 = arith.constant 0 : index
    %c0_125 = arith.constant 0 : index
    %163 = vector.load %arg8[%c3_123, %c0_124, %c0_125] : memref<4x128x512xf32, #tpu.memory_space<vmem>>, vector<1x128x512xf32>
    %164 = vector.shape_cast %163 : vector<1x128x512xf32> to vector<128x512xf32>
    %cst_126 = arith.constant dense<0.000000e+00> : vector<4x512xf32>
    %165 = tpu.matmul %162, %164, %cst_126 {dimension_numbers = #tpu.dot_dimension_numbers<[1], [0], [0], [1], [0, 0, 1, 1], [], []>} : vector<4x128xf32>, vector<128x512xf32>, vector<4x512xf32> -> vector<4x512xf32>
    %166 = arith.addf %161, %165 : vector<4x512xf32>
    %c0_127 = arith.constant 0 : index
    %c0_128 = arith.constant 0 : index
    %167 = vector.load %arg9[%c0_127, %c0_128] : memref<4x1xf32, #tpu.memory_space<vmem>>, vector<4x1xf32>
    %168 = vector.broadcast %167 : vector<4x1xf32> to vector<4x512xf32>
    %169 = arith.addf %166, %168 : vector<4x512xf32>
    %c0_129 = arith.constant 0 : index
    %c0_130 = arith.constant 0 : index
    %c0_131 = arith.constant 0 : index
    %170 = vector.load %arg10[%c0_129, %c0_130, %c0_131] : memref<2x8x256xf32, #tpu.memory_space<vmem>>, vector<1x4x256xf32>
    %171 = vector.shape_cast %170 : vector<1x4x256xf32> to vector<4x256xf32>
    %172 = vector.shape_cast %1 : vector<4x256xf32> to vector<1x4x256xf32>
    tpu.vector_store %arg10[%c0_129, %c0_130, %c0_131], %172 {strides = array<i32>} : memref<2x8x256xf32, #tpu.memory_space<vmem>>, vector<1x4x256xf32>,
    %c1_132 = arith.constant 1 : index
    %c0_133 = arith.constant 0 : index
    %c0_134 = arith.constant 0 : index
    %173 = vector.load %arg10[%c1_132, %c0_133, %c0_134] : memref<2x8x256xf32, #tpu.memory_space<vmem>>, vector<1x4x256xf32>
    %174 = vector.shape_cast %173 : vector<1x4x256xf32> to vector<4x256xf32>
    %175 = vector.shape_cast %3 : vector<4x256xf32> to vector<1x4x256xf32>
    tpu.vector_store %arg10[%c1_132, %c0_133, %c0_134], %175 {strides = array<i32>} : memref<2x8x256xf32, #tpu.memory_space<vmem>>, vector<1x4x256xf32>,
    %176 = vector.extract_strided_slice %169 {offsets = [0, 0], sizes = [4, 256], strides = [1, 1]} : vector<4x512xf32> to vector<4x256xf32>
    %c0_135 = arith.constant 0 : index
    %c4_136 = arith.constant 4 : index
    %c0_137 = arith.constant 0 : index
    %177 = vector.load %arg10[%c0_135, %c4_136, %c0_137] : memref<2x8x256xf32, #tpu.memory_space<vmem>>, vector<1x4x256xf32>
    %178 = vector.shape_cast %177 : vector<1x4x256xf32> to vector<4x256xf32>
    %179 = vector.shape_cast %176 : vector<4x256xf32> to vector<1x4x256xf32>
    tpu.vector_store %arg10[%c0_135, %c4_136, %c0_137], %179 {strides = array<i32>} : memref<2x8x256xf32, #tpu.memory_space<vmem>>, vector<1x4x256xf32>,
    %180 = vector.extract_strided_slice %169 {offsets = [0, 256], sizes = [4, 256], strides = [1, 1]} : vector<4x512xf32> to vector<4x256xf32>
    %c1_138 = arith.constant 1 : index
    %c4_139 = arith.constant 4 : index
    %c0_140 = arith.constant 0 : index
    %181 = vector.load %arg10[%c1_138, %c4_139, %c0_140] : memref<2x8x256xf32, #tpu.memory_space<vmem>>, vector<1x4x256xf32>
    %182 = vector.shape_cast %181 : vector<1x4x256xf32> to vector<4x256xf32>
    %183 = vector.shape_cast %180 : vector<4x256xf32> to vector<1x4x256xf32>
    tpu.vector_store %arg10[%c1_138, %c4_139, %c0_140], %183 {strides = array<i32>} : memref<2x8x256xf32, #tpu.memory_space<vmem>>, vector<1x4x256xf32>,
    return
  }
  func.func @transform_0(%arg0: i32) -> (i32, i32, i32) {
    %c0_i32 = arith.constant 0 : i32
    %c0_i32_0 = arith.constant 0 : i32
    %c0_i32_1 = arith.constant 0 : i32
    return %arg0, %c0_i32, %c0_i32_0 : i32, i32, i32
  }
  func.func @transform_1(%arg0: i32) -> (i32, i32, i32) {
    %c0_i32 = arith.constant 0 : i32
    %c0_i32_0 = arith.constant 0 : i32
    %c0_i32_1 = arith.constant 0 : i32
    %c0_i32_2 = arith.constant 0 : i32
    return %c0_i32, %c0_i32_0, %c0_i32_1 : i32, i32, i32
  }
  func.func @transform_2(%arg0: i32) -> (i32, i32, i32) {
    %c0_i32 = arith.constant 0 : i32
    %c0_i32_0 = arith.constant 0 : i32
    %c0_i32_1 = arith.constant 0 : i32
    %c0_i32_2 = arith.constant 0 : i32
    return %c0_i32, %c0_i32_0, %c0_i32_1 : i32, i32, i32
  }
  func.func @transform_3(%arg0: i32) -> (i32, i32) {
    %c0_i32 = arith.constant 0 : i32
    %c0_i32_0 = arith.constant 0 : i32
    %c0_i32_1 = arith.constant 0 : i32
    return %c0_i32, %c0_i32_0 : i32, i32
  }
  func.func @transform_4(%arg0: i32) -> (i32, i32) {
    %c0_i32 = arith.constant 0 : i32
    %c0_i32_0 = arith.constant 0 : i32
    %c0_i32_1 = arith.constant 0 : i32
    return %c0_i32, %c0_i32_0 : i32, i32
  }
  func.func @transform_5(%arg0: i32) -> (i32, i32) {
    %c0_i32 = arith.constant 0 : i32
    %c0_i32_0 = arith.constant 0 : i32
    %c0_i32_1 = arith.constant 0 : i32
    return %c0_i32, %c0_i32_0 : i32, i32
  }
  func.func @transform_6(%arg0: i32) -> (i32, i32) {
    %c0_i32 = arith.constant 0 : i32
    %c0_i32_0 = arith.constant 0 : i32
    %c0_i32_1 = arith.constant 0 : i32
    return %c0_i32, %c0_i32_0 : i32, i32
  }
  func.func @transform_7(%arg0: i32) -> (i32, i32, i32) {
    %c0_i32 = arith.constant 0 : i32
    %c0_i32_0 = arith.constant 0 : i32
    %c0_i32_1 = arith.constant 0 : i32
    %c0_i32_2 = arith.constant 0 : i32
    return %c0_i32, %c0_i32_0, %c0_i32_1 : i32, i32, i32
  }
  func.func @transform_8(%arg0: i32) -> (i32, i32) {
    %c0_i32 = arith.constant 0 : i32
    %c0_i32_0 = arith.constant 0 : i32
    %c0_i32_1 = arith.constant 0 : i32
    return %c0_i32, %c0_i32_0 : i32, i32
  }
  func.func @transform_9(%arg0: i32) -> (i32, i32, i32) {
    %c0_i32 = arith.constant 0 : i32
    %c0_i32_0 = arith.constant 0 : i32
    %c0_i32_1 = arith.constant 0 : i32
    return %arg0, %c0_i32, %c0_i32_0 : i32, i32, i32
  }
}

</mosaic_0001>

<llo_original>
// kernel: unet_innermost_forward.1
$region0: #{unet_innermost_forward.1}
  #allocation0 [shape = 'u32[]', space=smem, size = 0x4, offset = 0x4, fixed_abs, tag = 'smem constant byte address 0x4 - core index']
  #allocation1 [shape = 'u32[144,128]{1,0:T(1,128)}', space=vmem, size = 0x12000, scoped, tag = 'internal scratch']
  %s0 = inlined_call_operand.vmem [shape: f32[2,4,256], index: 0, kind: input, shape index: {}]
  %s1 = inlined_call_operand.hbm [shape: f32[4,512,128], index: 1, kind: input, shape index: {}]
  %s2 = inlined_call_operand.hbm [shape: f32[9,128,128], index: 2, kind: input, shape index: {}]
  %s3 = inlined_call_operand.vmem [shape: f32[128,128], index: 3, kind: input, shape index: {}]
  %s4 = inlined_call_operand.vmem [shape: f32[72,4], index: 4, kind: input, shape index: {}]
  %s5 = inlined_call_operand.vmem [shape: f32[72,8], index: 5, kind: input, shape index: {}]
  %s6 = inlined_call_operand.vmem [shape: f32[16,8], index: 6, kind: input, shape index: {}]
  %s7 = inlined_call_operand.hbm [shape: f32[4,128,512], index: 7, kind: input, shape index: {}]
  %s8 = inlined_call_operand.vmem [shape: f32[4,1], index: 8, kind: input, shape index: {}]
  %s9 = inlined_call_operand.vmem [shape: f32[2,8,256], index: 9, kind: output, shape index: {}]
  %s10 = sld [smem:[#allocation0]]
  $region58: #{unet_innermost_forward.1} parent=0
    _
  %s12 = ssub.s32 1, %s10
  %s13 = scalar_select 0, %s12, %s10
  $region1: #{unet_innermost_forward.1} parent=0
    #allocation2 [shape = 'u8[1048576]{0}', space=vmem, size = 0x100000, scoped, tag = 'input window, operand 1, single buffered']
    #allocation3 [shape = 's32[1]{0}', space=sflag, size = 0x4, scoped, tag = 'scoped memory for unet_innermost_forward.1']
    #allocation4 [shape = 'u8[589824]{0}', space=vmem, size = 0x90000, scoped, tag = 'input window, operand 2, single buffered']
    #allocation5 [shape = 's32[1]{0}', space=sflag, size = 0x4, scoped, tag = 'scoped memory for unet_innermost_forward.1']
    #allocation6 [shape = 'u8[1048576]{0}', space=vmem, size = 0x100000, scoped, tag = 'input window, operand 7, single buffered']
    %14 = vsyncpa [#allocation3], 0
    %15 = vsyncpa [#allocation5], 0
    // Predicated region
    $region2: #{unet_innermost_forward.1} parent=1 // pred_check
      _
    $region3: #{unet_innermost_forward.1} parent=1 // pred_check_branch
      %17 = sbr.rel (0) target = $region5
    $region4: #{unet_innermost_forward.1} parent=1 // pred_region
      _
    $region5: #{unet_innermost_forward.1} parent=1 // pred_fallthru
      _
    // Predicated region
    $region6: #{unet_innermost_forward.1} parent=1 // pred_check
      _
    $region7: #{unet_innermost_forward.1} parent=1 // pred_check_branch
      %19 = sbr.rel (0) target = $region9
    $region8: #{unet_innermost_forward.1} parent=1 // pred_region
      %s21 = ssub.s32 32768, 32768
      %22 = vsyncadd [#allocation3], %s21
      %s23 = sshll.u32 [#allocation2], 4
      %s24 = int_to_ptr.vmem [resolvable:$true] %s23
      %29 = dma.hbm_to_vmem [thread:$0]  %s1, 32768, %s24, [#allocation3], 128, 128, 8
    $region9: #{unet_innermost_forward.1} parent=1 // pred_fallthru
      _
    // Predicated region
    $region10: #{unet_innermost_forward.1} parent=1 // pred_check
      _
    $region11: #{unet_innermost_forward.1} parent=1 // pred_check_branch
      %31 = sbr.rel (0) target = $region13
    $region12: #{unet_innermost_forward.1} parent=1 // pred_region
      %s33 = ssub.s32 18432, 18432
      %34 = vsyncadd [#allocation5], %s33
      %s35 = sshll.u32 [#allocation4], 4
      %s36 = int_to_ptr.vmem [resolvable:$true] %s35
      %41 = dma.hbm_to_vmem [thread:$0]  %s2, 18432, %s36, [#allocation5], 128, 128, 8
    $region13: #{unet_innermost_forward.1} parent=1 // pred_fallthru
      _
    // Predicated region
    $region14: #{unet_innermost_forward.1} parent=1 // pred_check
      _
    $region15: #{unet_innermost_forward.1} parent=1 // pred_check_branch
      %43 = sbr.rel (0) target = $region17
    $region16: #{unet_innermost_forward.1} parent=1 // pred_region
      _
    $region17: #{unet_innermost_forward.1} parent=1 // pred_fallthru
      _
    // Predicated region
    $region18: #{unet_innermost_forward.1} parent=1 // pred_check
      _
    $region19: #{unet_innermost_forward.1} parent=1 // pred_check_branch
      %45 = sbr.rel (0) target = $region21
    $region20: #{unet_innermost_forward.1} parent=1 // pred_region
      _
    $region21: #{unet_innermost_forward.1} parent=1 // pred_fallthru
      _
    // Predicated region
    $region22: #{unet_innermost_forward.1} parent=1 // pred_check
      _
    $region23: #{unet_innermost_forward.1} parent=1 // pred_check_branch
      %47 = sbr.rel (0) target = $region25
    $region24: #{unet_innermost_forward.1} parent=1 // pred_region
      _
    $region25: #{unet_innermost_forward.1} parent=1 // pred_fallthru
      _
    // Predicated region
    $region26: #{unet_innermost_forward.1} parent=1 // pred_check
      _
    $region27: #{unet_innermost_forward.1} parent=1 // pred_check_branch
      %49 = sbr.rel (0) target = $region29
    $region28: #{unet_innermost_forward.1} parent=1 // pred_region
      _
    $region29: #{unet_innermost_forward.1} parent=1 // pred_fallthru
      _
    // Predicated region
    $region30: #{unet_innermost_forward.1} parent=1 // pred_check
      _
    $region31: #{unet_innermost_forward.1} parent=1 // pred_check_branch
      %51 = sbr.rel (0) target = $region33
    $region32: #{unet_innermost_forward.1} parent=1 // pred_region
      %s53 = ssub.s32 32768, 32768
      %54 = vsyncadd [#allocation5], %s53
      %s55 = sshll.u32 [#allocation6], 4
      %s56 = int_to_ptr.vmem [resolvable:$true] %s55
      %61 = dma.hbm_to_vmem [thread:$0]  %s7, 32768, %s56, [#allocation5], 512, 512, 32
    $region33: #{unet_innermost_forward.1} parent=1 // pred_fallthru
      _
    // Predicated region
    $region34: #{unet_innermost_forward.1} parent=1 // pred_check
      _
    $region35: #{unet_innermost_forward.1} parent=1 // pred_check_branch
      %63 = sbr.rel (0) target = $region37
    $region36: #{unet_innermost_forward.1} parent=1 // pred_region
      _
    $region37: #{unet_innermost_forward.1} parent=1 // pred_fallthru
      _
    // Predicated region
    $region38: #{unet_innermost_forward.1} parent=1 // pred_check
      _
    $region39: #{unet_innermost_forward.1} parent=1 // pred_check_branch
      %65 = sbr.rel (0) target = $region41
    $region40: #{unet_innermost_forward.1} parent=1 // pred_region
      %66 = dma.done [#allocation3], 32768
    $region41: #{unet_innermost_forward.1} parent=1 // pred_fallthru
      _
    // Predicated region
    $region42: #{unet_innermost_forward.1} parent=1 // pred_check
      _
    $region43: #{unet_innermost_forward.1} parent=1 // pred_check_branch
      %68 = sbr.rel (0) target = $region45
    $region44: #{unet_innermost_forward.1} parent=1 // pred_region
      %69 = dma.done [#allocation5], 18432
    $region45: #{unet_innermost_forward.1} parent=1 // pred_fallthru
      _
    // Predicated region
    $region46: #{unet_innermost_forward.1} parent=1 // pred_check
      _
    $region47: #{unet_innermost_forward.1} parent=1 // pred_check_branch
      %71 = sbr.rel (0) target = $region49
    $region48: #{unet_innermost_forward.1} parent=1 // pred_region
      %72 = dma.done [#allocation5], 32768
    $region49: #{unet_innermost_forward.1} parent=1 // pred_fallthru
      _
    %v73 = vld [vmem:[%s0] sm:$0xff]
    %s74 = scalar_lea.vmem %s0, 8
    %v75 = vld [vmem:[%s74] sm:$0xff]
    %v77 = vcombine.high %v73, %v73
    %v80 = vcombine.high %v75, %v75
    %v82 = vld [vmem:[#allocation2] sm:$0xff]
    %v83 = vld [vmem:[#allocation2 + $0x8] sm:$0xff]
    %v84 = vld [vmem:[#allocation2 + $0x10] sm:$0xff]
    %v85 = vld [vmem:[#allocation2 + $0x18] sm:$0xff]
    %v86 = vld [vmem:[#allocation2 + $0x20] sm:$0xff]
    %v87 = vld [vmem:[#allocation2 + $0x28] sm:$0xff]
    %v88 = vld [vmem:[#allocation2 + $0x30] sm:$0xff]
    %v89 = vld [vmem:[#allocation2 + $0x38] sm:$0xff]
    %v90 = vld [vmem:[#allocation2 + $0x40] sm:$0xff]
    %v91 = vld [vmem:[#allocation2 + $0x48] sm:$0xff]
    %v92 = vld [vmem:[#allocation2 + $0x50] sm:$0xff]
    %v93 = vld [vmem:[#allocation2 + $0x58] sm:$0xff]
    %v94 = vld [vmem:[#allocation2 + $0x60] sm:$0xff]
    %v95 = vld [vmem:[#allocation2 + $0x68] sm:$0xff]
    %v96 = vld [vmem:[#allocation2 + $0x70] sm:$0xff]
    %v97 = vld [vmem:[#allocation2 + $0x78] sm:$0xff]
    %v98 = vld [vmem:[#allocation2 + $0x80] sm:$0xff]
    %v99 = vld [vmem:[#allocation2 + $0x88] sm:$0xff]
    %v100 = vld [vmem:[#allocation2 + $0x90] sm:$0xff]
    %v101 = vld [vmem:[#allocation2 + $0x98] sm:$0xff]
    %v102 = vld [vmem:[#allocation2 + $0xa0] sm:$0xff]
    %v103 = vld [vmem:[#allocation2 + $0xa8] sm:$0xff]
    %v104 = vld [vmem:[#allocation2 + $0xb0] sm:$0xff]
    %v105 = vld [vmem:[#allocation2 + $0xb8] sm:$0xff]
    %v106 = vld [vmem:[#allocation2 + $0xc0] sm:$0xff]
    %v107 = vld [vmem:[#allocation2 + $0xc8] sm:$0xff]
    %v108 = vld [vmem:[#allocation2 + $0xd0] sm:$0xff]
    %v109 = vld [vmem:[#allocation2 + $0xd8] sm:$0xff]
    %v110 = vld [vmem:[#allocation2 + $0xe0] sm:$0xff]
    %v111 = vld [vmem:[#allocation2 + $0xe8] sm:$0xff]
    %v112 = vld [vmem:[#allocation2 + $0xf0] sm:$0xff]
    %v113 = vld [vmem:[#allocation2 + $0xf8] sm:$0xff]
    %v114 = vld [vmem:[#allocation2 + $0x100] sm:$0xff]
    %v115 = vld [vmem:[#allocation2 + $0x108] sm:$0xff]
    %v116 = vld [vmem:[#allocation2 + $0x110] sm:$0xff]
    %v117 = vld [vmem:[#allocation2 + $0x118] sm:$0xff]
    %v118 = vld [vmem:[#allocation2 + $0x120] sm:$0xff]
    %v119 = vld [vmem:[#allocation2 + $0x128] sm:$0xff]
    %v120 = vld [vmem:[#allocation2 + $0x130] sm:$0xff]
    %v121 = vld [vmem:[#allocation2 + $0x138] sm:$0xff]
    %v122 = vld [vmem:[#allocation2 + $0x140] sm:$0xff]
    %v123 = vld [vmem:[#allocation2 + $0x148] sm:$0xff]
    %v124 = vld [vmem:[#allocation2 + $0x150] sm:$0xff]
    %v125 = vld [vmem:[#allocation2 + $0x158] sm:$0xff]
    %v126 = vld [vmem:[#allocation2 + $0x160] sm:$0xff]
    %v127 = vld [vmem:[#allocation2 + $0x168] sm:$0xff]
    %v128 = vld [vmem:[#allocation2 + $0x170] sm:$0xff]
    %v129 = vld [vmem:[#allocation2 + $0x178] sm:$0xff]
    %v130 = vld [vmem:[#allocation2 + $0x180] sm:$0xff]
    %v131 = vld [vmem:[#allocation2 + $0x188] sm:$0xff]
    %v132 = vld [vmem:[#allocation2 + $0x190] sm:$0xff]
    %v133 = vld [vmem:[#allocation2 + $0x198] sm:$0xff]
    %v134 = vld [vmem:[#allocation2 + $0x1a0] sm:$0xff]
    %v135 = vld [vmem:[#allocation2 + $0x1a8] sm:$0xff]
    %v136 = vld [vmem:[#allocation2 + $0x1b0] sm:$0xff]
    %v137 = vld [vmem:[#allocation2 + $0x1b8] sm:$0xff]
    %v138 = vld [vmem:[#allocation2 + $0x1c0] sm:$0xff]
    %v139 = vld [vmem:[#allocation2 + $0x1c8] sm:$0xff]
    %v140 = vld [vmem:[#allocation2 + $0x1d0] sm:$0xff]
    %v141 = vld [vmem:[#allocation2 + $0x1d8] sm:$0xff]
    %v142 = vld [vmem:[#allocation2 + $0x1e0] sm:$0xff]
    %v143 = vld [vmem:[#allocation2 + $0x1e8] sm:$0xff]
    %v144 = vld [vmem:[#allocation2 + $0x1f0] sm:$0xff]
    %v145 = vld [vmem:[#allocation2 + $0x1f8] sm:$0xff]
    %146 = vmatprep.subr.mxu0 0.0
    %147 = vmatpush1.msra.mxu0 %v82
    %148 = vmatprep.subr.mxu0 0.0
    %149 = vmatpush1.msra.mxu0 %v83
    %150 = vmatprep.subr.mxu0 0.0
    %151 = vmatpush1.msra.mxu0 %v84
    %152 = vmatprep.subr.mxu0 0.0
    %153 = vmatpush1.msra.mxu0 %v85
    %154 = vmatprep.subr.mxu0 0.0
    %155 = vmatpush1.msra.mxu0 %v86
    %156 = vmatprep.subr.mxu0 0.0
    %157 = vmatpush1.msra.mxu0 %v87
    %158 = vmatprep.subr.mxu0 0.0
    %159 = vmatpush1.msra.mxu0 %v88
    %160 = vmatprep.subr.mxu0 0.0
    %161 = vmatpush1.msra.mxu0 %v89
    %162 = vmatprep.subr.mxu0 0.0
    %163 = vmatpush1.msra.mxu0 %v90
    %164 = vmatprep.subr.mxu0 0.0
    %165 = vmatpush1.msra.mxu0 %v91
    %166 = vmatprep.subr.mxu0 0.0
    %167 = vmatpush1.msra.mxu0 %v92
    %168 = vmatprep.subr.mxu0 0.0
    %169 = vmatpush1.msra.mxu0 %v93
    %170 = vmatprep.subr.mxu0 0.0
    %171 = vmatpush1.msra.mxu0 %v94
    %172 = vmatprep.subr.mxu0 0.0
    %173 = vmatpush1.msra.mxu0 %v95
    %174 = vmatprep.subr.mxu0 0.0
    %175 = vmatpush1.msra.mxu0 %v96
    %176 = vmatprep.subr.mxu0 0.0
    %177 = vmatpush1.msra.mxu0 %v97
    %178 = vmatprep.subr.mxu0 0.0
    %179 = vmatpush1.msra.mxu0 %v98
    %180 = vmatprep.subr.mxu0 0.0
    %181 = vmatpush1.msra.mxu0 %v99
    %182 = vmatprep.subr.mxu0 0.0
    %183 = vmatpush1.msra.mxu0 %v100
    %184 = vmatprep.subr.mxu0 0.0
    %185 = vmatpush1.msra.mxu0 %v101
    %186 = vmatprep.subr.mxu0 0.0
    %187 = vmatpush1.msra.mxu0 %v102
    %188 = vmatprep.subr.mxu0 0.0
    %189 = vmatpush1.msra.mxu0 %v103
    %190 = vmatprep.subr.mxu0 0.0
    %191 = vmatpush1.msra.mxu0 %v104
    %192 = vmatprep.subr.mxu0 0.0
    %193 = vmatpush1.msra.mxu0 %v105
    %194 = vmatprep.subr.mxu0 0.0
    %195 = vmatpush1.msra.mxu0 %v106
    %196 = vmatprep.subr.mxu0 0.0
    %197 = vmatpush1.msra.mxu0 %v107
    %198 = vmatprep.subr.mxu0 0.0
    %199 = vmatpush1.msra.mxu0 %v108
    %200 = vmatprep.subr.mxu0 0.0
    %201 = vmatpush1.msra.mxu0 %v109
    %202 = vmatprep.subr.mxu0 0.0
    %203 = vmatpush1.msra.mxu0 %v110
    %204 = vmatprep.subr.mxu0 0.0
    %205 = vmatpush1.msra.mxu0 %v111
    %206 = vmatprep.subr.mxu0 0.0
    %207 = vmatpush1.msra.mxu0 %v112
    %208 = vmatprep.subr.mxu0 0.0
    %209 = vmatpush1.msra.mxu0 %v113
    %210 = vmatprep.mubr.f32.mxu0 %v77
    %211 = vmatmul.mubr.f32.gmra.mrb[0].mxu0 %v73
    %v212 = vpop.f32.mrb[0].mxu0
    %v213 = vadd.f32 0.0, %v212
    %v214 = vpop.f32.mrb[0].mxu0
    %215 = vdwg.mxu0
    %216 = vmatprep.subr.mxu0 0.0
    %217 = vmatpush1.msra.mxu0 %v114
    %218 = vmatprep.subr.mxu0 0.0
    %219 = vmatpush1.msra.mxu0 %v115
    %220 = vmatprep.subr.mxu0 0.0
    %221 = vmatpush1.msra.mxu0 %v116
    %222 = vmatprep.subr.mxu0 0.0
    %223 = vmatpush1.msra.mxu0 %v117
    %224 = vmatprep.subr.mxu0 0.0
    %225 = vmatpush1.msra.mxu0 %v118
    %226 = vmatprep.subr.mxu0 0.0
    %227 = vmatpush1.msra.mxu0 %v119
    %228 = vmatprep.subr.mxu0 0.0
    %229 = vmatpush1.msra.mxu0 %v120
    %230 = vmatprep.subr.mxu0 0.0
    %231 = vmatpush1.msra.mxu0 %v121
    %232 = vmatprep.subr.mxu0 0.0
    %233 = vmatpush1.msra.mxu0 %v122
    %234 = vmatprep.subr.mxu0 0.0
    %235 = vmatpush1.msra.mxu0 %v123
    %236 = vmatprep.subr.mxu0 0.0
    %237 = vmatpush1.msra.mxu0 %v124
    %238 = vmatprep.subr.mxu0 0.0
    %239 = vmatpush1.msra.mxu0 %v125
    %240 = vmatprep.subr.mxu0 0.0
    %241 = vmatpush1.msra.mxu0 %v126
    %242 = vmatprep.subr.mxu0 0.0
    %243 = vmatpush1.msra.mxu0 %v127
    %244 = vmatprep.subr.mxu0 0.0
    %245 = vmatpush1.msra.mxu0 %v128
    %246 = vmatprep.subr.mxu0 0.0
    %247 = vmatpush1.msra.mxu0 %v129
    %248 = vmatprep.subr.mxu0 0.0
    %249 = vmatpush1.msra.mxu0 %v130
    %250 = vmatprep.subr.mxu0 0.0
    %251 = vmatpush1.msra.mxu0 %v131
    %252 = vmatprep.subr.mxu0 0.0
    %253 = vmatpush1.msra.mxu0 %v132
    %254 = vmatprep.subr.mxu0 0.0
    %255 = vmatpush1.msra.mxu0 %v133
    %256 = vmatprep.subr.mxu0 0.0
    %257 = vmatpush1.msra.mxu0 %v134
    %258 = vmatprep.subr.mxu0 0.0
    %259 = vmatpush1.msra.mxu0 %v135
    %260 = vmatprep.subr.mxu0 0.0
    %261 = vmatpush1.msra.mxu0 %v136
    %262 = vmatprep.subr.mxu0 0.0
    %263 = vmatpush1.msra.mxu0 %v137
    %264 = vmatprep.subr.mxu0 0.0
    %265 = vmatpush1.msra.mxu0 %v138
    %266 = vmatprep.subr.mxu0 0.0
    %267 = vmatpush1.msra.mxu0 %v139
    %268 = vmatprep.subr.mxu0 0.0
    %269 = vmatpush1.msra.mxu0 %v140
    %270 = vmatprep.subr.mxu0 0.0
    %271 = vmatpush1.msra.mxu0 %v141
    %272 = vmatprep.subr.mxu0 0.0
    %273 = vmatpush1.msra.mxu0 %v142
    %274 = vmatprep.subr.mxu0 0.0
    %275 = vmatpush1.msra.mxu0 %v143
    %276 = vmatprep.subr.mxu0 0.0
    %277 = vmatpush1.msra.mxu0 %v144
    %278 = vmatprep.subr.mxu0 0.0
    %279 = vmatpush1.msra.mxu0 %v145
    %280 = vmatprep.mubr.f32.mxu0 %v80
    %281 = vmatmul.mubr.f32.gmra.mrb[0].mxu0 %v75
    %v282 = vpop.f32.mrb[0].mxu0
    %v283 = vadd.f32 %v213, %v282
    %v284 = vpop.f32.mrb[0].mxu0
    %285 = vdwg.mxu0
    %s286 = scalar_lea.vmem [#allocation2], 512
    %v287 = vld [vmem:[%s286] sm:$0xff]
    %v288 = vld [vmem:[%s286 + $0x8] sm:$0xff]
    %v289 = vld [vmem:[%s286 + $0x10] sm:$0xff]
    %v290 = vld [vmem:[%s286 + $0x18] sm:$0xff]
    %v291 = vld [vmem:[%s286 + $0x20] sm:$0xff]
    %v292 = vld [vmem:[%s286 + $0x28] sm:$0xff]
    %v293 = vld [vmem:[%s286 + $0x30] sm:$0xff]
    %v294 = vld [vmem:[%s286 + $0x38] sm:$0xff]
    %v295 = vld [vmem:[%s286 + $0x40] sm:$0xff]
    %v296 = vld [vmem:[%s286 + $0x48] sm:$0xff]
    %v297 = vld [vmem:[%s286 + $0x50] sm:$0xff]
    %v298 = vld [vmem:[%s286 + $0x58] sm:$0xff]
    %v299 = vld [vmem:[%s286 + $0x60] sm:$0xff]
    %v300 = vld [vmem:[%s286 + $0x68] sm:$0xff]
    %v301 = vld [vmem:[%s286 + $0x70] sm:$0xff]
    %v302 = vld [vmem:[%s286 + $0x78] sm:$0xff]
    %v303 = vld [vmem:[%s286 + $0x80] sm:$0xff]
    %v304 = vld [vmem:[%s286 + $0x88] sm:$0xff]
    %v305 = vld [vmem:[%s286 + $0x90] sm:$0xff]
    %v306 = vld [vmem:[%s286 + $0x98] sm:$0xff]
    %v307 = vld [vmem:[%s286 + $0xa0] sm:$0xff]
    %v308 = vld [vmem:[%s286 + $0xa8] sm:$0xff]
    %v309 = vld [vmem:[%s286 + $0xb0] sm:$0xff]
    %v310 = vld [vmem:[%s286 + $0xb8] sm:$0xff]
    %v311 = vld [vmem:[%s286 + $0xc0] sm:$0xff]
    %v312 = vld [vmem:[%s286 + $0xc8] sm:$0xff]
    %v313 = vld [vmem:[%s286 + $0xd0] sm:$0xff]
    %v314 = vld [vmem:[%s286 + $0xd8] sm:$0xff]
    %v315 = vld [vmem:[%s286 + $0xe0] sm:$0xff]
    %v316 = vld [vmem:[%s286 + $0xe8] sm:$0xff]
    %v317 = vld [vmem:[%s286 + $0xf0] sm:$0xff]
    %v318 = vld [vmem:[%s286 + $0xf8] sm:$0xff]
    %v319 = vld [vmem:[%s286 + $0x100] sm:$0xff]
    %v320 = vld [vmem:[%s286 + $0x108] sm:$0xff]
    %v321 = vld [vmem:[%s286 + $0x110] sm:$0xff]
    %v322 = vld [vmem:[%s286 + $0x118] sm:$0xff]
    %v323 = vld [vmem:[%s286 + $0x120] sm:$0xff]
    %v324 = vld [vmem:[%s286 + $0x128] sm:$0xff]
    %v325 = vld [vmem:[%s286 + $0x130] sm:$0xff]
    %v326 = vld [vmem:[%s286 + $0x138] sm:$0xff]
    %v327 = vld [vmem:[%s286 + $0x140] sm:$0xff]
    %v328 = vld [vmem:[%s286 + $0x148] sm:$0xff]
    %v329 = vld [vmem:[%s286 + $0x150] sm:$0xff]
    %v330 = vld [vmem:[%s286 + $0x158] sm:$0xff]
    %v331 = vld [vmem:[%s286 + $0x160] sm:$0xff]
    %v332 = vld [vmem:[%s286 + $0x168] sm:$0xff]
    %v333 = vld [vmem:[%s286 + $0x170] sm:$0xff]
    %v334 = vld [vmem:[%s286 + $0x178] sm:$0xff]
    %v335 = vld [vmem:[%s286 + $0x180] sm:$0xff]
    %v336 = vld [vmem:[%s286 + $0x188] sm:$0xff]
    %v337 = vld [vmem:[%s286 + $0x190] sm:$0xff]
    %v338 = vld [vmem:[%s286 + $0x198] sm:$0xff]
    %v339 = vld [vmem:[%s286 + $0x1a0] sm:$0xff]
    %v340 = vld [vmem:[%s286 + $0x1a8] sm:$0xff]
    %v341 = vld [vmem:[%s286 + $0x1b0] sm:$0xff]
    %v342 = vld [vmem:[%s286 + $0x1b8] sm:$0xff]
    %v343 = vld [vmem:[%s286 + $0x1c0] sm:$0xff]
    %v344 = vld [vmem:[%s286 + $0x1c8] sm:$0xff]
    %v345 = vld [vmem:[%s286 + $0x1d0] sm:$0xff]
    %v346 = vld [vmem:[%s286 + $0x1d8] sm:$0xff]
    %v347 = vld [vmem:[%s286 + $0x1e0] sm:$0xff]
    %v348 = vld [vmem:[%s286 + $0x1e8] sm:$0xff]
    %v349 = vld [vmem:[%s286 + $0x1f0] sm:$0xff]
    %v350 = vld [vmem:[%s286 + $0x1f8] sm:$0xff]
    %351 = vmatprep.subr.mxu0 0.0
    %352 = vmatpush1.msra.mxu0 %v287
    %353 = vmatprep.subr.mxu0 0.0
    %354 = vmatpush1.msra.mxu0 %v288
    %355 = vmatprep.subr.mxu0 0.0
    %356 = vmatpush1.msra.mxu0 %v289
    %357 = vmatprep.subr.mxu0 0.0
    %358 = vmatpush1.msra.mxu0 %v290
    %359 = vmatprep.subr.mxu0 0.0
    %360 = vmatpush1.msra.mxu0 %v291
    %361 = vmatprep.subr.mxu0 0.0
    %362 = vmatpush1.msra.mxu0 %v292
    %363 = vmatprep.subr.mxu0 0.0
    %364 = vmatpush1.msra.mxu0 %v293
    %365 = vmatprep.subr.mxu0 0.0
    %366 = vmatpush1.msra.mxu0 %v294
    %367 = vmatprep.subr.mxu0 0.0
    %368 = vmatpush1.msra.mxu0 %v295
    %369 = vmatprep.subr.mxu0 0.0
    %370 = vmatpush1.msra.mxu0 %v296
    %371 = vmatprep.subr.mxu0 0.0
    %372 = vmatpush1.msra.mxu0 %v297
    %373 = vmatprep.subr.mxu0 0.0
    %374 = vmatpush1.msra.mxu0 %v298
    %375 = vmatprep.subr.mxu0 0.0
    %376 = vmatpush1.msra.mxu0 %v299
    %377 = vmatprep.subr.mxu0 0.0
    %378 = vmatpush1.msra.mxu0 %v300
    %379 = vmatprep.subr.mxu0 0.0
    %380 = vmatpush1.msra.mxu0 %v301
    %381 = vmatprep.subr.mxu0 0.0
    %382 = vmatpush1.msra.mxu0 %v302
    %383 = vmatprep.subr.mxu0 0.0
    %384 = vmatpush1.msra.mxu0 %v303
    %385 = vmatprep.subr.mxu0 0.0
    %386 = vmatpush1.msra.mxu0 %v304
    %387 = vmatprep.subr.mxu0 0.0
    %388 = vmatpush1.msra.mxu0 %v305
    %389 = vmatprep.subr.mxu0 0.0
    %390 = vmatpush1.msra.mxu0 %v306
    %391 = vmatprep.subr.mxu0 0.0
    %392 = vmatpush1.msra.mxu0 %v307
    %393 = vmatprep.subr.mxu0 0.0
    %394 = vmatpush1.msra.mxu0 %v308
    %395 = vmatprep.subr.mxu0 0.0
    %396 = vmatpush1.msra.mxu0 %v309
    %397 = vmatprep.subr.mxu0 0.0
    %398 = vmatpush1.msra.mxu0 %v310
    %399 = vmatprep.subr.mxu0 0.0
    %400 = vmatpush1.msra.mxu0 %v311
    %401 = vmatprep.subr.mxu0 0.0
    %402 = vmatpush1.msra.mxu0 %v312
    %403 = vmatprep.subr.mxu0 0.0
    %404 = vmatpush1.msra.mxu0 %v313
    %405 = vmatprep.subr.mxu0 0.0
    %406 = vmatpush1.msra.mxu0 %v314
    %407 = vmatprep.subr.mxu0 0.0
    %408 = vmatpush1.msra.mxu0 %v315
    %409 = vmatprep.subr.mxu0 0.0
    %410 = vmatpush1.msra.mxu0 %v316
    %411 = vmatprep.subr.mxu0 0.0
    %412 = vmatpush1.msra.mxu0 %v317
    %413 = vmatprep.subr.mxu0 0.0
    %414 = vmatpush1.msra.mxu0 %v318
    %415 = vmatprep.mubr.f32.mxu0 %v77
    %416 = vmatmul.mubr.f32.gmra.mrb[0].mxu0 %v73
    %v417 = vpop.f32.mrb[0].mxu0
    %v418 = vadd.f32 0.0, %v417
    %v419 = vpop.f32.mrb[0].mxu0
    %420 = vdwg.mxu0
    %421 = vmatprep.subr.mxu0 0.0
    %422 = vmatpush1.msra.mxu0 %v319
    %423 = vmatprep.subr.mxu0 0.0
    %424 = vmatpush1.msra.mxu0 %v320
    %425 = vmatprep.subr.mxu0 0.0
    %426 = vmatpush1.msra.mxu0 %v321
    %427 = vmatprep.subr.mxu0 0.0
    %428 = vmatpush1.msra.mxu0 %v322
    %429 = vmatprep.subr.mxu0 0.0
    %430 = vmatpush1.msra.mxu0 %v323
    %431 = vmatprep.subr.mxu0 0.0
    %432 = vmatpush1.msra.mxu0 %v324
    %433 = vmatprep.subr.mxu0 0.0
    %434 = vmatpush1.msra.mxu0 %v325
    %435 = vmatprep.subr.mxu0 0.0
    %436 = vmatpush1.msra.mxu0 %v326
    %437 = vmatprep.subr.mxu0 0.0
    %438 = vmatpush1.msra.mxu0 %v327
    %439 = vmatprep.subr.mxu0 0.0
    %440 = vmatpush1.msra.mxu0 %v328
    %441 = vmatprep.subr.mxu0 0.0
    %442 = vmatpush1.msra.mxu0 %v329
    %443 = vmatprep.subr.mxu0 0.0
    %444 = vmatpush1.msra.mxu0 %v330
    %445 = vmatprep.subr.mxu0 0.0
    %446 = vmatpush1.msra.mxu0 %v331
    %447 = vmatprep.subr.mxu0 0.0
    %448 = vmatpush1.msra.mxu0 %v332
    %449 = vmatprep.subr.mxu0 0.0
    %450 = vmatpush1.msra.mxu0 %v333
    %451 = vmatprep.subr.mxu0 0.0
    %452 = vmatpush1.msra.mxu0 %v334
    %453 = vmatprep.subr.mxu0 0.0
    %454 = vmatpush1.msra.mxu0 %v335
    %455 = vmatprep.subr.mxu0 0.0
    %456 = vmatpush1.msra.mxu0 %v336
    %457 = vmatprep.subr.mxu0 0.0
    %458 = vmatpush1.msra.mxu0 %v337
    %459 = vmatprep.subr.mxu0 0.0
    %460 = vmatpush1.msra.mxu0 %v338
    %461 = vmatprep.subr.mxu0 0.0
    %462 = vmatpush1.msra.mxu0 %v339
    %463 = vmatprep.subr.mxu0 0.0
    %464 = vmatpush1.msra.mxu0 %v340
    %465 = vmatprep.subr.mxu0 0.0
    %466 = vmatpush1.msra.mxu0 %v341
    %467 = vmatprep.subr.mxu0 0.0
    %468 = vmatpush1.msra.mxu0 %v342
    %469 = vmatprep.subr.mxu0 0.0
    %470 = vmatpush1.msra.mxu0 %v343
    %471 = vmatprep.subr.mxu0 0.0
    %472 = vmatpush1.msra.mxu0 %v344
    %473 = vmatprep.subr.mxu0 0.0
    %474 = vmatpush1.msra.mxu0 %v345
    %475 = vmatprep.subr.mxu0 0.0
    %476 = vmatpush1.msra.mxu0 %v346
    %477 = vmatprep.subr.mxu0 0.0
    %478 = vmatpush1.msra.mxu0 %v347
    %479 = vmatprep.subr.mxu0 0.0
    %480 = vmatpush1.msra.mxu0 %v348
    %481 = vmatprep.subr.mxu0 0.0
    %482 = vmatpush1.msra.mxu0 %v349
    %483 = vmatprep.subr.mxu0 0.0
    %484 = vmatpush1.msra.mxu0 %v350
    %485 = vmatprep.mubr.f32.mxu0 %v80
    %486 = vmatmul.mubr.f32.gmra.mrb[0].mxu0 %v75
    %v487 = vpop.f32.mrb[0].mxu0
    %v488 = vadd.f32 %v418, %v487
    %v489 = vpop.f32.mrb[0].mxu0
    %490 = vdwg.mxu0
    %v491 = vmax.f32 %v283, %v488
    %s492 = scalar_lea.vmem [#allocation2], 1024
    %v493 = vld [vmem:[%s492] sm:$0xff]
    %v494 = vld [vmem:[%s492 + $0x8] sm:$0xff]
    %v495 = vld [vmem:[%s492 + $0x10] sm:$0xff]
    %v496 = vld [vmem:[%s492 + $0x18] sm:$0xff]
    %v497 = vld [vmem:[%s492 + $0x20] sm:$0xff]
    %v498 = vld [vmem:[%s492 + $0x28] sm:$0xff]
    %v499 = vld [vmem:[%s492 + $0x30] sm:$0xff]
    %v500 = vld [vmem:[%s492 + $0x38] sm:$0xff]
    %v501 = vld [vmem:[%s492 + $0x40] sm:$0xff]
    %v502 = vld [vmem:[%s492 + $0x48] sm:$0xff]
    %v503 = vld [vmem:[%s492 + $0x50] sm:$0xff]
    %v504 = vld [vmem:[%s492 + $0x58] sm:$0xff]
    %v505 = vld [vmem:[%s492 + $0x60] sm:$0xff]
    %v506 = vld [vmem:[%s492 + $0x68] sm:$0xff]
    %v507 = vld [vmem:[%s492 + $0x70] sm:$0xff]
    %v508 = vld [vmem:[%s492 + $0x78] sm:$0xff]
    %v509 = vld [vmem:[%s492 + $0x80] sm:$0xff]
    %v510 = vld [vmem:[%s492 + $0x88] sm:$0xff]
    %v511 = vld [vmem:[%s492 + $0x90] sm:$0xff]
    %v512 = vld [vmem:[%s492 + $0x98] sm:$0xff]
    %v513 = vld [vmem:[%s492 + $0xa0] sm:$0xff]
    %v514 = vld [vmem:[%s492 + $0xa8] sm:$0xff]
    %v515 = vld [vmem:[%s492 + $0xb0] sm:$0xff]
    %v516 = vld [vmem:[%s492 + $0xb8] sm:$0xff]
    %v517 = vld [vmem:[%s492 + $0xc0] sm:$0xff]
    %v518 = vld [vmem:[%s492 + $0xc8] sm:$0xff]
    %v519 = vld [vmem:[%s492 + $0xd0] sm:$0xff]
    %v520 = vld [vmem:[%s492 + $0xd8] sm:$0xff]
    %v521 = vld [vmem:[%s492 + $0xe0] sm:$0xff]
    %v522 = vld [vmem:[%s492 + $0xe8] sm:$0xff]
    %v523 = vld [vmem:[%s492 + $0xf0] sm:$0xff]
    %v524 = vld [vmem:[%s492 + $0xf8] sm:$0xff]
    %v525 = vld [vmem:[%s492 + $0x100] sm:$0xff]
    %v526 = vld [vmem:[%s492 + $0x108] sm:$0xff]
    %v527 = vld [vmem:[%s492 + $0x110] sm:$0xff]
    %v528 = vld [vmem:[%s492 + $0x118] sm:$0xff]
    %v529 = vld [vmem:[%s492 + $0x120] sm:$0xff]
    %v530 = vld [vmem:[%s492 + $0x128] sm:$0xff]
    %v531 = vld [vmem:[%s492 + $0x130] sm:$0xff]
    %v532 = vld [vmem:[%s492 + $0x138] sm:$0xff]
    %v533 = vld [vmem:[%s492 + $0x140] sm:$0xff]
    %v534 = vld [vmem:[%s492 + $0x148] sm:$0xff]
    %v535 = vld [vmem:[%s492 + $0x150] sm:$0xff]
    %v536 = vld [vmem:[%s492 + $0x158] sm:$0xff]
    %v537 = vld [vmem:[%s492 + $0x160] sm:$0xff]
    %v538 = vld [vmem:[%s492 + $0x168] sm:$0xff]
    %v539 = vld [vmem:[%s492 + $0x170] sm:$0xff]
    %v540 = vld [vmem:[%s492 + $0x178] sm:$0xff]
    %v541 = vld [vmem:[%s492 + $0x180] sm:$0xff]
    %v542 = vld [vmem:[%s492 + $0x188] sm:$0xff]
    %v543 = vld [vmem:[%s492 + $0x190] sm:$0xff]
    %v544 = vld [vmem:[%s492 + $0x198] sm:$0xff]
    %v545 = vld [vmem:[%s492 + $0x1a0] sm:$0xff]
    %v546 = vld [vmem:[%s492 + $0x1a8] sm:$0xff]
    %v547 = vld [vmem:[%s492 + $0x1b0] sm:$0xff]
    %v548 = vld [vmem:[%s492 + $0x1b8] sm:$0xff]
    %v549 = vld [vmem:[%s492 + $0x1c0] sm:$0xff]
    %v550 = vld [vmem:[%s492 + $0x1c8] sm:$0xff]
    %v551 = vld [vmem:[%s492 + $0x1d0] sm:$0xff]
    %v552 = vld [vmem:[%s492 + $0x1d8] sm:$0xff]
    %v553 = vld [vmem:[%s492 + $0x1e0] sm:$0xff]
    %v554 = vld [vmem:[%s492 + $0x1e8] sm:$0xff]
    %v555 = vld [vmem:[%s492 + $0x1f0] sm:$0xff]
    %v556 = vld [vmem:[%s492 + $0x1f8] sm:$0xff]
    %557 = vmatprep.subr.mxu0 0.0
    %558 = vmatpush1.msra.mxu0 %v493
    %559 = vmatprep.subr.mxu0 0.0
    %560 = vmatpush1.msra.mxu0 %v494
    %561 = vmatprep.subr.mxu0 0.0
    %562 = vmatpush1.msra.mxu0 %v495
    %563 = vmatprep.subr.mxu0 0.0
    %564 = vmatpush1.msra.mxu0 %v496
    %565 = vmatprep.subr.mxu0 0.0
    %566 = vmatpush1.msra.mxu0 %v497
    %567 = vmatprep.subr.mxu0 0.0
    %568 = vmatpush1.msra.mxu0 %v498
    %569 = vmatprep.subr.mxu0 0.0
    %570 = vmatpush1.msra.mxu0 %v499
    %571 = vmatprep.subr.mxu0 0.0
    %572 = vmatpush1.msra.mxu0 %v500
    %573 = vmatprep.subr.mxu0 0.0
    %574 = vmatpush1.msra.mxu0 %v501
    %575 = vmatprep.subr.mxu0 0.0
    %576 = vmatpush1.msra.mxu0 %v502
    %577 = vmatprep.subr.mxu0 0.0
    %578 = vmatpush1.msra.mxu0 %v503
    %579 = vmatprep.subr.mxu0 0.0
    %580 = vmatpush1.msra.mxu0 %v504
    %581 = vmatprep.subr.mxu0 0.0
    %582 = vmatpush1.msra.mxu0 %v505
    %583 = vmatprep.subr.mxu0 0.0
    %584 = vmatpush1.msra.mxu0 %v506
    %585 = vmatprep.subr.mxu0 0.0
    %586 = vmatpush1.msra.mxu0 %v507
    %587 = vmatprep.subr.mxu0 0.0
    %588 = vmatpush1.msra.mxu0 %v508
    %589 = vmatprep.subr.mxu0 0.0
    %590 = vmatpush1.msra.mxu0 %v509
    %591 = vmatprep.subr.mxu0 0.0
    %592 = vmatpush1.msra.mxu0 %v510
    %593 = vmatprep.subr.mxu0 0.0
    %594 = vmatpush1.msra.mxu0 %v511
    %595 = vmatprep.subr.mxu0 0.0
    %596 = vmatpush1.msra.mxu0 %v512
    %597 = vmatprep.subr.mxu0 0.0
    %598 = vmatpush1.msra.mxu0 %v513
    %599 = vmatprep.subr.mxu0 0.0
    %600 = vmatpush1.msra.mxu0 %v514
    %601 = vmatprep.subr.mxu0 0.0
    %602 = vmatpush1.msra.mxu0 %v515
    %603 = vmatprep.subr.mxu0 0.0
    %604 = vmatpush1.msra.mxu0 %v516
    %605 = vmatprep.subr.mxu0 0.0
    %606 = vmatpush1.msra.mxu0 %v517
    %607 = vmatprep.subr.mxu0 0.0
    %608 = vmatpush1.msra.mxu0 %v518
    %609 = vmatprep.subr.mxu0 0.0
    %610 = vmatpush1.msra.mxu0 %v519
    %611 = vmatprep.subr.mxu0 0.0
    %612 = vmatpush1.msra.mxu0 %v520
    %613 = vmatprep.subr.mxu0 0.0
    %614 = vmatpush1.msra.mxu0 %v521
    %615 = vmatprep.subr.mxu0 0.0
    %616 = vmatpush1.msra.mxu0 %v522
    %617 = vmatprep.subr.mxu0 0.0
    %618 = vmatpush1.msra.mxu0 %v523
    %619 = vmatprep.subr.mxu0 0.0
    %620 = vmatpush1.msra.mxu0 %v524
    %621 = vmatprep.mubr.f32.mxu0 %v77
    %622 = vmatmul.mubr.f32.gmra.mrb[0].mxu0 %v73
    %v623 = vpop.f32.mrb[0].mxu0
    %v624 = vadd.f32 0.0, %v623
    %v625 = vpop.f32.mrb[0].mxu0
    %626 = vdwg.mxu0
    %627 = vmatprep.subr.mxu0 0.0
    %628 = vmatpush1.msra.mxu0 %v525
    %629 = vmatprep.subr.mxu0 0.0
    %630 = vmatpush1.msra.mxu0 %v526
    %631 = vmatprep.subr.mxu0 0.0
    %632 = vmatpush1.msra.mxu0 %v527
    %633 = vmatprep.subr.mxu0 0.0
    %634 = vmatpush1.msra.mxu0 %v528
    %635 = vmatprep.subr.mxu0 0.0
    %636 = vmatpush1.msra.mxu0 %v529
    %637 = vmatprep.subr.mxu0 0.0
    %638 = vmatpush1.msra.mxu0 %v530
    %639 = vmatprep.subr.mxu0 0.0
    %640 = vmatpush1.msra.mxu0 %v531
    %641 = vmatprep.subr.mxu0 0.0
    %642 = vmatpush1.msra.mxu0 %v532
    %643 = vmatprep.subr.mxu0 0.0
    %644 = vmatpush1.msra.mxu0 %v533
    %645 = vmatprep.subr.mxu0 0.0
    %646 = vmatpush1.msra.mxu0 %v534
    %647 = vmatprep.subr.mxu0 0.0
    %648 = vmatpush1.msra.mxu0 %v535
    %649 = vmatprep.subr.mxu0 0.0
    %650 = vmatpush1.msra.mxu0 %v536
    %651 = vmatprep.subr.mxu0 0.0
    %652 = vmatpush1.msra.mxu0 %v537
    %653 = vmatprep.subr.mxu0 0.0
    %654 = vmatpush1.msra.mxu0 %v538
    %655 = vmatprep.subr.mxu0 0.0
    %656 = vmatpush1.msra.mxu0 %v539
    %657 = vmatprep.subr.mxu0 0.0
    %658 = vmatpush1.msra.mxu0 %v540
    %659 = vmatprep.subr.mxu0 0.0
    %660 = vmatpush1.msra.mxu0 %v541
    %661 = vmatprep.subr.mxu0 0.0
    %662 = vmatpush1.msra.mxu0 %v542
    %663 = vmatprep.subr.mxu0 0.0
    %664 = vmatpush1.msra.mxu0 %v543
    %665 = vmatprep.subr.mxu0 0.0
    %666 = vmatpush1.msra.mxu0 %v544
    %667 = vmatprep.subr.mxu0 0.0
    %668 = vmatpush1.msra.mxu0 %v545
    %669 = vmatprep.subr.mxu0 0.0
    %670 = vmatpush1.msra.mxu0 %v546
    %671 = vmatprep.subr.mxu0 0.0
    %672 = vmatpush1.msra.mxu0 %v547
    %673 = vmatprep.subr.mxu0 0.0
    %674 = vmatpush1.msra.mxu0 %v548
    %675 = vmatprep.subr.mxu0 0.0
    %676 = vmatpush1.msra.mxu0 %v549
    %677 = vmatprep.subr.mxu0 0.0
    %678 = vmatpush1.msra.mxu0 %v550
    %679 = vmatprep.subr.mxu0 0.0
    %680 = vmatpush1.msra.mxu0 %v551
    %681 = vmatprep.subr.mxu0 0.0
    %682 = vmatpush1.msra.mxu0 %v552
    %683 = vmatprep.subr.mxu0 0.0
    %684 = vmatpush1.msra.mxu0 %v553
    %685 = vmatprep.subr.mxu0 0.0
    %686 = vmatpush1.msra.mxu0 %v554
    %687 = vmatprep.subr.mxu0 0.0
    %688 = vmatpush1.msra.mxu0 %v555
    %689 = vmatprep.subr.mxu0 0.0
    %690 = vmatpush1.msra.mxu0 %v556
    %691 = vmatprep.mubr.f32.mxu0 %v80
    %692 = vmatmul.mubr.f32.gmra.mrb[0].mxu0 %v75
    %v693 = vpop.f32.mrb[0].mxu0
    %v694 = vadd.f32 %v624, %v693
    %v695 = vpop.f32.mrb[0].mxu0
    %696 = vdwg.mxu0
    %v697 = vmax.f32 %v491, %v694
    %s698 = scalar_lea.vmem [#allocation2], 1536
    %v699 = vld [vmem:[%s698] sm:$0xff]
    %v700 = vld [vmem:[%s698 + $0x8] sm:$0xff]
    %v701 = vld [vmem:[%s698 + $0x10] sm:$0xff]
    %v702 = vld [vmem:[%s698 + $0x18] sm:$0xff]
    %v703 = vld [vmem:[%s698 + $0x20] sm:$0xff]
    %v704 = vld [vmem:[%s698 + $0x28] sm:$0xff]
    %v705 = vld [vmem:[%s698 + $0x30] sm:$0xff]
    %v706 = vld [vmem:[%s698 + $0x38] sm:$0xff]
    %v707 = vld [vmem:[%s698 + $0x40] sm:$0xff]
    %v708 = vld [vmem:[%s698 + $0x48] sm:$0xff]
    %v709 = vld [vmem:[%s698 + $0x50] sm:$0xff]
    %v710 = vld [vmem:[%s698 + $0x58] sm:$0xff]
    %v711 = vld [vmem:[%s698 + $0x60] sm:$0xff]
    %v712 = vld [vmem:[%s698 + $0x68] sm:$0xff]
    %v713 = vld [vmem:[%s698 + $0x70] sm:$0xff]
    %v714 = vld [vmem:[%s698 + $0x78] sm:$0xff]
    %v715 = vld [vmem:[%s698 + $0x80] sm:$0xff]
    %v716 = vld [vmem:[%s698 + $0x88] sm:$0xff]
    %v717 = vld [vmem:[%s698 + $0x90] sm:$0xff]
    %v718 = vld [vmem:[%s698 + $0x98] sm:$0xff]
    %v719 = vld [vmem:[%s698 + $0xa0] sm:$0xff]
    %v720 = vld [vmem:[%s698 + $0xa8] sm:$0xff]
    %v721 = vld [vmem:[%s698 + $0xb0] sm:$0xff]
    %v722 = vld [vmem:[%s698 + $0xb8] sm:$0xff]
    %v723 = vld [vmem:[%s698 + $0xc0] sm:$0xff]
    %v724 = vld [vmem:[%s698 + $0xc8] sm:$0xff]
    %v725 = vld [vmem:[%s698 + $0xd0] sm:$0xff]
    %v726 = vld [vmem:[%s698 + $0xd8] sm:$0xff]
    %v727 = vld [vmem:[%s698 + $0xe0] sm:$0xff]
    %v728 = vld [vmem:[%s698 + $0xe8] sm:$0xff]
    %v729 = vld [vmem:[%s698 + $0xf0] sm:$0xff]
    %v730 = vld [vmem:[%s698 + $0xf8] sm:$0xff]
    %v731 = vld [vmem:[%s698 + $0x100] sm:$0xff]
    %v732 = vld [vmem:[%s698 + $0x108] sm:$0xff]
    %v733 = vld [vmem:[%s698 + $0x110] sm:$0xff]
    %v734 = vld [vmem:[%s698 + $0x118] sm:$0xff]
    %v735 = vld [vmem:[%s698 + $0x120] sm:$0xff]
    %v736 = vld [vmem:[%s698 + $0x128] sm:$0xff]
    %v737 = vld [vmem:[%s698 + $0x130] sm:$0xff]
    %v738 = vld [vmem:[%s698 + $0x138] sm:$0xff]
    %v739 = vld [vmem:[%s698 + $0x140] sm:$0xff]
    %v740 = vld [vmem:[%s698 + $0x148] sm:$0xff]
    %v741 = vld [vmem:[%s698 + $0x150] sm:$0xff]
    %v742 = vld [vmem:[%s698 + $0x158] sm:$0xff]
    %v743 = vld [vmem:[%s698 + $0x160] sm:$0xff]
    %v744 = vld [vmem:[%s698 + $0x168] sm:$0xff]
    %v745 = vld [vmem:[%s698 + $0x170] sm:$0xff]
    %v746 = vld [vmem:[%s698 + $0x178] sm:$0xff]
    %v747 = vld [vmem:[%s698 + $0x180] sm:$0xff]
    %v748 = vld [vmem:[%s698 + $0x188] sm:$0xff]
    %v749 = vld [vmem:[%s698 + $0x190] sm:$0xff]
    %v750 = vld [vmem:[%s698 + $0x198] sm:$0xff]
    %v751 = vld [vmem:[%s698 + $0x1a0] sm:$0xff]
    %v752 = vld [vmem:[%s698 + $0x1a8] sm:$0xff]
    %v753 = vld [vmem:[%s698 + $0x1b0] sm:$0xff]
    %v754 = vld [vmem:[%s698 + $0x1b8] sm:$0xff]
    %v755 = vld [vmem:[%s698 + $0x1c0] sm:$0xff]
    %v756 = vld [vmem:[%s698 + $0x1c8] sm:$0xff]
    %v757 = vld [vmem:[%s698 + $0x1d0] sm:$0xff]
    %v758 = vld [vmem:[%s698 + $0x1d8] sm:$0xff]
    %v759 = vld [vmem:[%s698 + $0x1e0] sm:$0xff]
    %v760 = vld [vmem:[%s698 + $0x1e8] sm:$0xff]
    %v761 = vld [vmem:[%s698 + $0x1f0] sm:$0xff]
    %v762 = vld [vmem:[%s698 + $0x1f8] sm:$0xff]
    %763 = vmatprep.subr.mxu0 0.0
    %764 = vmatpush1.msra.mxu0 %v699
    %765 = vmatprep.subr.mxu0 0.0
    %766 = vmatpush1.msra.mxu0 %v700
    %767 = vmatprep.subr.mxu0 0.0
    %768 = vmatpush1.msra.mxu0 %v701
    %769 = vmatprep.subr.mxu0 0.0
    %770 = vmatpush1.msra.mxu0 %v702
    %771 = vmatprep.subr.mxu0 0.0
    %772 = vmatpush1.msra.mxu0 %v703
    %773 = vmatprep.subr.mxu0 0.0
    %774 = vmatpush1.msra.mxu0 %v704
    %775 = vmatprep.subr.mxu0 0.0
    %776 = vmatpush1.msra.mxu0 %v705
    %777 = vmatprep.subr.mxu0 0.0
    %778 = vmatpush1.msra.mxu0 %v706
    %779 = vmatprep.subr.mxu0 0.0
    %780 = vmatpush1.msra.mxu0 %v707
    %781 = vmatprep.subr.mxu0 0.0
    %782 = vmatpush1.msra.mxu0 %v708
    %783 = vmatprep.subr.mxu0 0.0
    %784 = vmatpush1.msra.mxu0 %v709
    %785 = vmatprep.subr.mxu0 0.0
    %786 = vmatpush1.msra.mxu0 %v710
    %787 = vmatprep.subr.mxu0 0.0
    %788 = vmatpush1.msra.mxu0 %v711
    %789 = vmatprep.subr.mxu0 0.0
    %790 = vmatpush1.msra.mxu0 %v712
    %791 = vmatprep.subr.mxu0 0.0
    %792 = vmatpush1.msra.mxu0 %v713
    %793 = vmatprep.subr.mxu0 0.0
    %794 = vmatpush1.msra.mxu0 %v714
    %795 = vmatprep.subr.mxu0 0.0
    %796 = vmatpush1.msra.mxu0 %v715
    %797 = vmatprep.subr.mxu0 0.0
    %798 = vmatpush1.msra.mxu0 %v716
    %799 = vmatprep.subr.mxu0 0.0
    %800 = vmatpush1.msra.mxu0 %v717
    %801 = vmatprep.subr.mxu0 0.0
    %802 = vmatpush1.msra.mxu0 %v718
    %803 = vmatprep.subr.mxu0 0.0
    %804 = vmatpush1.msra.mxu0 %v719
    %805 = vmatprep.subr.mxu0 0.0
    %806 = vmatpush1.msra.mxu0 %v720
    %807 = vmatprep.subr.mxu0 0.0
    %808 = vmatpush1.msra.mxu0 %v721
    %809 = vmatprep.subr.mxu0 0.0
    %810 = vmatpush1.msra.mxu0 %v722
    %811 = vmatprep.subr.mxu0 0.0
    %812 = vmatpush1.msra.mxu0 %v723
    %813 = vmatprep.subr.mxu0 0.0
    %814 = vmatpush1.msra.mxu0 %v724
    %815 = vmatprep.subr.mxu0 0.0
    %816 = vmatpush1.msra.mxu0 %v725
    %817 = vmatprep.subr.mxu0 0.0
    %818 = vmatpush1.msra.mxu0 %v726
    %819 = vmatprep.subr.mxu0 0.0
    %820 = vmatpush1.msra.mxu0 %v727
    %821 = vmatprep.subr.mxu0 0.0
    %822 = vmatpush1.msra.mxu0 %v728
    %823 = vmatprep.subr.mxu0 0.0
    %824 = vmatpush1.msra.mxu0 %v729
    %825 = vmatprep.subr.mxu0 0.0
    %826 = vmatpush1.msra.mxu0 %v730
    %827 = vmatprep.mubr.f32.mxu0 %v77
    %828 = vmatmul.mubr.f32.gmra.mrb[0].mxu0 %v73
    %v829 = vpop.f32.mrb[0].mxu0
    %v830 = vadd.f32 0.0, %v829
    %v831 = vpop.f32.mrb[0].mxu0
    %832 = vdwg.mxu0
    %833 = vmatprep.subr.mxu0 0.0
    %834 = vmatpush1.msra.mxu0 %v731
    %835 = vmatprep.subr.mxu0 0.0
    %836 = vmatpush1.msra.mxu0 %v732
    %837 = vmatprep.subr.mxu0 0.0
    %838 = vmatpush1.msra.mxu0 %v733
    %839 = vmatprep.subr.mxu0 0.0
    %840 = vmatpush1.msra.mxu0 %v734
    %841 = vmatprep.subr.mxu0 0.0
    %842 = vmatpush1.msra.mxu0 %v735
    %843 = vmatprep.subr.mxu0 0.0
    %844 = vmatpush1.msra.mxu0 %v736
    %845 = vmatprep.subr.mxu0 0.0
    %846 = vmatpush1.msra.mxu0 %v737
    %847 = vmatprep.subr.mxu0 0.0
    %848 = vmatpush1.msra.mxu0 %v738
    %849 = vmatprep.subr.mxu0 0.0
    %850 = vmatpush1.msra.mxu0 %v739
    %851 = vmatprep.subr.mxu0 0.0
    %852 = vmatpush1.msra.mxu0 %v740
    %853 = vmatprep.subr.mxu0 0.0
    %854 = vmatpush1.msra.mxu0 %v741
    %855 = vmatprep.subr.mxu0 0.0
    %856 = vmatpush1.msra.mxu0 %v742
    %857 = vmatprep.subr.mxu0 0.0
    %858 = vmatpush1.msra.mxu0 %v743
    %859 = vmatprep.subr.mxu0 0.0
    %860 = vmatpush1.msra.mxu0 %v744
    %861 = vmatprep.subr.mxu0 0.0
    %862 = vmatpush1.msra.mxu0 %v745
    %863 = vmatprep.subr.mxu0 0.0
    %864 = vmatpush1.msra.mxu0 %v746
    %865 = vmatprep.subr.mxu0 0.0
    %866 = vmatpush1.msra.mxu0 %v747
    %867 = vmatprep.subr.mxu0 0.0
    %868 = vmatpush1.msra.mxu0 %v748
    %869 = vmatprep.subr.mxu0 0.0
    %870 = vmatpush1.msra.mxu0 %v749
    %871 = vmatprep.subr.mxu0 0.0
    %872 = vmatpush1.msra.mxu0 %v750
    %873 = vmatprep.subr.mxu0 0.0
    %874 = vmatpush1.msra.mxu0 %v751
    %875 = vmatprep.subr.mxu0 0.0
    %876 = vmatpush1.msra.mxu0 %v752
    %877 = vmatprep.subr.mxu0 0.0
    %878 = vmatpush1.msra.mxu0 %v753
    %879 = vmatprep.subr.mxu0 0.0
    %880 = vmatpush1.msra.mxu0 %v754
    %881 = vmatprep.subr.mxu0 0.0
    %882 = vmatpush1.msra.mxu0 %v755
    %883 = vmatprep.subr.mxu0 0.0
    %884 = vmatpush1.msra.mxu0 %v756
    %885 = vmatprep.subr.mxu0 0.0
    %886 = vmatpush1.msra.mxu0 %v757
    %887 = vmatprep.subr.mxu0 0.0
    %888 = vmatpush1.msra.mxu0 %v758
    %889 = vmatprep.subr.mxu0 0.0
    %890 = vmatpush1.msra.mxu0 %v759
    %891 = vmatprep.subr.mxu0 0.0
    %892 = vmatpush1.msra.mxu0 %v760
    %893 = vmatprep.subr.mxu0 0.0
    %894 = vmatpush1.msra.mxu0 %v761
    %895 = vmatprep.subr.mxu0 0.0
    %896 = vmatpush1.msra.mxu0 %v762
    %897 = vmatprep.mubr.f32.mxu0 %v80
    %898 = vmatmul.mubr.f32.gmra.mrb[0].mxu0 %v75
    %v899 = vpop.f32.mrb[0].mxu0
    %v900 = vadd.f32 %v830, %v899
    %v901 = vpop.f32.mrb[0].mxu0
    %902 = vdwg.mxu0
    %v903 = vmax.f32 %v697, %v900
    %v904 = vld [vmem:[%s4] sm:$0xff]
    %v905 = vld [vmem:[%s4 + $0x8] sm:$0xff]
    %v906 = vld [vmem:[%s4 + $0x10] sm:$0xff]
    %v907 = vld [vmem:[%s4 + $0x18] sm:$0xff]
    %v908 = vld [vmem:[%s4 + $0x20] sm:$0xff]
    %v909 = vld [vmem:[%s4 + $0x28] sm:$0xff]
    %v910 = vld [vmem:[%s4 + $0x30] sm:$0xff]
    %v911 = vld [vmem:[%s4 + $0x38] sm:$0xff]
    %v912 = vld [vmem:[%s4 + $0x40] sm:$0xff]
    %vm913 = vcmask 31744
    %v915 = vsel %vm913, %v904, 0
    %v918 = vsel %vm913, %v905, 0
    %v921 = vsel %vm913, %v906, 0
    %v924 = vsel %vm913, %v907, 0
    %v927 = vsel %vm913, %v908, 0
    %v930 = vsel %vm913, %v909, 0
    %v933 = vsel %vm913, %v910, 0
    %v936 = vsel %vm913, %v911, 0
    %v939 = vsel %vm913, %v912, 0
    %vm941 = vcmask 1043456
    %v943 = vsel %vm941, %v903, 0
    %945 = vmatprep.subr.mxu0 0.0
    %946 = vmatpush1.msra.mxu0 %v943
    %947 = vmatprep.subr.mxu0 0.0
    %948 = vmatpush1.msra.mxu0 0.0
    %949 = vmatprep.subr.mxu0 0.0
    %950 = vmatpush1.msra.mxu0 0.0
    %951 = vmatprep.subr.mxu0 0.0
    %952 = vmatpush1.msra.mxu0 0.0
    %953 = vmatprep.subr.mxu0 0.0
    %954 = vmatpush1.msra.mxu0 0.0
    %955 = vmatprep.subr.mxu0 0.0
    %956 = vmatpush1.msra.mxu0 0.0
    %957 = vmatprep.subr.mxu0 0.0
    %958 = vmatpush1.msra.mxu0 0.0
    %959 = vmatprep.subr.mxu0 0.0
    %960 = vmatpush1.msra.mxu0 0.0
    %961 = vmatprep.subr.mxu0 0.0
    %962 = vmatpush1.msra.mxu0 0.0
    %963 = vmatprep.subr.mxu0 0.0
    %964 = vmatpush1.msra.mxu0 0.0
    %965 = vmatprep.subr.mxu0 0.0
    %966 = vmatpush1.msra.mxu0 0.0
    %967 = vmatprep.subr.mxu0 0.0
    %968 = vmatpush1.msra.mxu0 0.0
    %969 = vmatprep.subr.mxu0 0.0
    %970 = vmatpush1.msra.mxu0 0.0
    %971 = vmatprep.subr.mxu0 0.0
    %972 = vmatpush1.msra.mxu0 0.0
    %973 = vmatprep.subr.mxu0 0.0
    %974 = vmatpush1.msra.mxu0 0.0
    %975 = vmatprep.subr.mxu0 0.0
    %976 = vmatpush1.msra.mxu0 0.0
    %977 = vmatprep.subr.mxu0 0.0
    %978 = vmatpush1.msra.mxu0 0.0
    %979 = vmatprep.subr.mxu0 0.0
    %980 = vmatpush1.msra.mxu0 0.0
    %981 = vmatprep.subr.mxu0 0.0
    %982 = vmatpush1.msra.mxu0 0.0
    %983 = vmatprep.subr.mxu0 0.0
    %984 = vmatpush1.msra.mxu0 0.0
    %985 = vmatprep.subr.mxu0 0.0
    %986 = vmatpush1.msra.mxu0 0.0
    %987 = vmatprep.subr.mxu0 0.0
    %988 = vmatpush1.msra.mxu0 0.0
    %989 = vmatprep.subr.mxu0 0.0
    %990 = vmatpush1.msra.mxu0 0.0
    %991 = vmatprep.subr.mxu0 0.0
    %992 = vmatpush1.msra.mxu0 0.0
    %993 = vmatprep.subr.mxu0 0.0
    %994 = vmatpush1.msra.mxu0 0.0
    %995 = vmatprep.subr.mxu0 0.0
    %996 = vmatpush1.msra.mxu0 0.0
    %997 = vmatprep.subr.mxu0 0.0
    %998 = vmatpush1.msra.mxu0 0.0
    %999 = vmatprep.subr.mxu0 0.0
    %1000 = vmatpush1.msra.mxu0 0.0
    %1001 = vmatprep.subr.mxu0 0.0
    %1002 = vmatpush1.msra.mxu0 0.0
    %1003 = vmatprep.subr.mxu0 0.0
    %1004 = vmatpush1.msra.mxu0 0.0
    %1005 = vmatprep.subr.mxu0 0.0
    %1006 = vmatpush1.msra.mxu0 0.0
    %1007 = vmatprep.subr.mxu0 0.0
    %1008 = vmatpush1.msra.mxu0 0.0
    %1009 = vmatprep.mubr.f32.mxu0 0.0
    %1010 = vmatmul.mubr.f32.gmra.mrb[0].mxu0 %v915
    %v1011 = vpop.f32.mrb[0].mxu0
    %v1012 = vadd.f32 0.0, %v1011
    %v1013 = vpop.f32.mrb[0].mxu0
    %1014 = vmatprep.mubr.f32.mxu0 0.0
    %1015 = vmatmul.mubr.f32.gmra.mrb[0].mxu0 %v918
    %v1016 = vpop.f32.mrb[0].mxu0
    %v1017 = vadd.f32 0.0, %v1016
    %v1018 = vpop.f32.mrb[0].mxu0
    %1019 = vmatprep.mubr.f32.mxu0 0.0
    %1020 = vmatmul.mubr.f32.gmra.mrb[0].mxu0 %v921
    %v1021 = vpop.f32.mrb[0].mxu0
    %v1022 = vadd.f32 0.0, %v1021
    %v1023 = vpop.f32.mrb[0].mxu0
    %1024 = vmatprep.mubr.f32.mxu0 0.0
    %1025 = vmatmul.mubr.f32.gmra.mrb[0].mxu0 %v924
    %v1026 = vpop.f32.mrb[0].mxu0
    %v1027 = vadd.f32 0.0, %v1026
    %v1028 = vpop.f32.mrb[0].mxu0
    %1029 = vmatprep.mubr.f32.mxu0 0.0
    %1030 = vmatmul.mubr.f32.gmra.mrb[0].mxu0 %v927
    %v1031 = vpop.f32.mrb[0].mxu0
    %v1032 = vadd.f32 0.0, %v1031
    %v1033 = vpop.f32.mrb[0].mxu0
    %1034 = vmatprep.mubr.f32.mxu0 0.0
    %1035 = vmatmul.mubr.f32.gmra.mrb[0].mxu0 %v930
    %v1036 = vpop.f32.mrb[0].mxu0
    %v1037 = vadd.f32 0.0, %v1036
    %v1038 = vpop.f32.mrb[0].mxu0
    %1039 = vmatprep.mubr.f32.mxu0 0.0
    %1040 = vmatmul.mubr.f32.gmra.mrb[0].mxu0 %v933
    %v1041 = vpop.f32.mrb[0].mxu0
    %v1042 = vadd.f32 0.0, %v1041
    %v1043 = vpop.f32.mrb[0].mxu0
    %1044 = vmatprep.mubr.f32.mxu0 0.0
    %1045 = vmatmul.mubr.f32.gmra.mrb[0].mxu0 %v936
    %v1046 = vpop.f32.mrb[0].mxu0
    %v1047 = vadd.f32 0.0, %v1046
    %v1048 = vpop.f32.mrb[0].mxu0
    %1049 = vmatprep.mubr.f32.mxu0 0.0
    %1050 = vmatmul.mubr.f32.gmra.mrb[0].mxu0 %v939
    %v1051 = vpop.f32.mrb[0].mxu0
    %v1052 = vadd.f32 0.0, %v1051
    %v1053 = vpop.f32.mrb[0].mxu0
    %1054 = vdwg.mxu0
    %v1055 = vld [vmem:[#allocation4] sm:$0xff]
    %v1056 = vld [vmem:[#allocation4 + $0x8] sm:$0xff]
    %v1057 = vld [vmem:[#allocation4 + $0x10] sm:$0xff]
    %v1058 = vld [vmem:[#allocation4 + $0x18] sm:$0xff]
    %v1059 = vld [vmem:[#allocation4 + $0x20] sm:$0xff]
    %v1060 = vld [vmem:[#allocation4 + $0x28] sm:$0xff]
    %v1061 = vld [vmem:[#allocation4 + $0x30] sm:$0xff]
    %v1062 = vld [vmem:[#allocation4 + $0x38] sm:$0xff]
    %v1063 = vld [vmem:[#allocation4 + $0x40] sm:$0xff]
    %v1064 = vld [vmem:[#allocation4 + $0x48] sm:$0xff]
    %v1065 = vld [vmem:[#allocation4 + $0x50] sm:$0xff]
    %v1066 = vld [vmem:[#allocation4 + $0x58] sm:$0xff]
    %v1067 = vld [vmem:[#allocation4 + $0x60] sm:$0xff]
    %v1068 = vld [vmem:[#allocation4 + $0x68] sm:$0xff]
    %v1069 = vld [vmem:[#allocation4 + $0x70] sm:$0xff]
    %v1070 = vld [vmem:[#allocation4 + $0x78] sm:$0xff]
    %s1071 = scalar_lea.vmem [#allocation4], 128
    %v1072 = vld [vmem:[%s1071] sm:$0xff]
    %v1073 = vld [vmem:[%s1071 + $0x8] sm:$0xff]
    %v1074 = vld [vmem:[%s1071 + $0x10] sm:$0xff]
    %v1075 = vld [vmem:[%s1071 + $0x18] sm:$0xff]
    %v1076 = vld [vmem:[%s1071 + $0x20] sm:$0xff]
    %v1077 = vld [vmem:[%s1071 + $0x28] sm:$0xff]
    %v1078 = vld [vmem:[%s1071 + $0x30] sm:$0xff]
    %v1079 = vld [vmem:[%s1071 + $0x38] sm:$0xff]
    %v1080 = vld [vmem:[%s1071 + $0x40] sm:$0xff]
    %v1081 = vld [vmem:[%s1071 + $0x48] sm:$0xff]
    %v1082 = vld [vmem:[%s1071 + $0x50] sm:$0xff]
    %v1083 = vld [vmem:[%s1071 + $0x58] sm:$0xff]
    %v1084 = vld [vmem:[%s1071 + $0x60] sm:$0xff]
    %v1085 = vld [vmem:[%s1071 + $0x68] sm:$0xff]
    %v1086 = vld [vmem:[%s1071 + $0x70] sm:$0xff]
    %v1087 = vld [vmem:[%s1071 + $0x78] sm:$0xff]
    %1088 = vmatprep.subr.mxu0 0.0
    %1089 = vmatpush1.msra.mxu0 %v1072
    %1090 = vmatprep.subr.mxu0 0.0
    %1091 = vmatpush1.msra.mxu0 %v1073
    %1092 = vmatprep.subr.mxu0 0.0
    %1093 = vmatpush1.msra.mxu0 %v1074
    %1094 = vmatprep.subr.mxu0 0.0
    %1095 = vmatpush1.msra.mxu0 %v1075
    %1096 = vmatprep.subr.mxu0 0.0
    %1097 = vmatpush1.msra.mxu0 %v1076
    %1098 = vmatprep.subr.mxu0 0.0
    %1099 = vmatpush1.msra.mxu0 %v1077
    %1100 = vmatprep.subr.mxu0 0.0
    %1101 = vmatpush1.msra.mxu0 %v1078
    %1102 = vmatprep.subr.mxu0 0.0
    %1103 = vmatpush1.msra.mxu0 %v1079
    %1104 = vmatprep.subr.mxu0 0.0
    %1105 = vmatpush1.msra.mxu0 %v1080
    %1106 = vmatprep.subr.mxu0 0.0
    %1107 = vmatpush1.msra.mxu0 %v1081
    %1108 = vmatprep.subr.mxu0 0.0
    %1109 = vmatpush1.msra.mxu0 %v1082
    %1110 = vmatprep.subr.mxu0 0.0
    %1111 = vmatpush1.msra.mxu0 %v1083
    %1112 = vmatprep.subr.mxu0 0.0
    %1113 = vmatpush1.msra.mxu0 %v1084
    %1114 = vmatprep.subr.mxu0 0.0
    %1115 = vmatpush1.msra.mxu0 %v1085
    %1116 = vmatprep.subr.mxu0 0.0
    %1117 = vmatpush1.msra.mxu0 %v1086
    %1118 = vmatprep.subr.mxu0 0.0
    %1119 = vmatpush1.msra.mxu0 %v1087
    %1120 = vmatprep.subr.mxu0 0.0
    %1121 = vmatpush1.msra.mxu0 0.0
    %1122 = vmatprep.subr.mxu0 0.0
    %1123 = vmatpush1.msra.mxu0 0.0
    %1124 = vmatprep.subr.mxu0 0.0
    %1125 = vmatpush1.msra.mxu0 0.0
    %1126 = vmatprep.subr.mxu0 0.0
    %1127 = vmatpush1.msra.mxu0 0.0
    %1128 = vmatprep.subr.mxu0 0.0
    %1129 = vmatpush1.msra.mxu0 0.0
    %1130 = vmatprep.subr.mxu0 0.0
    %1131 = vmatpush1.msra.mxu0 0.0
    %1132 = vmatprep.subr.mxu0 0.0
    %1133 = vmatpush1.msra.mxu0 0.0
    %1134 = vmatprep.subr.mxu0 0.0
    %1135 = vmatpush1.msra.mxu0 0.0
    %1136 = vmatprep.subr.mxu0 0.0
    %1137 = vmatpush1.msra.mxu0 0.0
    %1138 = vmatprep.subr.mxu0 0.0
    %1139 = vmatpush1.msra.mxu0 0.0
    %1140 = vmatprep.subr.mxu0 0.0
    %1141 = vmatpush1.msra.mxu0 0.0
    %1142 = vmatprep.subr.mxu0 0.0
    %1143 = vmatpush1.msra.mxu0 0.0
    %1144 = vmatprep.subr.mxu0 0.0
    %1145 = vmatpush1.msra.mxu0 0.0
    %1146 = vmatprep.subr.mxu0 0.0
    %1147 = vmatpush1.msra.mxu0 0.0
    %1148 = vmatprep.subr.mxu0 0.0
    %1149 = vmatpush1.msra.mxu0 0.0
    %1150 = vmatprep.subr.mxu0 0.0
    %1151 = vmatpush1.msra.mxu0 0.0
    %1152 = vmatprep.mubr.f32.mxu0 0.0
    %1153 = vmatmul.mubr.f32.gmra.mrb[0].mxu0 %v1017
    %v1154 = vpop.f32.mrb[0].mxu0
    %v1155 = vadd.f32 0.0, %v1154
    %v1156 = vpop.f32.mrb[0].mxu0
    %1157 = vdwg.mxu0
    %1158 = vmatprep.subr.mxu0 0.0
    %1159 = vmatpush1.msra.mxu0 %v1055
    %1160 = vmatprep.subr.mxu0 0.0
    %1161 = vmatpush1.msra.mxu0 %v1056
    %1162 = vmatprep.subr.mxu0 0.0
    %1163 = vmatpush1.msra.mxu0 %v1057
    %1164 = vmatprep.subr.mxu0 0.0
    %1165 = vmatpush1.msra.mxu0 %v1058
    %1166 = vmatprep.subr.mxu0 0.0
    %1167 = vmatpush1.msra.mxu0 %v1059
    %1168 = vmatprep.subr.mxu0 0.0
    %1169 = vmatpush1.msra.mxu0 %v1060
    %1170 = vmatprep.subr.mxu0 0.0
    %1171 = vmatpush1.msra.mxu0 %v1061
    %1172 = vmatprep.subr.mxu0 0.0
    %1173 = vmatpush1.msra.mxu0 %v1062
    %1174 = vmatprep.subr.mxu0 0.0
    %1175 = vmatpush1.msra.mxu0 %v1063
    %1176 = vmatprep.subr.mxu0 0.0
    %1177 = vmatpush1.msra.mxu0 %v1064
    %1178 = vmatprep.subr.mxu0 0.0
    %1179 = vmatpush1.msra.mxu0 %v1065
    %1180 = vmatprep.subr.mxu0 0.0
    %1181 = vmatpush1.msra.mxu0 %v1066
    %1182 = vmatprep.subr.mxu0 0.0
    %1183 = vmatpush1.msra.mxu0 %v1067
    %1184 = vmatprep.subr.mxu0 0.0
    %1185 = vmatpush1.msra.mxu0 %v1068
    %1186 = vmatprep.subr.mxu0 0.0
    %1187 = vmatpush1.msra.mxu0 %v1069
    %1188 = vmatprep.subr.mxu0 0.0
    %1189 = vmatpush1.msra.mxu0 %v1070
    %1190 = vmatprep.subr.mxu0 0.0
    %1191 = vmatpush1.msra.mxu0 0.0
    %1192 = vmatprep.subr.mxu0 0.0
    %1193 = vmatpush1.msra.mxu0 0.0
    %1194 = vmatprep.subr.mxu0 0.0
    %1195 = vmatpush1.msra.mxu0 0.0
    %1196 = vmatprep.subr.mxu0 0.0
    %1197 = vmatpush1.msra.mxu0 0.0
    %1198 = vmatprep.subr.mxu0 0.0
    %1199 = vmatpush1.msra.mxu0 0.0
    %1200 = vmatprep.subr.mxu0 0.0
    %1201 = vmatpush1.msra.mxu0 0.0
    %1202 = vmatprep.subr.mxu0 0.0
    %1203 = vmatpush1.msra.mxu0 0.0
    %1204 = vmatprep.subr.mxu0 0.0
    %1205 = vmatpush1.msra.mxu0 0.0
    %1206 = vmatprep.subr.mxu0 0.0
    %1207 = vmatpush1.msra.mxu0 0.0
    %1208 = vmatprep.subr.mxu0 0.0
    %1209 = vmatpush1.msra.mxu0 0.0
    %1210 = vmatprep.subr.mxu0 0.0
    %1211 = vmatpush1.msra.mxu0 0.0
    %1212 = vmatprep.subr.mxu0 0.0
    %1213 = vmatpush1.msra.mxu0 0.0
    %1214 = vmatprep.subr.mxu0 0.0
    %1215 = vmatpush1.msra.mxu0 0.0
    %1216 = vmatprep.subr.mxu0 0.0
    %1217 = vmatpush1.msra.mxu0 0.0
    %1218 = vmatprep.subr.mxu0 0.0
    %1219 = vmatpush1.msra.mxu0 0.0
    %1220 = vmatprep.subr.mxu0 0.0
    %1221 = vmatpush1.msra.mxu0 0.0
    %1222 = vmatprep.mubr.f32.mxu0 0.0
    %1223 = vmatmul.mubr.f32.gmra.mrb[0].mxu0 %v1012
    %v1224 = vpop.f32.mrb[0].mxu0
    %v1225 = vadd.f32 %v1155, %v1224
    %v1226 = vpop.f32.mrb[0].mxu0
    %1227 = vdwg.mxu0
    %s1228 = scalar_lea.vmem [#allocation4], 256
    %v1229 = vld [vmem:[%s1228] sm:$0xff]
    %v1230 = vld [vmem:[%s1228 + $0x8] sm:$0xff]
    %v1231 = vld [vmem:[%s1228 + $0x10] sm:$0xff]
    %v1232 = vld [vmem:[%s1228 + $0x18] sm:$0xff]
    %v1233 = vld [vmem:[%s1228 + $0x20] sm:$0xff]
    %v1234 = vld [vmem:[%s1228 + $0x28] sm:$0xff]
    %v1235 = vld [vmem:[%s1228 + $0x30] sm:$0xff]
    %v1236 = vld [vmem:[%s1228 + $0x38] sm:$0xff]
    %v1237 = vld [vmem:[%s1228 + $0x40] sm:$0xff]
    %v1238 = vld [vmem:[%s1228 + $0x48] sm:$0xff]
    %v1239 = vld [vmem:[%s1228 + $0x50] sm:$0xff]
    %v1240 = vld [vmem:[%s1228 + $0x58] sm:$0xff]
    %v1241 = vld [vmem:[%s1228 + $0x60] sm:$0xff]
    %v1242 = vld [vmem:[%s1228 + $0x68] sm:$0xff]
    %v1243 = vld [vmem:[%s1228 + $0x70] sm:$0xff]
    %v1244 = vld [vmem:[%s1228 + $0x78] sm:$0xff]
    %1245 = vmatprep.subr.mxu0 0.0
    %1246 = vmatpush1.msra.mxu0 %v1229
    %1247 = vmatprep.subr.mxu0 0.0
    %1248 = vmatpush1.msra.mxu0 %v1230
    %1249 = vmatprep.subr.mxu0 0.0
    %1250 = vmatpush1.msra.mxu0 %v1231
    %1251 = vmatprep.subr.mxu0 0.0
    %1252 = vmatpush1.msra.mxu0 %v1232
    %1253 = vmatprep.subr.mxu0 0.0
    %1254 = vmatpush1.msra.mxu0 %v1233
    %1255 = vmatprep.subr.mxu0 0.0
    %1256 = vmatpush1.msra.mxu0 %v1234
    %1257 = vmatprep.subr.mxu0 0.0
    %1258 = vmatpush1.msra.mxu0 %v1235
    %1259 = vmatprep.subr.mxu0 0.0
    %1260 = vmatpush1.msra.mxu0 %v1236
    %1261 = vmatprep.subr.mxu0 0.0
    %1262 = vmatpush1.msra.mxu0 %v1237
    %1263 = vmatprep.subr.mxu0 0.0
    %1264 = vmatpush1.msra.mxu0 %v1238
    %1265 = vmatprep.subr.mxu0 0.0
    %1266 = vmatpush1.msra.mxu0 %v1239
    %1267 = vmatprep.subr.mxu0 0.0
    %1268 = vmatpush1.msra.mxu0 %v1240
    %1269 = vmatprep.subr.mxu0 0.0
    %1270 = vmatpush1.msra.mxu0 %v1241
    %1271 = vmatprep.subr.mxu0 0.0
    %1272 = vmatpush1.msra.mxu0 %v1242
    %1273 = vmatprep.subr.mxu0 0.0
    %1274 = vmatpush1.msra.mxu0 %v1243
    %1275 = vmatprep.subr.mxu0 0.0
    %1276 = vmatpush1.msra.mxu0 %v1244
    %1277 = vmatprep.subr.mxu0 0.0
    %1278 = vmatpush1.msra.mxu0 0.0
    %1279 = vmatprep.subr.mxu0 0.0
    %1280 = vmatpush1.msra.mxu0 0.0
    %1281 = vmatprep.subr.mxu0 0.0
    %1282 = vmatpush1.msra.mxu0 0.0
    %1283 = vmatprep.subr.mxu0 0.0
    %1284 = vmatpush1.msra.mxu0 0.0
    %1285 = vmatprep.subr.mxu0 0.0
    %1286 = vmatpush1.msra.mxu0 0.0
    %1287 = vmatprep.subr.mxu0 0.0
    %1288 = vmatpush1.msra.mxu0 0.0
    %1289 = vmatprep.subr.mxu0 0.0
    %1290 = vmatpush1.msra.mxu0 0.0
    %1291 = vmatprep.subr.mxu0 0.0
    %1292 = vmatpush1.msra.mxu0 0.0
    %1293 = vmatprep.subr.mxu0 0.0
    %1294 = vmatpush1.msra.mxu0 0.0
    %1295 = vmatprep.subr.mxu0 0.0
    %1296 = vmatpush1.msra.mxu0 0.0
    %1297 = vmatprep.subr.mxu0 0.0
    %1298 = vmatpush1.msra.mxu0 0.0
    %1299 = vmatprep.subr.mxu0 0.0
    %1300 = vmatpush1.msra.mxu0 0.0
    %1301 = vmatprep.subr.mxu0 0.0
    %1302 = vmatpush1.msra.mxu0 0.0
    %1303 = vmatprep.subr.mxu0 0.0
    %1304 = vmatpush1.msra.mxu0 0.0
    %1305 = vmatprep.subr.mxu0 0.0
    %1306 = vmatpush1.msra.mxu0 0.0
    %1307 = vmatprep.subr.mxu0 0.0
    %1308 = vmatpush1.msra.mxu0 0.0
    %1309 = vmatprep.mubr.f32.mxu0 0.0
    %1310 = vmatmul.mubr.f32.gmra.mrb[0].mxu0 %v1022
    %v1311 = vpop.f32.mrb[0].mxu0
    %v1312 = vadd.f32 0.0, %v1311
    %v1313 = vpop.f32.mrb[0].mxu0
    %1314 = vdwg.mxu0
    %v1315 = vadd.f32 %v1225, %v1312
    %s1316 = scalar_lea.vmem [#allocation4], 384
    %v1317 = vld [vmem:[%s1316] sm:$0xff]
    %v1318 = vld [vmem:[%s1316 + $0x8] sm:$0xff]
    %v1319 = vld [vmem:[%s1316 + $0x10] sm:$0xff]
    %v1320 = vld [vmem:[%s1316 + $0x18] sm:$0xff]
    %v1321 = vld [vmem:[%s1316 + $0x20] sm:$0xff]
    %v1322 = vld [vmem:[%s1316 + $0x28] sm:$0xff]
    %v1323 = vld [vmem:[%s1316 + $0x30] sm:$0xff]
    %v1324 = vld [vmem:[%s1316 + $0x38] sm:$0xff]
    %v1325 = vld [vmem:[%s1316 + $0x40] sm:$0xff]
    %v1326 = vld [vmem:[%s1316 + $0x48] sm:$0xff]
    %v1327 = vld [vmem:[%s1316 + $0x50] sm:$0xff]
    %v1328 = vld [vmem:[%s1316 + $0x58] sm:$0xff]
    %v1329 = vld [vmem:[%s1316 + $0x60] sm:$0xff]
    %v1330 = vld [vmem:[%s1316 + $0x68] sm:$0xff]
    %v1331 = vld [vmem:[%s1316 + $0x70] sm:$0xff]
    %v1332 = vld [vmem:[%s1316 + $0x78] sm:$0xff]
    %1333 = vmatprep.subr.mxu0 0.0
    %1334 = vmatpush1.msra.mxu0 %v1317
    %1335 = vmatprep.subr.mxu0 0.0
    %1336 = vmatpush1.msra.mxu0 %v1318
    %1337 = vmatprep.subr.mxu0 0.0
    %1338 = vmatpush1.msra.mxu0 %v1319
    %1339 = vmatprep.subr.mxu0 0.0
    %1340 = vmatpush1.msra.mxu0 %v1320
    %1341 = vmatprep.subr.mxu0 0.0
    %1342 = vmatpush1.msra.mxu0 %v1321
    %1343 = vmatprep.subr.mxu0 0.0
    %1344 = vmatpush1.msra.mxu0 %v1322
    %1345 = vmatprep.subr.mxu0 0.0
    %1346 = vmatpush1.msra.mxu0 %v1323
    %1347 = vmatprep.subr.mxu0 0.0
    %1348 = vmatpush1.msra.mxu0 %v1324
    %1349 = vmatprep.subr.mxu0 0.0
    %1350 = vmatpush1.msra.mxu0 %v1325
    %1351 = vmatprep.subr.mxu0 0.0
    %1352 = vmatpush1.msra.mxu0 %v1326
    %1353 = vmatprep.subr.mxu0 0.0
    %1354 = vmatpush1.msra.mxu0 %v1327
    %1355 = vmatprep.subr.mxu0 0.0
    %1356 = vmatpush1.msra.mxu0 %v1328
    %1357 = vmatprep.subr.mxu0 0.0
    %1358 = vmatpush1.msra.mxu0 %v1329
    %1359 = vmatprep.subr.mxu0 0.0
    %1360 = vmatpush1.msra.mxu0 %v1330
    %1361 = vmatprep.subr.mxu0 0.0
    %1362 = vmatpush1.msra.mxu0 %v1331
    %1363 = vmatprep.subr.mxu0 0.0
    %1364 = vmatpush1.msra.mxu0 %v1332
    %1365 = vmatprep.subr.mxu0 0.0
    %1366 = vmatpush1.msra.mxu0 0.0
    %1367 = vmatprep.subr.mxu0 0.0
    %1368 = vmatpush1.msra.mxu0 0.0
    %1369 = vmatprep.subr.mxu0 0.0
    %1370 = vmatpush1.msra.mxu0 0.0
    %1371 = vmatprep.subr.mxu0 0.0
    %1372 = vmatpush1.msra.mxu0 0.0
    %1373 = vmatprep.subr.mxu0 0.0
    %1374 = vmatpush1.msra.mxu0 0.0
    %1375 = vmatprep.subr.mxu0 0.0
    %1376 = vmatpush1.msra.mxu0 0.0
    %1377 = vmatprep.subr.mxu0 0.0
    %1378 = vmatpush1.msra.mxu0 0.0
    %1379 = vmatprep.subr.mxu0 0.0
    %1380 = vmatpush1.msra.mxu0 0.0
    %1381 = vmatprep.subr.mxu0 0.0
    %1382 = vmatpush1.msra.mxu0 0.0
    %1383 = vmatprep.subr.mxu0 0.0
    %1384 = vmatpush1.msra.mxu0 0.0
    %1385 = vmatprep.subr.mxu0 0.0
    %1386 = vmatpush1.msra.mxu0 0.0
    %1387 = vmatprep.subr.mxu0 0.0
    %1388 = vmatpush1.msra.mxu0 0.0
    %1389 = vmatprep.subr.mxu0 0.0
    %1390 = vmatpush1.msra.mxu0 0.0
    %1391 = vmatprep.subr.mxu0 0.0
    %1392 = vmatpush1.msra.mxu0 0.0
    %1393 = vmatprep.subr.mxu0 0.0
    %1394 = vmatpush1.msra.mxu0 0.0
    %1395 = vmatprep.subr.mxu0 0.0
    %1396 = vmatpush1.msra.mxu0 0.0
    %1397 = vmatprep.mubr.f32.mxu0 0.0
    %1398 = vmatmul.mubr.f32.gmra.mrb[0].mxu0 %v1027
    %v1399 = vpop.f32.mrb[0].mxu0
    %v1400 = vadd.f32 0.0, %v1399
    %v1401 = vpop.f32.mrb[0].mxu0
    %1402 = vdwg.mxu0
    %v1403 = vadd.f32 %v1315, %v1400
    %s1404 = scalar_lea.vmem [#allocation4], 512
    %v1405 = vld [vmem:[%s1404] sm:$0xff]
    %v1406 = vld [vmem:[%s1404 + $0x8] sm:$0xff]
    %v1407 = vld [vmem:[%s1404 + $0x10] sm:$0xff]
    %v1408 = vld [vmem:[%s1404 + $0x18] sm:$0xff]
    %v1409 = vld [vmem:[%s1404 + $0x20] sm:$0xff]
    %v1410 = vld [vmem:[%s1404 + $0x28] sm:$0xff]
    %v1411 = vld [vmem:[%s1404 + $0x30] sm:$0xff]
    %v1412 = vld [vmem:[%s1404 + $0x38] sm:$0xff]
    %v1413 = vld [vmem:[%s1404 + $0x40] sm:$0xff]
    %v1414 = vld [vmem:[%s1404 + $0x48] sm:$0xff]
    %v1415 = vld [vmem:[%s1404 + $0x50] sm:$0xff]
    %v1416 = vld [vmem:[%s1404 + $0x58] sm:$0xff]
    %v1417 = vld [vmem:[%s1404 + $0x60] sm:$0xff]
    %v1418 = vld [vmem:[%s1404 + $0x68] sm:$0xff]
    %v1419 = vld [vmem:[%s1404 + $0x70] sm:$0xff]
    %v1420 = vld [vmem:[%s1404 + $0x78] sm:$0xff]
    %1421 = vmatprep.subr.mxu0 0.0
    %1422 = vmatpush1.msra.mxu0 %v1405
    %1423 = vmatprep.subr.mxu0 0.0
    %1424 = vmatpush1.msra.mxu0 %v1406
    %1425 = vmatprep.subr.mxu0 0.0
    %1426 = vmatpush1.msra.mxu0 %v1407
    %1427 = vmatprep.subr.mxu0 0.0
    %1428 = vmatpush1.msra.mxu0 %v1408
    %1429 = vmatprep.subr.mxu0 0.0
    %1430 = vmatpush1.msra.mxu0 %v1409
    %1431 = vmatprep.subr.mxu0 0.0
    %1432 = vmatpush1.msra.mxu0 %v1410
    %1433 = vmatprep.subr.mxu0 0.0
    %1434 = vmatpush1.msra.mxu0 %v1411
    %1435 = vmatprep.subr.mxu0 0.0
    %1436 = vmatpush1.msra.mxu0 %v1412
    %1437 = vmatprep.subr.mxu0 0.0
    %1438 = vmatpush1.msra.mxu0 %v1413
    %1439 = vmatprep.subr.mxu0 0.0
    %1440 = vmatpush1.msra.mxu0 %v1414
    %1441 = vmatprep.subr.mxu0 0.0
    %1442 = vmatpush1.msra.mxu0 %v1415
    %1443 = vmatprep.subr.mxu0 0.0
    %1444 = vmatpush1.msra.mxu0 %v1416
    %1445 = vmatprep.subr.mxu0 0.0
    %1446 = vmatpush1.msra.mxu0 %v1417
    %1447 = vmatprep.subr.mxu0 0.0
    %1448 = vmatpush1.msra.mxu0 %v1418
    %1449 = vmatprep.subr.mxu0 0.0
    %1450 = vmatpush1.msra.mxu0 %v1419
    %1451 = vmatprep.subr.mxu0 0.0
    %1452 = vmatpush1.msra.mxu0 %v1420
    %1453 = vmatprep.subr.mxu0 0.0
    %1454 = vmatpush1.msra.mxu0 0.0
    %1455 = vmatprep.subr.mxu0 0.0
    %1456 = vmatpush1.msra.mxu0 0.0
    %1457 = vmatprep.subr.mxu0 0.0
    %1458 = vmatpush1.msra.mxu0 0.0
    %1459 = vmatprep.subr.mxu0 0.0
    %1460 = vmatpush1.msra.mxu0 0.0
    %1461 = vmatprep.subr.mxu0 0.0
    %1462 = vmatpush1.msra.mxu0 0.0
    %1463 = vmatprep.subr.mxu0 0.0
    %1464 = vmatpush1.msra.mxu0 0.0
    %1465 = vmatprep.subr.mxu0 0.0
    %1466 = vmatpush1.msra.mxu0 0.0
    %1467 = vmatprep.subr.mxu0 0.0
    %1468 = vmatpush1.msra.mxu0 0.0
    %1469 = vmatprep.subr.mxu0 0.0
    %1470 = vmatpush1.msra.mxu0 0.0
    %1471 = vmatprep.subr.mxu0 0.0
    %1472 = vmatpush1.msra.mxu0 0.0
    %1473 = vmatprep.subr.mxu0 0.0
    %1474 = vmatpush1.msra.mxu0 0.0
    %1475 = vmatprep.subr.mxu0 0.0
    %1476 = vmatpush1.msra.mxu0 0.0
    %1477 = vmatprep.subr.mxu0 0.0
    %1478 = vmatpush1.msra.mxu0 0.0
    %1479 = vmatprep.subr.mxu0 0.0
    %1480 = vmatpush1.msra.mxu0 0.0
    %1481 = vmatprep.subr.mxu0 0.0
    %1482 = vmatpush1.msra.mxu0 0.0
    %1483 = vmatprep.subr.mxu0 0.0
    %1484 = vmatpush1.msra.mxu0 0.0
    %1485 = vmatprep.mubr.f32.mxu0 0.0
    %1486 = vmatmul.mubr.f32.gmra.mrb[0].mxu0 %v1032
    %v1487 = vpop.f32.mrb[0].mxu0
    %v1488 = vadd.f32 0.0, %v1487
    %v1489 = vpop.f32.mrb[0].mxu0
    %1490 = vdwg.mxu0
    %v1491 = vadd.f32 %v1403, %v1488
    %s1492 = scalar_lea.vmem [#allocation4], 640
    %v1493 = vld [vmem:[%s1492] sm:$0xff]
    %v1494 = vld [vmem:[%s1492 + $0x8] sm:$0xff]
    %v1495 = vld [vmem:[%s1492 + $0x10] sm:$0xff]
    %v1496 = vld [vmem:[%s1492 + $0x18] sm:$0xff]
    %v1497 = vld [vmem:[%s1492 + $0x20] sm:$0xff]
    %v1498 = vld [vmem:[%s1492 + $0x28] sm:$0xff]
    %v1499 = vld [vmem:[%s1492 + $0x30] sm:$0xff]
    %v1500 = vld [vmem:[%s1492 + $0x38] sm:$0xff]
    %v1501 = vld [vmem:[%s1492 + $0x40] sm:$0xff]
    %v1502 = vld [vmem:[%s1492 + $0x48] sm:$0xff]
    %v1503 = vld [vmem:[%s1492 + $0x50] sm:$0xff]
    %v1504 = vld [vmem:[%s1492 + $0x58] sm:$0xff]
    %v1505 = vld [vmem:[%s1492 + $0x60] sm:$0xff]
    %v1506 = vld [vmem:[%s1492 + $0x68] sm:$0xff]
    %v1507 = vld [vmem:[%s1492 + $0x70] sm:$0xff]
    %v1508 = vld [vmem:[%s1492 + $0x78] sm:$0xff]
    %1509 = vmatprep.subr.mxu0 0.0
    %1510 = vmatpush1.msra.mxu0 %v1493
    %1511 = vmatprep.subr.mxu0 0.0
    %1512 = vmatpush1.msra.mxu0 %v1494
    %1513 = vmatprep.subr.mxu0 0.0
    %1514 = vmatpush1.msra.mxu0 %v1495
    %1515 = vmatprep.subr.mxu0 0.0
    %1516 = vmatpush1.msra.mxu0 %v1496
    %1517 = vmatprep.subr.mxu0 0.0
    %1518 = vmatpush1.msra.mxu0 %v1497
    %1519 = vmatprep.subr.mxu0 0.0
    %1520 = vmatpush1.msra.mxu0 %v1498
    %1521 = vmatprep.subr.mxu0 0.0
    %1522 = vmatpush1.msra.mxu0 %v1499
    %1523 = vmatprep.subr.mxu0 0.0
    %1524 = vmatpush1.msra.mxu0 %v1500
    %1525 = vmatprep.subr.mxu0 0.0
    %1526 = vmatpush1.msra.mxu0 %v1501
    %1527 = vmatprep.subr.mxu0 0.0
    %1528 = vmatpush1.msra.mxu0 %v1502
    %1529 = vmatprep.subr.mxu0 0.0
    %1530 = vmatpush1.msra.mxu0 %v1503
    %1531 = vmatprep.subr.mxu0 0.0
    %1532 = vmatpush1.msra.mxu0 %v1504
    %1533 = vmatprep.subr.mxu0 0.0
    %1534 = vmatpush1.msra.mxu0 %v1505
    %1535 = vmatprep.subr.mxu0 0.0
    %1536 = vmatpush1.msra.mxu0 %v1506
    %1537 = vmatprep.subr.mxu0 0.0
    %1538 = vmatpush1.msra.mxu0 %v1507
    %1539 = vmatprep.subr.mxu0 0.0
    %1540 = vmatpush1.msra.mxu0 %v1508
    %1541 = vmatprep.subr.mxu0 0.0
    %1542 = vmatpush1.msra.mxu0 0.0
    %1543 = vmatprep.subr.mxu0 0.0
    %1544 = vmatpush1.msra.mxu0 0.0
    %1545 = vmatprep.subr.mxu0 0.0
    %1546 = vmatpush1.msra.mxu0 0.0
    %1547 = vmatprep.subr.mxu0 0.0
    %1548 = vmatpush1.msra.mxu0 0.0
    %1549 = vmatprep.subr.mxu0 0.0
    %1550 = vmatpush1.msra.mxu0 0.0
    %1551 = vmatprep.subr.mxu0 0.0
    %1552 = vmatpush1.msra.mxu0 0.0
    %1553 = vmatprep.subr.mxu0 0.0
    %1554 = vmatpush1.msra.mxu0 0.0
    %1555 = vmatprep.subr.mxu0 0.0
    %1556 = vmatpush1.msra.mxu0 0.0
    %1557 = vmatprep.subr.mxu0 0.0
    %1558 = vmatpush1.msra.mxu0 0.0
    %1559 = vmatprep.subr.mxu0 0.0
    %1560 = vmatpush1.msra.mxu0 0.0
    %1561 = vmatprep.subr.mxu0 0.0
    %1562 = vmatpush1.msra.mxu0 0.0
    %1563 = vmatprep.subr.mxu0 0.0
    %1564 = vmatpush1.msra.mxu0 0.0
    %1565 = vmatprep.subr.mxu0 0.0
    %1566 = vmatpush1.msra.mxu0 0.0
    %1567 = vmatprep.subr.mxu0 0.0
    %1568 = vmatpush1.msra.mxu0 0.0
    %1569 = vmatprep.subr.mxu0 0.0
    %1570 = vmatpush1.msra.mxu0 0.0
    %1571 = vmatprep.subr.mxu0 0.0
    %1572 = vmatpush1.msra.mxu0 0.0
    %1573 = vmatprep.mubr.f32.mxu0 0.0
    %1574 = vmatmul.mubr.f32.gmra.mrb[0].mxu0 %v1037
    %v1575 = vpop.f32.mrb[0].mxu0
    %v1576 = vadd.f32 0.0, %v1575
    %v1577 = vpop.f32.mrb[0].mxu0
    %1578 = vdwg.mxu0
    %v1579 = vadd.f32 %v1491, %v1576
    %s1580 = scalar_lea.vmem [#allocation4], 768
    %v1581 = vld [vmem:[%s1580] sm:$0xff]
    %v1582 = vld [vmem:[%s1580 + $0x8] sm:$0xff]
    %v1583 = vld [vmem:[%s1580 + $0x10] sm:$0xff]
    %v1584 = vld [vmem:[%s1580 + $0x18] sm:$0xff]
    %v1585 = vld [vmem:[%s1580 + $0x20] sm:$0xff]
    %v1586 = vld [vmem:[%s1580 + $0x28] sm:$0xff]
    %v1587 = vld [vmem:[%s1580 + $0x30] sm:$0xff]
    %v1588 = vld [vmem:[%s1580 + $0x38] sm:$0xff]
    %v1589 = vld [vmem:[%s1580 + $0x40] sm:$0xff]
    %v1590 = vld [vmem:[%s1580 + $0x48] sm:$0xff]
    %v1591 = vld [vmem:[%s1580 + $0x50] sm:$0xff]
    %v1592 = vld [vmem:[%s1580 + $0x58] sm:$0xff]
    %v1593 = vld [vmem:[%s1580 + $0x60] sm:$0xff]
    %v1594 = vld [vmem:[%s1580 + $0x68] sm:$0xff]
    %v1595 = vld [vmem:[%s1580 + $0x70] sm:$0xff]
    %v1596 = vld [vmem:[%s1580 + $0x78] sm:$0xff]
    %1597 = vmatprep.subr.mxu0 0.0
    %1598 = vmatpush1.msra.mxu0 %v1581
    %1599 = vmatprep.subr.mxu0 0.0
    %1600 = vmatpush1.msra.mxu0 %v1582
    %1601 = vmatprep.subr.mxu0 0.0
    %1602 = vmatpush1.msra.mxu0 %v1583
    %1603 = vmatprep.subr.mxu0 0.0
    %1604 = vmatpush1.msra.mxu0 %v1584
    %1605 = vmatprep.subr.mxu0 0.0
    %1606 = vmatpush1.msra.mxu0 %v1585
    %1607 = vmatprep.subr.mxu0 0.0
    %1608 = vmatpush1.msra.mxu0 %v1586
    %1609 = vmatprep.subr.mxu0 0.0
    %1610 = vmatpush1.msra.mxu0 %v1587
    %1611 = vmatprep.subr.mxu0 0.0
    %1612 = vmatpush1.msra.mxu0 %v1588
    %1613 = vmatprep.subr.mxu0 0.0
    %1614 = vmatpush1.msra.mxu0 %v1589
    %1615 = vmatprep.subr.mxu0 0.0
    %1616 = vmatpush1.msra.mxu0 %v1590
    %1617 = vmatprep.subr.mxu0 0.0
    %1618 = vmatpush1.msra.mxu0 %v1591
    %1619 = vmatprep.subr.mxu0 0.0
    %1620 = vmatpush1.msra.mxu0 %v1592
    %1621 = vmatprep.subr.mxu0 0.0
    %1622 = vmatpush1.msra.mxu0 %v1593
    %1623 = vmatprep.subr.mxu0 0.0
    %1624 = vmatpush1.msra.mxu0 %v1594
    %1625 = vmatprep.subr.mxu0 0.0
    %1626 = vmatpush1.msra.mxu0 %v1595
    %1627 = vmatprep.subr.mxu0 0.0
    %1628 = vmatpush1.msra.mxu0 %v1596
    %1629 = vmatprep.subr.mxu0 0.0
    %1630 = vmatpush1.msra.mxu0 0.0
    %1631 = vmatprep.subr.mxu0 0.0
    %1632 = vmatpush1.msra.mxu0 0.0
    %1633 = vmatprep.subr.mxu0 0.0
    %1634 = vmatpush1.msra.mxu0 0.0
    %1635 = vmatprep.subr.mxu0 0.0
    %1636 = vmatpush1.msra.mxu0 0.0
    %1637 = vmatprep.subr.mxu0 0.0
    %1638 = vmatpush1.msra.mxu0 0.0
    %1639 = vmatprep.subr.mxu0 0.0
    %1640 = vmatpush1.msra.mxu0 0.0
    %1641 = vmatprep.subr.mxu0 0.0
    %1642 = vmatpush1.msra.mxu0 0.0
    %1643 = vmatprep.subr.mxu0 0.0
    %1644 = vmatpush1.msra.mxu0 0.0
    %1645 = vmatprep.subr.mxu0 0.0
    %1646 = vmatpush1.msra.mxu0 0.0
    %1647 = vmatprep.subr.mxu0 0.0
    %1648 = vmatpush1.msra.mxu0 0.0
    %1649 = vmatprep.subr.mxu0 0.0
    %1650 = vmatpush1.msra.mxu0 0.0
    %1651 = vmatprep.subr.mxu0 0.0
    %1652 = vmatpush1.msra.mxu0 0.0
    %1653 = vmatprep.subr.mxu0 0.0
    %1654 = vmatpush1.msra.mxu0 0.0
    %1655 = vmatprep.subr.mxu0 0.0
    %1656 = vmatpush1.msra.mxu0 0.0
    %1657 = vmatprep.subr.mxu0 0.0
    %1658 = vmatpush1.msra.mxu0 0.0
    %1659 = vmatprep.subr.mxu0 0.0
    %1660 = vmatpush1.msra.mxu0 0.0
    %1661 = vmatprep.mubr.f32.mxu0 0.0
    %1662 = vmatmul.mubr.f32.gmra.mrb[0].mxu0 %v1042
    %v1663 = vpop.f32.mrb[0].mxu0
    %v1664 = vadd.f32 0.0, %v1663
    %v1665 = vpop.f32.mrb[0].mxu0
    %1666 = vdwg.mxu0
    %v1667 = vadd.f32 %v1579, %v1664
    %s1668 = scalar_lea.vmem [#allocation4], 896
    %v1669 = vld [vmem:[%s1668] sm:$0xff]
    %v1670 = vld [vmem:[%s1668 + $0x8] sm:$0xff]
    %v1671 = vld [vmem:[%s1668 + $0x10] sm:$0xff]
    %v1672 = vld [vmem:[%s1668 + $0x18] sm:$0xff]
    %v1673 = vld [vmem:[%s1668 + $0x20] sm:$0xff]
    %v1674 = vld [vmem:[%s1668 + $0x28] sm:$0xff]
    %v1675 = vld [vmem:[%s1668 + $0x30] sm:$0xff]
    %v1676 = vld [vmem:[%s1668 + $0x38] sm:$0xff]
    %v1677 = vld [vmem:[%s1668 + $0x40] sm:$0xff]
    %v1678 = vld [vmem:[%s1668 + $0x48] sm:$0xff]
    %v1679 = vld [vmem:[%s1668 + $0x50] sm:$0xff]
    %v1680 = vld [vmem:[%s1668 + $0x58] sm:$0xff]
    %v1681 = vld [vmem:[%s1668 + $0x60] sm:$0xff]
    %v1682 = vld [vmem:[%s1668 + $0x68] sm:$0xff]
    %v1683 = vld [vmem:[%s1668 + $0x70] sm:$0xff]
    %v1684 = vld [vmem:[%s1668 + $0x78] sm:$0xff]
    %1685 = vmatprep.subr.mxu0 0.0
    %1686 = vmatpush1.msra.mxu0 %v1669
    %1687 = vmatprep.subr.mxu0 0.0
    %1688 = vmatpush1.msra.mxu0 %v1670
    %1689 = vmatprep.subr.mxu0 0.0
    %1690 = vmatpush1.msra.mxu0 %v1671
    %1691 = vmatprep.subr.mxu0 0.0
    %1692 = vmatpush1.msra.mxu0 %v1672
    %1693 = vmatprep.subr.mxu0 0.0
    %1694 = vmatpush1.msra.mxu0 %v1673
    %1695 = vmatprep.subr.mxu0 0.0
    %1696 = vmatpush1.msra.mxu0 %v1674
    %1697 = vmatprep.subr.mxu0 0.0
    %1698 = vmatpush1.msra.mxu0 %v1675
    %1699 = vmatprep.subr.mxu0 0.0
    %1700 = vmatpush1.msra.mxu0 %v1676
    %1701 = vmatprep.subr.mxu0 0.0
    %1702 = vmatpush1.msra.mxu0 %v1677
    %1703 = vmatprep.subr.mxu0 0.0
    %1704 = vmatpush1.msra.mxu0 %v1678
    %1705 = vmatprep.subr.mxu0 0.0
    %1706 = vmatpush1.msra.mxu0 %v1679
    %1707 = vmatprep.subr.mxu0 0.0
    %1708 = vmatpush1.msra.mxu0 %v1680
    %1709 = vmatprep.subr.mxu0 0.0
    %1710 = vmatpush1.msra.mxu0 %v1681
    %1711 = vmatprep.subr.mxu0 0.0
    %1712 = vmatpush1.msra.mxu0 %v1682
    %1713 = vmatprep.subr.mxu0 0.0
    %1714 = vmatpush1.msra.mxu0 %v1683
    %1715 = vmatprep.subr.mxu0 0.0
    %1716 = vmatpush1.msra.mxu0 %v1684
    %1717 = vmatprep.subr.mxu0 0.0
    %1718 = vmatpush1.msra.mxu0 0.0
    %1719 = vmatprep.subr.mxu0 0.0
    %1720 = vmatpush1.msra.mxu0 0.0
    %1721 = vmatprep.subr.mxu0 0.0
    %1722 = vmatpush1.msra.mxu0 0.0
    %1723 = vmatprep.subr.mxu0 0.0
    %1724 = vmatpush1.msra.mxu0 0.0
    %1725 = vmatprep.subr.mxu0 0.0
    %1726 = vmatpush1.msra.mxu0 0.0
    %1727 = vmatprep.subr.mxu0 0.0
    %1728 = vmatpush1.msra.mxu0 0.0
    %1729 = vmatprep.subr.mxu0 0.0
    %1730 = vmatpush1.msra.mxu0 0.0
    %1731 = vmatprep.subr.mxu0 0.0
    %1732 = vmatpush1.msra.mxu0 0.0
    %1733 = vmatprep.subr.mxu0 0.0
    %1734 = vmatpush1.msra.mxu0 0.0
    %1735 = vmatprep.subr.mxu0 0.0
    %1736 = vmatpush1.msra.mxu0 0.0
    %1737 = vmatprep.subr.mxu0 0.0
    %1738 = vmatpush1.msra.mxu0 0.0
    %1739 = vmatprep.subr.mxu0 0.0
    %1740 = vmatpush1.msra.mxu0 0.0
    %1741 = vmatprep.subr.mxu0 0.0
    %1742 = vmatpush1.msra.mxu0 0.0
    %1743 = vmatprep.subr.mxu0 0.0
    %1744 = vmatpush1.msra.mxu0 0.0
    %1745 = vmatprep.subr.mxu0 0.0
    %1746 = vmatpush1.msra.mxu0 0.0
    %1747 = vmatprep.subr.mxu0 0.0
    %1748 = vmatpush1.msra.mxu0 0.0
    %1749 = vmatprep.mubr.f32.mxu0 0.0
    %1750 = vmatmul.mubr.f32.gmra.mrb[0].mxu0 %v1047
    %v1751 = vpop.f32.mrb[0].mxu0
    %v1752 = vadd.f32 0.0, %v1751
    %v1753 = vpop.f32.mrb[0].mxu0
    %1754 = vdwg.mxu0
    %v1755 = vadd.f32 %v1667, %v1752
    %s1756 = scalar_lea.vmem [#allocation4], 1024
    %v1757 = vld [vmem:[%s1756] sm:$0xff]
    %v1758 = vld [vmem:[%s1756 + $0x8] sm:$0xff]
    %v1759 = vld [vmem:[%s1756 + $0x10] sm:$0xff]
    %v1760 = vld [vmem:[%s1756 + $0x18] sm:$0xff]
    %v1761 = vld [vmem:[%s1756 + $0x20] sm:$0xff]
    %v1762 = vld [vmem:[%s1756 + $0x28] sm:$0xff]
    %v1763 = vld [vmem:[%s1756 + $0x30] sm:$0xff]
    %v1764 = vld [vmem:[%s1756 + $0x38] sm:$0xff]
    %v1765 = vld [vmem:[%s1756 + $0x40] sm:$0xff]
    %v1766 = vld [vmem:[%s1756 + $0x48] sm:$0xff]
    %v1767 = vld [vmem:[%s1756 + $0x50] sm:$0xff]
    %v1768 = vld [vmem:[%s1756 + $0x58] sm:$0xff]
    %v1769 = vld [vmem:[%s1756 + $0x60] sm:$0xff]
    %v1770 = vld [vmem:[%s1756 + $0x68] sm:$0xff]
    %v1771 = vld [vmem:[%s1756 + $0x70] sm:$0xff]
    %v1772 = vld [vmem:[%s1756 + $0x78] sm:$0xff]
    %1773 = vmatprep.subr.mxu0 0.0
    %1774 = vmatpush1.msra.mxu0 %v1757
    %1775 = vmatprep.subr.mxu0 0.0
    %1776 = vmatpush1.msra.mxu0 %v1758
    %1777 = vmatprep.subr.mxu0 0.0
    %1778 = vmatpush1.msra.mxu0 %v1759
    %1779 = vmatprep.subr.mxu0 0.0
    %1780 = vmatpush1.msra.mxu0 %v1760
    %1781 = vmatprep.subr.mxu0 0.0
    %1782 = vmatpush1.msra.mxu0 %v1761
    %1783 = vmatprep.subr.mxu0 0.0
    %1784 = vmatpush1.msra.mxu0 %v1762
    %1785 = vmatprep.subr.mxu0 0.0
    %1786 = vmatpush1.msra.mxu0 %v1763
    %1787 = vmatprep.subr.mxu0 0.0
    %1788 = vmatpush1.msra.mxu0 %v1764
    %1789 = vmatprep.subr.mxu0 0.0
    %1790 = vmatpush1.msra.mxu0 %v1765
    %1791 = vmatprep.subr.mxu0 0.0
    %1792 = vmatpush1.msra.mxu0 %v1766
    %1793 = vmatprep.subr.mxu0 0.0
    %1794 = vmatpush1.msra.mxu0 %v1767
    %1795 = vmatprep.subr.mxu0 0.0
    %1796 = vmatpush1.msra.mxu0 %v1768
    %1797 = vmatprep.subr.mxu0 0.0
    %1798 = vmatpush1.msra.mxu0 %v1769
    %1799 = vmatprep.subr.mxu0 0.0
    %1800 = vmatpush1.msra.mxu0 %v1770
    %1801 = vmatprep.subr.mxu0 0.0
    %1802 = vmatpush1.msra.mxu0 %v1771
    %1803 = vmatprep.subr.mxu0 0.0
    %1804 = vmatpush1.msra.mxu0 %v1772
    %1805 = vmatprep.subr.mxu0 0.0
    %1806 = vmatpush1.msra.mxu0 0.0
    %1807 = vmatprep.subr.mxu0 0.0
    %1808 = vmatpush1.msra.mxu0 0.0
    %1809 = vmatprep.subr.mxu0 0.0
    %1810 = vmatpush1.msra.mxu0 0.0
    %1811 = vmatprep.subr.mxu0 0.0
    %1812 = vmatpush1.msra.mxu0 0.0
    %1813 = vmatprep.subr.mxu0 0.0
    %1814 = vmatpush1.msra.mxu0 0.0
    %1815 = vmatprep.subr.mxu0 0.0
    %1816 = vmatpush1.msra.mxu0 0.0
    %1817 = vmatprep.subr.mxu0 0.0
    %1818 = vmatpush1.msra.mxu0 0.0
    %1819 = vmatprep.subr.mxu0 0.0
    %1820 = vmatpush1.msra.mxu0 0.0
    %1821 = vmatprep.subr.mxu0 0.0
    %1822 = vmatpush1.msra.mxu0 0.0
    %1823 = vmatprep.subr.mxu0 0.0
    %1824 = vmatpush1.msra.mxu0 0.0
    %1825 = vmatprep.subr.mxu0 0.0
    %1826 = vmatpush1.msra.mxu0 0.0
    %1827 = vmatprep.subr.mxu0 0.0
    %1828 = vmatpush1.msra.mxu0 0.0
    %1829 = vmatprep.subr.mxu0 0.0
    %1830 = vmatpush1.msra.mxu0 0.0
    %1831 = vmatprep.subr.mxu0 0.0
    %1832 = vmatpush1.msra.mxu0 0.0
    %1833 = vmatprep.subr.mxu0 0.0
    %1834 = vmatpush1.msra.mxu0 0.0
    %1835 = vmatprep.subr.mxu0 0.0
    %1836 = vmatpush1.msra.mxu0 0.0
    %1837 = vmatprep.mubr.f32.mxu0 0.0
    %1838 = vmatmul.mubr.f32.gmra.mrb[0].mxu0 %v1052
    %v1839 = vpop.f32.mrb[0].mxu0
    %v1840 = vadd.f32 0.0, %v1839
    %v1841 = vpop.f32.mrb[0].mxu0
    %1842 = vdwg.mxu0
    %v1843 = vadd.f32 %v1755, %v1840
    %v1844 = vld [vmem:[%s3] sm:$0xff]
    %v1845 = vld [vmem:[%s3 + $0x8] sm:$0xff]
    %v1846 = vld [vmem:[%s3 + $0x10] sm:$0xff]
    %v1847 = vld [vmem:[%s3 + $0x18] sm:$0xff]
    %v1848 = vld [vmem:[%s3 + $0x20] sm:$0xff]
    %v1849 = vld [vmem:[%s3 + $0x28] sm:$0xff]
    %v1850 = vld [vmem:[%s3 + $0x30] sm:$0xff]
    %v1851 = vld [vmem:[%s3 + $0x38] sm:$0xff]
    %v1852 = vld [vmem:[%s3 + $0x40] sm:$0xff]
    %v1853 = vld [vmem:[%s3 + $0x48] sm:$0xff]
    %v1854 = vld [vmem:[%s3 + $0x50] sm:$0xff]
    %v1855 = vld [vmem:[%s3 + $0x58] sm:$0xff]
    %v1856 = vld [vmem:[%s3 + $0x60] sm:$0xff]
    %v1857 = vld [vmem:[%s3 + $0x68] sm:$0xff]
    %v1858 = vld [vmem:[%s3 + $0x70] sm:$0xff]
    %v1859 = vld [vmem:[%s3 + $0x78] sm:$0xff]
    %1860 = vmatprep.subr.mxu0 0.0
    %1861 = vmatpush1.msra.mxu0 %v1844
    %1862 = vmatprep.subr.mxu0 0.0
    %1863 = vmatpush1.msra.mxu0 %v1845
    %1864 = vmatprep.subr.mxu0 0.0
    %1865 = vmatpush1.msra.mxu0 %v1846
    %1866 = vmatprep.subr.mxu0 0.0
    %1867 = vmatpush1.msra.mxu0 %v1847
    %1868 = vmatprep.subr.mxu0 0.0
    %1869 = vmatpush1.msra.mxu0 %v1848
    %1870 = vmatprep.subr.mxu0 0.0
    %1871 = vmatpush1.msra.mxu0 %v1849
    %1872 = vmatprep.subr.mxu0 0.0
    %1873 = vmatpush1.msra.mxu0 %v1850
    %1874 = vmatprep.subr.mxu0 0.0
    %1875 = vmatpush1.msra.mxu0 %v1851
    %1876 = vmatprep.subr.mxu0 0.0
    %1877 = vmatpush1.msra.mxu0 %v1852
    %1878 = vmatprep.subr.mxu0 0.0
    %1879 = vmatpush1.msra.mxu0 %v1853
    %1880 = vmatprep.subr.mxu0 0.0
    %1881 = vmatpush1.msra.mxu0 %v1854
    %1882 = vmatprep.subr.mxu0 0.0
    %1883 = vmatpush1.msra.mxu0 %v1855
    %1884 = vmatprep.subr.mxu0 0.0
    %1885 = vmatpush1.msra.mxu0 %v1856
    %1886 = vmatprep.subr.mxu0 0.0
    %1887 = vmatpush1.msra.mxu0 %v1857
    %1888 = vmatprep.subr.mxu0 0.0
    %1889 = vmatpush1.msra.mxu0 %v1858
    %1890 = vmatprep.subr.mxu0 0.0
    %1891 = vmatpush1.msra.mxu0 %v1859
    %1892 = vmatprep.subr.mxu0 0.0
    %1893 = vmatpush1.msra.mxu0 0.0
    %1894 = vmatprep.subr.mxu0 0.0
    %1895 = vmatpush1.msra.mxu0 0.0
    %1896 = vmatprep.subr.mxu0 0.0
    %1897 = vmatpush1.msra.mxu0 0.0
    %1898 = vmatprep.subr.mxu0 0.0
    %1899 = vmatpush1.msra.mxu0 0.0
    %1900 = vmatprep.subr.mxu0 0.0
    %1901 = vmatpush1.msra.mxu0 0.0
    %1902 = vmatprep.subr.mxu0 0.0
    %1903 = vmatpush1.msra.mxu0 0.0
    %1904 = vmatprep.subr.mxu0 0.0
    %1905 = vmatpush1.msra.mxu0 0.0
    %1906 = vmatprep.subr.mxu0 0.0
    %1907 = vmatpush1.msra.mxu0 0.0
    %1908 = vmatprep.subr.mxu0 0.0
    %1909 = vmatpush1.msra.mxu0 0.0
    %1910 = vmatprep.subr.mxu0 0.0
    %1911 = vmatpush1.msra.mxu0 0.0
    %1912 = vmatprep.subr.mxu0 0.0
    %1913 = vmatpush1.msra.mxu0 0.0
    %1914 = vmatprep.subr.mxu0 0.0
    %1915 = vmatpush1.msra.mxu0 0.0
    %1916 = vmatprep.subr.mxu0 0.0
    %1917 = vmatpush1.msra.mxu0 0.0
    %1918 = vmatprep.subr.mxu0 0.0
    %1919 = vmatpush1.msra.mxu0 0.0
    %1920 = vmatprep.subr.mxu0 0.0
    %1921 = vmatpush1.msra.mxu0 0.0
    %1922 = vmatprep.subr.mxu0 0.0
    %1923 = vmatpush1.msra.mxu0 0.0
    %1924 = vmatprep.mubr.f32.mxu0 0.0
    %1925 = vmatmul.mubr.f32.gmra.mrb[0].mxu0 %v1843
    %v1926 = vpop.f32.mrb[0].mxu0
    %v1927 = vadd.f32 0.0, %v1926
    %v1928 = vpop.f32.mrb[0].mxu0
    %1929 = vdwg.mxu0
    %v1930 = vmul.f32 %v1843, %v1843
    %1931 = vmatprep.subr.mxu0 0.0
    %1932 = vmatpush1.msra.mxu0 %v1844
    %1933 = vmatprep.subr.mxu0 0.0
    %1934 = vmatpush1.msra.mxu0 %v1845
    %1935 = vmatprep.subr.mxu0 0.0
    %1936 = vmatpush1.msra.mxu0 %v1846
    %1937 = vmatprep.subr.mxu0 0.0
    %1938 = vmatpush1.msra.mxu0 %v1847
    %1939 = vmatprep.subr.mxu0 0.0
    %1940 = vmatpush1.msra.mxu0 %v1848
    %1941 = vmatprep.subr.mxu0 0.0
    %1942 = vmatpush1.msra.mxu0 %v1849
    %1943 = vmatprep.subr.mxu0 0.0
    %1944 = vmatpush1.msra.mxu0 %v1850
    %1945 = vmatprep.subr.mxu0 0.0
    %1946 = vmatpush1.msra.mxu0 %v1851
    %1947 = vmatprep.subr.mxu0 0.0
    %1948 = vmatpush1.msra.mxu0 %v1852
    %1949 = vmatprep.subr.mxu0 0.0
    %1950 = vmatpush1.msra.mxu0 %v1853
    %1951 = vmatprep.subr.mxu0 0.0
    %1952 = vmatpush1.msra.mxu0 %v1854
    %1953 = vmatprep.subr.mxu0 0.0
    %1954 = vmatpush1.msra.mxu0 %v1855
    %1955 = vmatprep.subr.mxu0 0.0
    %1956 = vmatpush1.msra.mxu0 %v1856
    %1957 = vmatprep.subr.mxu0 0.0
    %1958 = vmatpush1.msra.mxu0 %v1857
    %1959 = vmatprep.subr.mxu0 0.0
    %1960 = vmatpush1.msra.mxu0 %v1858
    %1961 = vmatprep.subr.mxu0 0.0
    %1962 = vmatpush1.msra.mxu0 %v1859
    %1963 = vmatprep.subr.mxu0 0.0
    %1964 = vmatpush1.msra.mxu0 0.0
    %1965 = vmatprep.subr.mxu0 0.0
    %1966 = vmatpush1.msra.mxu0 0.0
    %1967 = vmatprep.subr.mxu0 0.0
    %1968 = vmatpush1.msra.mxu0 0.0
    %1969 = vmatprep.subr.mxu0 0.0
    %1970 = vmatpush1.msra.mxu0 0.0
    %1971 = vmatprep.subr.mxu0 0.0
    %1972 = vmatpush1.msra.mxu0 0.0
    %1973 = vmatprep.subr.mxu0 0.0
    %1974 = vmatpush1.msra.mxu0 0.0
    %1975 = vmatprep.subr.mxu0 0.0
    %1976 = vmatpush1.msra.mxu0 0.0
    %1977 = vmatprep.subr.mxu0 0.0
    %1978 = vmatpush1.msra.mxu0 0.0
    %1979 = vmatprep.subr.mxu0 0.0
    %1980 = vmatpush1.msra.mxu0 0.0
    %1981 = vmatprep.subr.mxu0 0.0
    %1982 = vmatpush1.msra.mxu0 0.0
    %1983 = vmatprep.subr.mxu0 0.0
    %1984 = vmatpush1.msra.mxu0 0.0
    %1985 = vmatprep.subr.mxu0 0.0
    %1986 = vmatpush1.msra.mxu0 0.0
    %1987 = vmatprep.subr.mxu0 0.0
    %1988 = vmatpush1.msra.mxu0 0.0
    %1989 = vmatprep.subr.mxu0 0.0
    %1990 = vmatpush1.msra.mxu0 0.0
    %1991 = vmatprep.subr.mxu0 0.0
    %1992 = vmatpush1.msra.mxu0 0.0
    %1993 = vmatprep.subr.mxu0 0.0
    %1994 = vmatpush1.msra.mxu0 0.0
    %1995 = vmatprep.mubr.f32.mxu0 0.0
    %1996 = vmatmul.mubr.f32.gmra.mrb[0].mxu0 %v1930
    %v1997 = vpop.f32.mrb[0].mxu0
    %v1998 = vadd.f32 0.0, %v1997
    %v1999 = vpop.f32.mrb[0].mxu0
    %2000 = vdwg.mxu0
    %v2001 = vsub.f32 %v1843, %v1927
    %v2002 = vmul.f32 %v1927, %v1927
    %v2003 = vsub.f32 %v1998, %v2002
    %v2004 = vadd.f32 %v2003, 1e-05
    %v2005 = vrsqrt.pop %v2004
    %v2006 = vmul.f32 %v2001, %v2005
    %vm2007 = vcmp.gt.f32.partialorder %v2006, 0.0
    %v2008 = vmul.f32 %v2006, 0.01
    %v2009 = vsel %vm2007, %v2006, %v2008
    %v2010 = vld [vmem:[%s5] sm:$0xff]
    %v2011 = vld [vmem:[%s5 + $0x8] sm:$0xff]
    %v2012 = vld [vmem:[%s5 + $0x10] sm:$0xff]
    %v2013 = vld [vmem:[%s5 + $0x18] sm:$0xff]
    %v2014 = vld [vmem:[%s5 + $0x20] sm:$0xff]
    %v2015 = vld [vmem:[%s5 + $0x28] sm:$0xff]
    %v2016 = vld [vmem:[%s5 + $0x30] sm:$0xff]
    %v2017 = vld [vmem:[%s5 + $0x38] sm:$0xff]
    %v2018 = vld [vmem:[%s5 + $0x40] sm:$0xff]
    %vm2019 = vcmask 64512
    %v2021 = vsel %vm2019, %v2010, 0
    %v2024 = vsel %vm2019, %v2011, 0
    %v2027 = vsel %vm2019, %v2012, 0
    %v2030 = vsel %vm2019, %v2013, 0
    %v2033 = vsel %vm2019, %v2014, 0
    %v2036 = vsel %vm2019, %v2015, 0
    %v2039 = vsel %vm2019, %v2016, 0
    %v2042 = vsel %vm2019, %v2017, 0
    %v2045 = vsel %vm2019, %v2018, 0
    %2047 = vmatprep.subr.mxu0 0.0
    %2048 = vmatpush1.msra.mxu0 %v2009
    %2049 = vmatprep.subr.mxu0 0.0
    %2050 = vmatpush1.msra.mxu0 0.0
    %2051 = vmatprep.subr.mxu0 0.0
    %2052 = vmatpush1.msra.mxu0 0.0
    %2053 = vmatprep.subr.mxu0 0.0
    %2054 = vmatpush1.msra.mxu0 0.0
    %2055 = vmatprep.subr.mxu0 0.0
    %2056 = vmatpush1.msra.mxu0 0.0
    %2057 = vmatprep.subr.mxu0 0.0
    %2058 = vmatpush1.msra.mxu0 0.0
    %2059 = vmatprep.subr.mxu0 0.0
    %2060 = vmatpush1.msra.mxu0 0.0
    %2061 = vmatprep.subr.mxu0 0.0
    %2062 = vmatpush1.msra.mxu0 0.0
    %2063 = vmatprep.subr.mxu0 0.0
    %2064 = vmatpush1.msra.mxu0 0.0
    %2065 = vmatprep.subr.mxu0 0.0
    %2066 = vmatpush1.msra.mxu0 0.0
    %2067 = vmatprep.subr.mxu0 0.0
    %2068 = vmatpush1.msra.mxu0 0.0
    %2069 = vmatprep.subr.mxu0 0.0
    %2070 = vmatpush1.msra.mxu0 0.0
    %2071 = vmatprep.subr.mxu0 0.0
    %2072 = vmatpush1.msra.mxu0 0.0
    %2073 = vmatprep.subr.mxu0 0.0
    %2074 = vmatpush1.msra.mxu0 0.0
    %2075 = vmatprep.subr.mxu0 0.0
    %2076 = vmatpush1.msra.mxu0 0.0
    %2077 = vmatprep.subr.mxu0 0.0
    %2078 = vmatpush1.msra.mxu0 0.0
    %2079 = vmatprep.subr.mxu0 0.0
    %2080 = vmatpush1.msra.mxu0 0.0
    %2081 = vmatprep.subr.mxu0 0.0
    %2082 = vmatpush1.msra.mxu0 0.0
    %2083 = vmatprep.subr.mxu0 0.0
    %2084 = vmatpush1.msra.mxu0 0.0
    %2085 = vmatprep.subr.mxu0 0.0
    %2086 = vmatpush1.msra.mxu0 0.0
    %2087 = vmatprep.subr.mxu0 0.0
    %2088 = vmatpush1.msra.mxu0 0.0
    %2089 = vmatprep.subr.mxu0 0.0
    %2090 = vmatpush1.msra.mxu0 0.0
    %2091 = vmatprep.subr.mxu0 0.0
    %2092 = vmatpush1.msra.mxu0 0.0
    %2093 = vmatprep.subr.mxu0 0.0
    %2094 = vmatpush1.msra.mxu0 0.0
    %2095 = vmatprep.subr.mxu0 0.0
    %2096 = vmatpush1.msra.mxu0 0.0
    %2097 = vmatprep.subr.mxu0 0.0
    %2098 = vmatpush1.msra.mxu0 0.0
    %2099 = vmatprep.subr.mxu0 0.0
    %2100 = vmatpush1.msra.mxu0 0.0
    %2101 = vmatprep.subr.mxu0 0.0
    %2102 = vmatpush1.msra.mxu0 0.0
    %2103 = vmatprep.subr.mxu0 0.0
    %2104 = vmatpush1.msra.mxu0 0.0
    %2105 = vmatprep.subr.mxu0 0.0
    %2106 = vmatpush1.msra.mxu0 0.0
    %2107 = vmatprep.subr.mxu0 0.0
    %2108 = vmatpush1.msra.mxu0 0.0
    %2109 = vmatprep.subr.mxu0 0.0
    %2110 = vmatpush1.msra.mxu0 0.0
    %2111 = vmatprep.mubr.f32.mxu0 0.0
    %2112 = vmatmul.mubr.f32.gmra.mrb[0].mxu0 %v2021
    %v2113 = vpop.f32.mrb[0].mxu0
    %v2114 = vadd.f32 0.0, %v2113
    %v2115 = vpop.f32.mrb[0].mxu0
    %2116 = vmatprep.mubr.f32.mxu0 0.0
    %2117 = vmatmul.mubr.f32.gmra.mrb[0].mxu0 %v2024
    %v2118 = vpop.f32.mrb[0].mxu0
    %v2119 = vadd.f32 0.0, %v2118
    %v2120 = vpop.f32.mrb[0].mxu0
    %2121 = vmatprep.mubr.f32.mxu0 0.0
    %2122 = vmatmul.mubr.f32.gmra.mrb[0].mxu0 %v2027
    %v2123 = vpop.f32.mrb[0].mxu0
    %v2124 = vadd.f32 0.0, %v2123
    %v2125 = vpop.f32.mrb[0].mxu0
    %2126 = vmatprep.mubr.f32.mxu0 0.0
    %2127 = vmatmul.mubr.f32.gmra.mrb[0].mxu0 %v2030
    %v2128 = vpop.f32.mrb[0].mxu0
    %v2129 = vadd.f32 0.0, %v2128
    %v2130 = vpop.f32.mrb[0].mxu0
    %2131 = vmatprep.mubr.f32.mxu0 0.0
    %2132 = vmatmul.mubr.f32.gmra.mrb[0].mxu0 %v2033
    %v2133 = vpop.f32.mrb[0].mxu0
    %v2134 = vadd.f32 0.0, %v2133
    %v2135 = vpop.f32.mrb[0].mxu0
    %2136 = vmatprep.mubr.f32.mxu0 0.0
    %2137 = vmatmul.mubr.f32.gmra.mrb[0].mxu0 %v2036
    %v2138 = vpop.f32.mrb[0].mxu0
    %v2139 = vadd.f32 0.0, %v2138
    %v2140 = vpop.f32.mrb[0].mxu0
    %2141 = vmatprep.mubr.f32.mxu0 0.0
    %2142 = vmatmul.mubr.f32.gmra.mrb[0].mxu0 %v2039
    %v2143 = vpop.f32.mrb[0].mxu0
    %v2144 = vadd.f32 0.0, %v2143
    %v2145 = vpop.f32.mrb[0].mxu0
    %2146 = vmatprep.mubr.f32.mxu0 0.0
    %2147 = vmatmul.mubr.f32.gmra.mrb[0].mxu0 %v2042
    %v2148 = vpop.f32.mrb[0].mxu0
    %v2149 = vadd.f32 0.0, %v2148
    %v2150 = vpop.f32.mrb[0].mxu0
    %2151 = vmatprep.mubr.f32.mxu0 0.0
    %2152 = vmatmul.mubr.f32.gmra.mrb[0].mxu0 %v2045
    %v2153 = vpop.f32.mrb[0].mxu0
    %v2154 = vadd.f32 0.0, %v2153
    %v2155 = vpop.f32.mrb[0].mxu0
    %2156 = vdwg.mxu0
    %2157 = vmatprep.subr.mxu0 0.0
    %2158 = vmatpush1.msra.mxu0 %v1072
    %2159 = vmatprep.subr.mxu0 0.0
    %2160 = vmatpush1.msra.mxu0 %v1073
    %2161 = vmatprep.subr.mxu0 0.0
    %2162 = vmatpush1.msra.mxu0 %v1074
    %2163 = vmatprep.subr.mxu0 0.0
    %2164 = vmatpush1.msra.mxu0 %v1075
    %2165 = vmatprep.subr.mxu0 0.0
    %2166 = vmatpush1.msra.mxu0 %v1076
    %2167 = vmatprep.subr.mxu0 0.0
    %2168 = vmatpush1.msra.mxu0 %v1077
    %2169 = vmatprep.subr.mxu0 0.0
    %2170 = vmatpush1.msra.mxu0 %v1078
    %2171 = vmatprep.subr.mxu0 0.0
    %2172 = vmatpush1.msra.mxu0 %v1079
    %2173 = vmatprep.subr.mxu0 0.0
    %2174 = vmatpush1.msra.mxu0 %v1080
    %2175 = vmatprep.subr.mxu0 0.0
    %2176 = vmatpush1.msra.mxu0 %v1081
    %2177 = vmatprep.subr.mxu0 0.0
    %2178 = vmatpush1.msra.mxu0 %v1082
    %2179 = vmatprep.subr.mxu0 0.0
    %2180 = vmatpush1.msra.mxu0 %v1083
    %2181 = vmatprep.subr.mxu0 0.0
    %2182 = vmatpush1.msra.mxu0 %v1084
    %2183 = vmatprep.subr.mxu0 0.0
    %2184 = vmatpush1.msra.mxu0 %v1085
    %2185 = vmatprep.subr.mxu0 0.0
    %2186 = vmatpush1.msra.mxu0 %v1086
    %2187 = vmatprep.subr.mxu0 0.0
    %2188 = vmatpush1.msra.mxu0 %v1087
    %2189 = vmatprep.subr.mxu0 0.0
    %2190 = vmatpush1.msra.mxu0 0.0
    %2191 = vmatprep.subr.mxu0 0.0
    %2192 = vmatpush1.msra.mxu0 0.0
    %2193 = vmatprep.subr.mxu0 0.0
    %2194 = vmatpush1.msra.mxu0 0.0
    %2195 = vmatprep.subr.mxu0 0.0
    %2196 = vmatpush1.msra.mxu0 0.0
    %2197 = vmatprep.subr.mxu0 0.0
    %2198 = vmatpush1.msra.mxu0 0.0
    %2199 = vmatprep.subr.mxu0 0.0
    %2200 = vmatpush1.msra.mxu0 0.0
    %2201 = vmatprep.subr.mxu0 0.0
    %2202 = vmatpush1.msra.mxu0 0.0
    %2203 = vmatprep.subr.mxu0 0.0
    %2204 = vmatpush1.msra.mxu0 0.0
    %2205 = vmatprep.subr.mxu0 0.0
    %2206 = vmatpush1.msra.mxu0 0.0
    %2207 = vmatprep.subr.mxu0 0.0
    %2208 = vmatpush1.msra.mxu0 0.0
    %2209 = vmatprep.subr.mxu0 0.0
    %2210 = vmatpush1.msra.mxu0 0.0
    %2211 = vmatprep.subr.mxu0 0.0
    %2212 = vmatpush1.msra.mxu0 0.0
    %2213 = vmatprep.subr.mxu0 0.0
    %2214 = vmatpush1.msra.mxu0 0.0
    %2215 = vmatprep.subr.mxu0 0.0
    %2216 = vmatpush1.msra.mxu0 0.0
    %2217 = vmatprep.subr.mxu0 0.0
    %2218 = vmatpush1.msra.mxu0 0.0
    %2219 = vmatprep.subr.mxu0 0.0
    %2220 = vmatpush1.msra.mxu0 0.0
    %2221 = vmatprep.mubr.f32.mxu0 0.0
    %2222 = vmatmul.mubr.f32.gmra.mrb[0].mxu0 %v2119
    %v2223 = vpop.f32.mrb[0].mxu0
    %v2224 = vadd.f32 0.0, %v2223
    %v2225 = vpop.f32.mrb[0].mxu0
    %2226 = vdwg.mxu0
    %2227 = vmatprep.subr.mxu0 0.0
    %2228 = vmatpush1.msra.mxu0 %v1055
    %2229 = vmatprep.subr.mxu0 0.0
    %2230 = vmatpush1.msra.mxu0 %v1056
    %2231 = vmatprep.subr.mxu0 0.0
    %2232 = vmatpush1.msra.mxu0 %v1057
    %2233 = vmatprep.subr.mxu0 0.0
    %2234 = vmatpush1.msra.mxu0 %v1058
    %2235 = vmatprep.subr.mxu0 0.0
    %2236 = vmatpush1.msra.mxu0 %v1059
    %2237 = vmatprep.subr.mxu0 0.0
    %2238 = vmatpush1.msra.mxu0 %v1060
    %2239 = vmatprep.subr.mxu0 0.0
    %2240 = vmatpush1.msra.mxu0 %v1061
    %2241 = vmatprep.subr.mxu0 0.0
    %2242 = vmatpush1.msra.mxu0 %v1062
    %2243 = vmatprep.subr.mxu0 0.0
    %2244 = vmatpush1.msra.mxu0 %v1063
    %2245 = vmatprep.subr.mxu0 0.0
    %2246 = vmatpush1.msra.mxu0 %v1064
    %2247 = vmatprep.subr.mxu0 0.0
    %2248 = vmatpush1.msra.mxu0 %v1065
    %2249 = vmatprep.subr.mxu0 0.0
    %2250 = vmatpush1.msra.mxu0 %v1066
    %2251 = vmatprep.subr.mxu0 0.0
    %2252 = vmatpush1.msra.mxu0 %v1067
    %2253 = vmatprep.subr.mxu0 0.0
    %2254 = vmatpush1.msra.mxu0 %v1068
    %2255 = vmatprep.subr.mxu0 0.0
    %2256 = vmatpush1.msra.mxu0 %v1069
    %2257 = vmatprep.subr.mxu0 0.0
    %2258 = vmatpush1.msra.mxu0 %v1070
    %2259 = vmatprep.subr.mxu0 0.0
    %2260 = vmatpush1.msra.mxu0 0.0
    %2261 = vmatprep.subr.mxu0 0.0
    %2262 = vmatpush1.msra.mxu0 0.0
    %2263 = vmatprep.subr.mxu0 0.0
    %2264 = vmatpush1.msra.mxu0 0.0
    %2265 = vmatprep.subr.mxu0 0.0
    %2266 = vmatpush1.msra.mxu0 0.0
    %2267 = vmatprep.subr.mxu0 0.0
    %2268 = vmatpush1.msra.mxu0 0.0
    %2269 = vmatprep.subr.mxu0 0.0
    %2270 = vmatpush1.msra.mxu0 0.0
    %2271 = vmatprep.subr.mxu0 0.0
    %2272 = vmatpush1.msra.mxu0 0.0
    %2273 = vmatprep.subr.mxu0 0.0
    %2274 = vmatpush1.msra.mxu0 0.0
    %2275 = vmatprep.subr.mxu0 0.0
    %2276 = vmatpush1.msra.mxu0 0.0
    %2277 = vmatprep.subr.mxu0 0.0
    %2278 = vmatpush1.msra.mxu0 0.0
    %2279 = vmatprep.subr.mxu0 0.0
    %2280 = vmatpush1.msra.mxu0 0.0
    %2281 = vmatprep.subr.mxu0 0.0
    %2282 = vmatpush1.msra.mxu0 0.0
    %2283 = vmatprep.subr.mxu0 0.0
    %2284 = vmatpush1.msra.mxu0 0.0
    %2285 = vmatprep.subr.mxu0 0.0
    %2286 = vmatpush1.msra.mxu0 0.0
    %2287 = vmatprep.subr.mxu0 0.0
    %2288 = vmatpush1.msra.mxu0 0.0
    %2289 = vmatprep.subr.mxu0 0.0
    %2290 = vmatpush1.msra.mxu0 0.0
    %2291 = vmatprep.mubr.f32.mxu0 0.0
    %2292 = vmatmul.mubr.f32.gmra.mrb[0].mxu0 %v2114
    %v2293 = vpop.f32.mrb[0].mxu0
    %v2294 = vadd.f32 %v2224, %v2293
    %v2295 = vpop.f32.mrb[0].mxu0
    %2296 = vdwg.mxu0
    %2297 = vmatprep.subr.mxu0 0.0
    %2298 = vmatpush1.msra.mxu0 %v1229
    %2299 = vmatprep.subr.mxu0 0.0
    %2300 = vmatpush1.msra.mxu0 %v1230
    %2301 = vmatprep.subr.mxu0 0.0
    %2302 = vmatpush1.msra.mxu0 %v1231
    %2303 = vmatprep.subr.mxu0 0.0
    %2304 = vmatpush1.msra.mxu0 %v1232
    %2305 = vmatprep.subr.mxu0 0.0
    %2306 = vmatpush1.msra.mxu0 %v1233
    %2307 = vmatprep.subr.mxu0 0.0
    %2308 = vmatpush1.msra.mxu0 %v1234
    %2309 = vmatprep.subr.mxu0 0.0
    %2310 = vmatpush1.msra.mxu0 %v1235
    %2311 = vmatprep.subr.mxu0 0.0
    %2312 = vmatpush1.msra.mxu0 %v1236
    %2313 = vmatprep.subr.mxu0 0.0
    %2314 = vmatpush1.msra.mxu0 %v1237
    %2315 = vmatprep.subr.mxu0 0.0
    %2316 = vmatpush1.msra.mxu0 %v1238
    %2317 = vmatprep.subr.mxu0 0.0
    %2318 = vmatpush1.msra.mxu0 %v1239
    %2319 = vmatprep.subr.mxu0 0.0
    %2320 = vmatpush1.msra.mxu0 %v1240
    %2321 = vmatprep.subr.mxu0 0.0
    %2322 = vmatpush1.msra.mxu0 %v1241
    %2323 = vmatprep.subr.mxu0 0.0
    %2324 = vmatpush1.msra.mxu0 %v1242
    %2325 = vmatprep.subr.mxu0 0.0
    %2326 = vmatpush1.msra.mxu0 %v1243
    %2327 = vmatprep.subr.mxu0 0.0
    %2328 = vmatpush1.msra.mxu0 %v1244
    %2329 = vmatprep.subr.mxu0 0.0
    %2330 = vmatpush1.msra.mxu0 0.0
    %2331 = vmatprep.subr.mxu0 0.0
    %2332 = vmatpush1.msra.mxu0 0.0
    %2333 = vmatprep.subr.mxu0 0.0
    %2334 = vmatpush1.msra.mxu0 0.0
    %2335 = vmatprep.subr.mxu0 0.0
    %2336 = vmatpush1.msra.mxu0 0.0
    %2337 = vmatprep.subr.mxu0 0.0
    %2338 = vmatpush1.msra.mxu0 0.0
    %2339 = vmatprep.subr.mxu0 0.0
    %2340 = vmatpush1.msra.mxu0 0.0
    %2341 = vmatprep.subr.mxu0 0.0
    %2342 = vmatpush1.msra.mxu0 0.0
    %2343 = vmatprep.subr.mxu0 0.0
    %2344 = vmatpush1.msra.mxu0 0.0
    %2345 = vmatprep.subr.mxu0 0.0
    %2346 = vmatpush1.msra.mxu0 0.0
    %2347 = vmatprep.subr.mxu0 0.0
    %2348 = vmatpush1.msra.mxu0 0.0
    %2349 = vmatprep.subr.mxu0 0.0
    %2350 = vmatpush1.msra.mxu0 0.0
    %2351 = vmatprep.subr.mxu0 0.0
    %2352 = vmatpush1.msra.mxu0 0.0
    %2353 = vmatprep.subr.mxu0 0.0
    %2354 = vmatpush1.msra.mxu0 0.0
    %2355 = vmatprep.subr.mxu0 0.0
    %2356 = vmatpush1.msra.mxu0 0.0
    %2357 = vmatprep.subr.mxu0 0.0
    %2358 = vmatpush1.msra.mxu0 0.0
    %2359 = vmatprep.subr.mxu0 0.0
    %2360 = vmatpush1.msra.mxu0 0.0
    %2361 = vmatprep.mubr.f32.mxu0 0.0
    %2362 = vmatmul.mubr.f32.gmra.mrb[0].mxu0 %v2124
    %v2363 = vpop.f32.mrb[0].mxu0
    %v2364 = vadd.f32 0.0, %v2363
    %v2365 = vpop.f32.mrb[0].mxu0
    %2366 = vdwg.mxu0
    %v2367 = vadd.f32 %v2294, %v2364
    %2368 = vmatprep.subr.mxu0 0.0
    %2369 = vmatpush1.msra.mxu0 %v1317
    %2370 = vmatprep.subr.mxu0 0.0
    %2371 = vmatpush1.msra.mxu0 %v1318
    %2372 = vmatprep.subr.mxu0 0.0
    %2373 = vmatpush1.msra.mxu0 %v1319
    %2374 = vmatprep.subr.mxu0 0.0
    %2375 = vmatpush1.msra.mxu0 %v1320
    %2376 = vmatprep.subr.mxu0 0.0
    %2377 = vmatpush1.msra.mxu0 %v1321
    %2378 = vmatprep.subr.mxu0 0.0
    %2379 = vmatpush1.msra.mxu0 %v1322
    %2380 = vmatprep.subr.mxu0 0.0
    %2381 = vmatpush1.msra.mxu0 %v1323
    %2382 = vmatprep.subr.mxu0 0.0
    %2383 = vmatpush1.msra.mxu0 %v1324
    %2384 = vmatprep.subr.mxu0 0.0
    %2385 = vmatpush1.msra.mxu0 %v1325
    %2386 = vmatprep.subr.mxu0 0.0
    %2387 = vmatpush1.msra.mxu0 %v1326
    %2388 = vmatprep.subr.mxu0 0.0
    %2389 = vmatpush1.msra.mxu0 %v1327
    %2390 = vmatprep.subr.mxu0 0.0
    %2391 = vmatpush1.msra.mxu0 %v1328
    %2392 = vmatprep.subr.mxu0 0.0
    %2393 = vmatpush1.msra.mxu0 %v1329
    %2394 = vmatprep.subr.mxu0 0.0
    %2395 = vmatpush1.msra.mxu0 %v1330
    %2396 = vmatprep.subr.mxu0 0.0
    %2397 = vmatpush1.msra.mxu0 %v1331
    %2398 = vmatprep.subr.mxu0 0.0
    %2399 = vmatpush1.msra.mxu0 %v1332
    %2400 = vmatprep.subr.mxu0 0.0
    %2401 = vmatpush1.msra.mxu0 0.0
    %2402 = vmatprep.subr.mxu0 0.0
    %2403 = vmatpush1.msra.mxu0 0.0
    %2404 = vmatprep.subr.mxu0 0.0
    %2405 = vmatpush1.msra.mxu0 0.0
    %2406 = vmatprep.subr.mxu0 0.0
    %2407 = vmatpush1.msra.mxu0 0.0
    %2408 = vmatprep.subr.mxu0 0.0
    %2409 = vmatpush1.msra.mxu0 0.0
    %2410 = vmatprep.subr.mxu0 0.0
    %2411 = vmatpush1.msra.mxu0 0.0
    %2412 = vmatprep.subr.mxu0 0.0
    %2413 = vmatpush1.msra.mxu0 0.0
    %2414 = vmatprep.subr.mxu0 0.0
    %2415 = vmatpush1.msra.mxu0 0.0
    %2416 = vmatprep.subr.mxu0 0.0
    %2417 = vmatpush1.msra.mxu0 0.0
    %2418 = vmatprep.subr.mxu0 0.0
    %2419 = vmatpush1.msra.mxu0 0.0
    %2420 = vmatprep.subr.mxu0 0.0
    %2421 = vmatpush1.msra.mxu0 0.0
    %2422 = vmatprep.subr.mxu0 0.0
    %2423 = vmatpush1.msra.mxu0 0.0
    %2424 = vmatprep.subr.mxu0 0.0
    %2425 = vmatpush1.msra.mxu0 0.0
    %2426 = vmatprep.subr.mxu0 0.0
    %2427 = vmatpush1.msra.mxu0 0.0
    %2428 = vmatprep.subr.mxu0 0.0
    %2429 = vmatpush1.msra.mxu0 0.0
    %2430 = vmatprep.subr.mxu0 0.0
    %2431 = vmatpush1.msra.mxu0 0.0
    %2432 = vmatprep.mubr.f32.mxu0 0.0
    %2433 = vmatmul.mubr.f32.gmra.mrb[0].mxu0 %v2129
    %v2434 = vpop.f32.mrb[0].mxu0
    %v2435 = vadd.f32 0.0, %v2434
    %v2436 = vpop.f32.mrb[0].mxu0
    %2437 = vdwg.mxu0
    %v2438 = vadd.f32 %v2367, %v2435
    %2439 = vmatprep.subr.mxu0 0.0
    %2440 = vmatpush1.msra.mxu0 %v1405
    %2441 = vmatprep.subr.mxu0 0.0
    %2442 = vmatpush1.msra.mxu0 %v1406
    %2443 = vmatprep.subr.mxu0 0.0
    %2444 = vmatpush1.msra.mxu0 %v1407
    %2445 = vmatprep.subr.mxu0 0.0
    %2446 = vmatpush1.msra.mxu0 %v1408
    %2447 = vmatprep.subr.mxu0 0.0
    %2448 = vmatpush1.msra.mxu0 %v1409
    %2449 = vmatprep.subr.mxu0 0.0
    %2450 = vmatpush1.msra.mxu0 %v1410
    %2451 = vmatprep.subr.mxu0 0.0
    %2452 = vmatpush1.msra.mxu0 %v1411
    %2453 = vmatprep.subr.mxu0 0.0
    %2454 = vmatpush1.msra.mxu0 %v1412
    %2455 = vmatprep.subr.mxu0 0.0
    %2456 = vmatpush1.msra.mxu0 %v1413
    %2457 = vmatprep.subr.mxu0 0.0
    %2458 = vmatpush1.msra.mxu0 %v1414
    %2459 = vmatprep.subr.mxu0 0.0
    %2460 = vmatpush1.msra.mxu0 %v1415
    %2461 = vmatprep.subr.mxu0 0.0
    %2462 = vmatpush1.msra.mxu0 %v1416
    %2463 = vmatprep.subr.mxu0 0.0
    %2464 = vmatpush1.msra.mxu0 %v1417
    %2465 = vmatprep.subr.mxu0 0.0
    %2466 = vmatpush1.msra.mxu0 %v1418
    %2467 = vmatprep.subr.mxu0 0.0
    %2468 = vmatpush1.msra.mxu0 %v1419
    %2469 = vmatprep.subr.mxu0 0.0
    %2470 = vmatpush1.msra.mxu0 %v1420
    %2471 = vmatprep.subr.mxu0 0.0
    %2472 = vmatpush1.msra.mxu0 0.0
    %2473 = vmatprep.subr.mxu0 0.0
    %2474 = vmatpush1.msra.mxu0 0.0
    %2475 = vmatprep.subr.mxu0 0.0
    %2476 = vmatpush1.msra.mxu0 0.0
    %2477 = vmatprep.subr.mxu0 0.0
    %2478 = vmatpush1.msra.mxu0 0.0
    %2479 = vmatprep.subr.mxu0 0.0
    %2480 = vmatpush1.msra.mxu0 0.0
    %2481 = vmatprep.subr.mxu0 0.0
    %2482 = vmatpush1.msra.mxu0 0.0
    %2483 = vmatprep.subr.mxu0 0.0
    %2484 = vmatpush1.msra.mxu0 0.0
    %2485 = vmatprep.subr.mxu0 0.0
    %2486 = vmatpush1.msra.mxu0 0.0
    %2487 = vmatprep.subr.mxu0 0.0
    %2488 = vmatpush1.msra.mxu0 0.0
    %2489 = vmatprep.subr.mxu0 0.0
    %2490 = vmatpush1.msra.mxu0 0.0
    %2491 = vmatprep.subr.mxu0 0.0
    %2492 = vmatpush1.msra.mxu0 0.0
    %2493 = vmatprep.subr.mxu0 0.0
    %2494 = vmatpush1.msra.mxu0 0.0
    %2495 = vmatprep.subr.mxu0 0.0
    %2496 = vmatpush1.msra.mxu0 0.0
    %2497 = vmatprep.subr.mxu0 0.0
    %2498 = vmatpush1.msra.mxu0 0.0
    %2499 = vmatprep.subr.mxu0 0.0
    %2500 = vmatpush1.msra.mxu0 0.0
    %2501 = vmatprep.subr.mxu0 0.0
    %2502 = vmatpush1.msra.mxu0 0.0
    %2503 = vmatprep.mubr.f32.mxu0 0.0
    %2504 = vmatmul.mubr.f32.gmra.mrb[0].mxu0 %v2134
    %v2505 = vpop.f32.mrb[0].mxu0
    %v2506 = vadd.f32 0.0, %v2505
    %v2507 = vpop.f32.mrb[0].mxu0
    %2508 = vdwg.mxu0
    %v2509 = vadd.f32 %v2438, %v2506
    %2510 = vmatprep.subr.mxu0 0.0
    %2511 = vmatpush1.msra.mxu0 %v1493
    %2512 = vmatprep.subr.mxu0 0.0
    %2513 = vmatpush1.msra.mxu0 %v1494
    %2514 = vmatprep.subr.mxu0 0.0
    %2515 = vmatpush1.msra.mxu0 %v1495
    %2516 = vmatprep.subr.mxu0 0.0
    %2517 = vmatpush1.msra.mxu0 %v1496
    %2518 = vmatprep.subr.mxu0 0.0
    %2519 = vmatpush1.msra.mxu0 %v1497
    %2520 = vmatprep.subr.mxu0 0.0
    %2521 = vmatpush1.msra.mxu0 %v1498
    %2522 = vmatprep.subr.mxu0 0.0
    %2523 = vmatpush1.msra.mxu0 %v1499
    %2524 = vmatprep.subr.mxu0 0.0
    %2525 = vmatpush1.msra.mxu0 %v1500
    %2526 = vmatprep.subr.mxu0 0.0
    %2527 = vmatpush1.msra.mxu0 %v1501
    %2528 = vmatprep.subr.mxu0 0.0
    %2529 = vmatpush1.msra.mxu0 %v1502
    %2530 = vmatprep.subr.mxu0 0.0
    %2531 = vmatpush1.msra.mxu0 %v1503
    %2532 = vmatprep.subr.mxu0 0.0
    %2533 = vmatpush1.msra.mxu0 %v1504
    %2534 = vmatprep.subr.mxu0 0.0
    %2535 = vmatpush1.msra.mxu0 %v1505
    %2536 = vmatprep.subr.mxu0 0.0
    %2537 = vmatpush1.msra.mxu0 %v1506
    %2538 = vmatprep.subr.mxu0 0.0
    %2539 = vmatpush1.msra.mxu0 %v1507
    %2540 = vmatprep.subr.mxu0 0.0
    %2541 = vmatpush1.msra.mxu0 %v1508
    %2542 = vmatprep.subr.mxu0 0.0
    %2543 = vmatpush1.msra.mxu0 0.0
    %2544 = vmatprep.subr.mxu0 0.0
    %2545 = vmatpush1.msra.mxu0 0.0
    %2546 = vmatprep.subr.mxu0 0.0
    %2547 = vmatpush1.msra.mxu0 0.0
    %2548 = vmatprep.subr.mxu0 0.0
    %2549 = vmatpush1.msra.mxu0 0.0
    %2550 = vmatprep.subr.mxu0 0.0
    %2551 = vmatpush1.msra.mxu0 0.0
    %2552 = vmatprep.subr.mxu0 0.0
    %2553 = vmatpush1.msra.mxu0 0.0
    %2554 = vmatprep.subr.mxu0 0.0
    %2555 = vmatpush1.msra.mxu0 0.0
    %2556 = vmatprep.subr.mxu0 0.0
    %2557 = vmatpush1.msra.mxu0 0.0
    %2558 = vmatprep.subr.mxu0 0.0
    %2559 = vmatpush1.msra.mxu0 0.0
    %2560 = vmatprep.subr.mxu0 0.0
    %2561 = vmatpush1.msra.mxu0 0.0
    %2562 = vmatprep.subr.mxu0 0.0
    %2563 = vmatpush1.msra.mxu0 0.0
    %2564 = vmatprep.subr.mxu0 0.0
    %2565 = vmatpush1.msra.mxu0 0.0
    %2566 = vmatprep.subr.mxu0 0.0
    %2567 = vmatpush1.msra.mxu0 0.0
    %2568 = vmatprep.subr.mxu0 0.0
    %2569 = vmatpush1.msra.mxu0 0.0
    %2570 = vmatprep.subr.mxu0 0.0
    %2571 = vmatpush1.msra.mxu0 0.0
    %2572 = vmatprep.subr.mxu0 0.0
    %2573 = vmatpush1.msra.mxu0 0.0
    %2574 = vmatprep.mubr.f32.mxu0 0.0
    %2575 = vmatmul.mubr.f32.gmra.mrb[0].mxu0 %v2139
    %v2576 = vpop.f32.mrb[0].mxu0
    %v2577 = vadd.f32 0.0, %v2576
    %v2578 = vpop.f32.mrb[0].mxu0
    %2579 = vdwg.mxu0
    %v2580 = vadd.f32 %v2509, %v2577
    %2581 = vmatprep.subr.mxu0 0.0
    %2582 = vmatpush1.msra.mxu0 %v1581
    %2583 = vmatprep.subr.mxu0 0.0
    %2584 = vmatpush1.msra.mxu0 %v1582
    %2585 = vmatprep.subr.mxu0 0.0
    %2586 = vmatpush1.msra.mxu0 %v1583
    %2587 = vmatprep.subr.mxu0 0.0
    %2588 = vmatpush1.msra.mxu0 %v1584
    %2589 = vmatprep.subr.mxu0 0.0
    %2590 = vmatpush1.msra.mxu0 %v1585
    %2591 = vmatprep.subr.mxu0 0.0
    %2592 = vmatpush1.msra.mxu0 %v1586
    %2593 = vmatprep.subr.mxu0 0.0
    %2594 = vmatpush1.msra.mxu0 %v1587
    %2595 = vmatprep.subr.mxu0 0.0
    %2596 = vmatpush1.msra.mxu0 %v1588
    %2597 = vmatprep.subr.mxu0 0.0
    %2598 = vmatpush1.msra.mxu0 %v1589
    %2599 = vmatprep.subr.mxu0 0.0
    %2600 = vmatpush1.msra.mxu0 %v1590
    %2601 = vmatprep.subr.mxu0 0.0
    %2602 = vmatpush1.msra.mxu0 %v1591
    %2603 = vmatprep.subr.mxu0 0.0
    %2604 = vmatpush1.msra.mxu0 %v1592
    %2605 = vmatprep.subr.mxu0 0.0
    %2606 = vmatpush1.msra.mxu0 %v1593
    %2607 = vmatprep.subr.mxu0 0.0
    %2608 = vmatpush1.msra.mxu0 %v1594
    %2609 = vmatprep.subr.mxu0 0.0
    %2610 = vmatpush1.msra.mxu0 %v1595
    %2611 = vmatprep.subr.mxu0 0.0
    %2612 = vmatpush1.msra.mxu0 %v1596
    %2613 = vmatprep.subr.mxu0 0.0
    %2614 = vmatpush1.msra.mxu0 0.0
    %2615 = vmatprep.subr.mxu0 0.0
    %2616 = vmatpush1.msra.mxu0 0.0
    %2617 = vmatprep.subr.mxu0 0.0
    %2618 = vmatpush1.msra.mxu0 0.0
    %2619 = vmatprep.subr.mxu0 0.0
    %2620 = vmatpush1.msra.mxu0 0.0
    %2621 = vmatprep.subr.mxu0 0.0
    %2622 = vmatpush1.msra.mxu0 0.0
    %2623 = vmatprep.subr.mxu0 0.0
    %2624 = vmatpush1.msra.mxu0 0.0
    %2625 = vmatprep.subr.mxu0 0.0
    %2626 = vmatpush1.msra.mxu0 0.0
    %2627 = vmatprep.subr.mxu0 0.0
    %2628 = vmatpush1.msra.mxu0 0.0
    %2629 = vmatprep.subr.mxu0 0.0
    %2630 = vmatpush1.msra.mxu0 0.0
    %2631 = vmatprep.subr.mxu0 0.0
    %2632 = vmatpush1.msra.mxu0 0.0
    %2633 = vmatprep.subr.mxu0 0.0
    %2634 = vmatpush1.msra.mxu0 0.0
    %2635 = vmatprep.subr.mxu0 0.0
    %2636 = vmatpush1.msra.mxu0 0.0
    %2637 = vmatprep.subr.mxu0 0.0
    %2638 = vmatpush1.msra.mxu0 0.0
    %2639 = vmatprep.subr.mxu0 0.0
    %2640 = vmatpush1.msra.mxu0 0.0
    %2641 = vmatprep.subr.mxu0 0.0
    %2642 = vmatpush1.msra.mxu0 0.0
    %2643 = vmatprep.subr.mxu0 0.0
    %2644 = vmatpush1.msra.mxu0 0.0
    %2645 = vmatprep.mubr.f32.mxu0 0.0
    %2646 = vmatmul.mubr.f32.gmra.mrb[0].mxu0 %v2144
    %v2647 = vpop.f32.mrb[0].mxu0
    %v2648 = vadd.f32 0.0, %v2647
    %v2649 = vpop.f32.mrb[0].mxu0
    %2650 = vdwg.mxu0
    %v2651 = vadd.f32 %v2580, %v2648
    %2652 = vmatprep.subr.mxu0 0.0
    %2653 = vmatpush1.msra.mxu0 %v1669
    %2654 = vmatprep.subr.mxu0 0.0
    %2655 = vmatpush1.msra.mxu0 %v1670
    %2656 = vmatprep.subr.mxu0 0.0
    %2657 = vmatpush1.msra.mxu0 %v1671
    %2658 = vmatprep.subr.mxu0 0.0
    %2659 = vmatpush1.msra.mxu0 %v1672
    %2660 = vmatprep.subr.mxu0 0.0
    %2661 = vmatpush1.msra.mxu0 %v1673
    %2662 = vmatprep.subr.mxu0 0.0
    %2663 = vmatpush1.msra.mxu0 %v1674
    %2664 = vmatprep.subr.mxu0 0.0
    %2665 = vmatpush1.msra.mxu0 %v1675
    %2666 = vmatprep.subr.mxu0 0.0
    %2667 = vmatpush1.msra.mxu0 %v1676
    %2668 = vmatprep.subr.mxu0 0.0
    %2669 = vmatpush1.msra.mxu0 %v1677
    %2670 = vmatprep.subr.mxu0 0.0
    %2671 = vmatpush1.msra.mxu0 %v1678
    %2672 = vmatprep.subr.mxu0 0.0
    %2673 = vmatpush1.msra.mxu0 %v1679
    %2674 = vmatprep.subr.mxu0 0.0
    %2675 = vmatpush1.msra.mxu0 %v1680
    %2676 = vmatprep.subr.mxu0 0.0
    %2677 = vmatpush1.msra.mxu0 %v1681
    %2678 = vmatprep.subr.mxu0 0.0
    %2679 = vmatpush1.msra.mxu0 %v1682
    %2680 = vmatprep.subr.mxu0 0.0
    %2681 = vmatpush1.msra.mxu0 %v1683
    %2682 = vmatprep.subr.mxu0 0.0
    %2683 = vmatpush1.msra.mxu0 %v1684
    %2684 = vmatprep.subr.mxu0 0.0
    %2685 = vmatpush1.msra.mxu0 0.0
    %2686 = vmatprep.subr.mxu0 0.0
    %2687 = vmatpush1.msra.mxu0 0.0
    %2688 = vmatprep.subr.mxu0 0.0
    %2689 = vmatpush1.msra.mxu0 0.0
    %2690 = vmatprep.subr.mxu0 0.0
    %2691 = vmatpush1.msra.mxu0 0.0
    %2692 = vmatprep.subr.mxu0 0.0
    %2693 = vmatpush1.msra.mxu0 0.0
    %2694 = vmatprep.subr.mxu0 0.0
    %2695 = vmatpush1.msra.mxu0 0.0
    %2696 = vmatprep.subr.mxu0 0.0
    %2697 = vmatpush1.msra.mxu0 0.0
    %2698 = vmatprep.subr.mxu0 0.0
    %2699 = vmatpush1.msra.mxu0 0.0
    %2700 = vmatprep.subr.mxu0 0.0
    %2701 = vmatpush1.msra.mxu0 0.0
    %2702 = vmatprep.subr.mxu0 0.0
    %2703 = vmatpush1.msra.mxu0 0.0
    %2704 = vmatprep.subr.mxu0 0.0
    %2705 = vmatpush1.msra.mxu0 0.0
    %2706 = vmatprep.subr.mxu0 0.0
    %2707 = vmatpush1.msra.mxu0 0.0
    %2708 = vmatprep.subr.mxu0 0.0
    %2709 = vmatpush1.msra.mxu0 0.0
    %2710 = vmatprep.subr.mxu0 0.0
    %2711 = vmatpush1.msra.mxu0 0.0
    %2712 = vmatprep.subr.mxu0 0.0
    %2713 = vmatpush1.msra.mxu0 0.0
    %2714 = vmatprep.subr.mxu0 0.0
    %2715 = vmatpush1.msra.mxu0 0.0
    %2716 = vmatprep.mubr.f32.mxu0 0.0
    %2717 = vmatmul.mubr.f32.gmra.mrb[0].mxu0 %v2149
    %v2718 = vpop.f32.mrb[0].mxu0
    %v2719 = vadd.f32 0.0, %v2718
    %v2720 = vpop.f32.mrb[0].mxu0
    %2721 = vdwg.mxu0
    %v2722 = vadd.f32 %v2651, %v2719
    %2723 = vmatprep.subr.mxu0 0.0
    %2724 = vmatpush1.msra.mxu0 %v1757
    %2725 = vmatprep.subr.mxu0 0.0
    %2726 = vmatpush1.msra.mxu0 %v1758
    %2727 = vmatprep.subr.mxu0 0.0
    %2728 = vmatpush1.msra.mxu0 %v1759
    %2729 = vmatprep.subr.mxu0 0.0
    %2730 = vmatpush1.msra.mxu0 %v1760
    %2731 = vmatprep.subr.mxu0 0.0
    %2732 = vmatpush1.msra.mxu0 %v1761
    %2733 = vmatprep.subr.mxu0 0.0
    %2734 = vmatpush1.msra.mxu0 %v1762
    %2735 = vmatprep.subr.mxu0 0.0
    %2736 = vmatpush1.msra.mxu0 %v1763
    %2737 = vmatprep.subr.mxu0 0.0
    %2738 = vmatpush1.msra.mxu0 %v1764
    %2739 = vmatprep.subr.mxu0 0.0
    %2740 = vmatpush1.msra.mxu0 %v1765
    %2741 = vmatprep.subr.mxu0 0.0
    %2742 = vmatpush1.msra.mxu0 %v1766
    %2743 = vmatprep.subr.mxu0 0.0
    %2744 = vmatpush1.msra.mxu0 %v1767
    %2745 = vmatprep.subr.mxu0 0.0
    %2746 = vmatpush1.msra.mxu0 %v1768
    %2747 = vmatprep.subr.mxu0 0.0
    %2748 = vmatpush1.msra.mxu0 %v1769
    %2749 = vmatprep.subr.mxu0 0.0
    %2750 = vmatpush1.msra.mxu0 %v1770
    %2751 = vmatprep.subr.mxu0 0.0
    %2752 = vmatpush1.msra.mxu0 %v1771
    %2753 = vmatprep.subr.mxu0 0.0
    %2754 = vmatpush1.msra.mxu0 %v1772
    %2755 = vmatprep.subr.mxu0 0.0
    %2756 = vmatpush1.msra.mxu0 0.0
    %2757 = vmatprep.subr.mxu0 0.0
    %2758 = vmatpush1.msra.mxu0 0.0
    %2759 = vmatprep.subr.mxu0 0.0
    %2760 = vmatpush1.msra.mxu0 0.0
    %2761 = vmatprep.subr.mxu0 0.0
    %2762 = vmatpush1.msra.mxu0 0.0
    %2763 = vmatprep.subr.mxu0 0.0
    %2764 = vmatpush1.msra.mxu0 0.0
    %2765 = vmatprep.subr.mxu0 0.0
    %2766 = vmatpush1.msra.mxu0 0.0
    %2767 = vmatprep.subr.mxu0 0.0
    %2768 = vmatpush1.msra.mxu0 0.0
    %2769 = vmatprep.subr.mxu0 0.0
    %2770 = vmatpush1.msra.mxu0 0.0
    %2771 = vmatprep.subr.mxu0 0.0
    %2772 = vmatpush1.msra.mxu0 0.0
    %2773 = vmatprep.subr.mxu0 0.0
    %2774 = vmatpush1.msra.mxu0 0.0
    %2775 = vmatprep.subr.mxu0 0.0
    %2776 = vmatpush1.msra.mxu0 0.0
    %2777 = vmatprep.subr.mxu0 0.0
    %2778 = vmatpush1.msra.mxu0 0.0
    %2779 = vmatprep.subr.mxu0 0.0
    %2780 = vmatpush1.msra.mxu0 0.0
    %2781 = vmatprep.subr.mxu0 0.0
    %2782 = vmatpush1.msra.mxu0 0.0
    %2783 = vmatprep.subr.mxu0 0.0
    %2784 = vmatpush1.msra.mxu0 0.0
    %2785 = vmatprep.subr.mxu0 0.0
    %2786 = vmatpush1.msra.mxu0 0.0
    %2787 = vmatprep.mubr.f32.mxu0 0.0
    %2788 = vmatmul.mubr.f32.gmra.mrb[0].mxu0 %v2154
    %v2789 = vpop.f32.mrb[0].mxu0
    %v2790 = vadd.f32 0.0, %v2789
    %v2791 = vpop.f32.mrb[0].mxu0
    %2792 = vdwg.mxu0
    %v2793 = vadd.f32 %v2722, %v2790
    %2794 = vmatprep.subr.mxu0 0.0
    %2795 = vmatpush1.msra.mxu0 %v1844
    %2796 = vmatprep.subr.mxu0 0.0
    %2797 = vmatpush1.msra.mxu0 %v1845
    %2798 = vmatprep.subr.mxu0 0.0
    %2799 = vmatpush1.msra.mxu0 %v1846
    %2800 = vmatprep.subr.mxu0 0.0
    %2801 = vmatpush1.msra.mxu0 %v1847
    %2802 = vmatprep.subr.mxu0 0.0
    %2803 = vmatpush1.msra.mxu0 %v1848
    %2804 = vmatprep.subr.mxu0 0.0
    %2805 = vmatpush1.msra.mxu0 %v1849
    %2806 = vmatprep.subr.mxu0 0.0
    %2807 = vmatpush1.msra.mxu0 %v1850
    %2808 = vmatprep.subr.mxu0 0.0
    %2809 = vmatpush1.msra.mxu0 %v1851
    %2810 = vmatprep.subr.mxu0 0.0
    %2811 = vmatpush1.msra.mxu0 %v1852
    %2812 = vmatprep.subr.mxu0 0.0
    %2813 = vmatpush1.msra.mxu0 %v1853
    %2814 = vmatprep.subr.mxu0 0.0
    %2815 = vmatpush1.msra.mxu0 %v1854
    %2816 = vmatprep.subr.mxu0 0.0
    %2817 = vmatpush1.msra.mxu0 %v1855
    %2818 = vmatprep.subr.mxu0 0.0
    %2819 = vmatpush1.msra.mxu0 %v1856
    %2820 = vmatprep.subr.mxu0 0.0
    %2821 = vmatpush1.msra.mxu0 %v1857
    %2822 = vmatprep.subr.mxu0 0.0
    %2823 = vmatpush1.msra.mxu0 %v1858
    %2824 = vmatprep.subr.mxu0 0.0
    %2825 = vmatpush1.msra.mxu0 %v1859
    %2826 = vmatprep.subr.mxu0 0.0
    %2827 = vmatpush1.msra.mxu0 0.0
    %2828 = vmatprep.subr.mxu0 0.0
    %2829 = vmatpush1.msra.mxu0 0.0
    %2830 = vmatprep.subr.mxu0 0.0
    %2831 = vmatpush1.msra.mxu0 0.0
    %2832 = vmatprep.subr.mxu0 0.0
    %2833 = vmatpush1.msra.mxu0 0.0
    %2834 = vmatprep.subr.mxu0 0.0
    %2835 = vmatpush1.msra.mxu0 0.0
    %2836 = vmatprep.subr.mxu0 0.0
    %2837 = vmatpush1.msra.mxu0 0.0
    %2838 = vmatprep.subr.mxu0 0.0
    %2839 = vmatpush1.msra.mxu0 0.0
    %2840 = vmatprep.subr.mxu0 0.0
    %2841 = vmatpush1.msra.mxu0 0.0
    %2842 = vmatprep.subr.mxu0 0.0
    %2843 = vmatpush1.msra.mxu0 0.0
    %2844 = vmatprep.subr.mxu0 0.0
    %2845 = vmatpush1.msra.mxu0 0.0
    %2846 = vmatprep.subr.mxu0 0.0
    %2847 = vmatpush1.msra.mxu0 0.0
    %2848 = vmatprep.subr.mxu0 0.0
    %2849 = vmatpush1.msra.mxu0 0.0
    %2850 = vmatprep.subr.mxu0 0.0
    %2851 = vmatpush1.msra.mxu0 0.0
    %2852 = vmatprep.subr.mxu0 0.0
    %2853 = vmatpush1.msra.mxu0 0.0
    %2854 = vmatprep.subr.mxu0 0.0
    %2855 = vmatpush1.msra.mxu0 0.0
    %2856 = vmatprep.subr.mxu0 0.0
    %2857 = vmatpush1.msra.mxu0 0.0
    %2858 = vmatprep.mubr.f32.mxu0 0.0
    %2859 = vmatmul.mubr.f32.gmra.mrb[0].mxu0 %v2793
    %v2860 = vpop.f32.mrb[0].mxu0
    %v2861 = vadd.f32 0.0, %v2860
    %v2862 = vpop.f32.mrb[0].mxu0
    %2863 = vdwg.mxu0
    %v2864 = vmul.f32 %v2793, %v2793
    %2865 = vmatprep.subr.mxu0 0.0
    %2866 = vmatpush1.msra.mxu0 %v1844
    %2867 = vmatprep.subr.mxu0 0.0
    %2868 = vmatpush1.msra.mxu0 %v1845
    %2869 = vmatprep.subr.mxu0 0.0
    %2870 = vmatpush1.msra.mxu0 %v1846
    %2871 = vmatprep.subr.mxu0 0.0
    %2872 = vmatpush1.msra.mxu0 %v1847
    %2873 = vmatprep.subr.mxu0 0.0
    %2874 = vmatpush1.msra.mxu0 %v1848
    %2875 = vmatprep.subr.mxu0 0.0
    %2876 = vmatpush1.msra.mxu0 %v1849
    %2877 = vmatprep.subr.mxu0 0.0
    %2878 = vmatpush1.msra.mxu0 %v1850
    %2879 = vmatprep.subr.mxu0 0.0
    %2880 = vmatpush1.msra.mxu0 %v1851
    %2881 = vmatprep.subr.mxu0 0.0
    %2882 = vmatpush1.msra.mxu0 %v1852
    %2883 = vmatprep.subr.mxu0 0.0
    %2884 = vmatpush1.msra.mxu0 %v1853
    %2885 = vmatprep.subr.mxu0 0.0
    %2886 = vmatpush1.msra.mxu0 %v1854
    %2887 = vmatprep.subr.mxu0 0.0
    %2888 = vmatpush1.msra.mxu0 %v1855
    %2889 = vmatprep.subr.mxu0 0.0
    %2890 = vmatpush1.msra.mxu0 %v1856
    %2891 = vmatprep.subr.mxu0 0.0
    %2892 = vmatpush1.msra.mxu0 %v1857
    %2893 = vmatprep.subr.mxu0 0.0
    %2894 = vmatpush1.msra.mxu0 %v1858
    %2895 = vmatprep.subr.mxu0 0.0
    %2896 = vmatpush1.msra.mxu0 %v1859
    %2897 = vmatprep.subr.mxu0 0.0
    %2898 = vmatpush1.msra.mxu0 0.0
    %2899 = vmatprep.subr.mxu0 0.0
    %2900 = vmatpush1.msra.mxu0 0.0
    %2901 = vmatprep.subr.mxu0 0.0
    %2902 = vmatpush1.msra.mxu0 0.0
    %2903 = vmatprep.subr.mxu0 0.0
    %2904 = vmatpush1.msra.mxu0 0.0
    %2905 = vmatprep.subr.mxu0 0.0
    %2906 = vmatpush1.msra.mxu0 0.0
    %2907 = vmatprep.subr.mxu0 0.0
    %2908 = vmatpush1.msra.mxu0 0.0
    %2909 = vmatprep.subr.mxu0 0.0
    %2910 = vmatpush1.msra.mxu0 0.0
    %2911 = vmatprep.subr.mxu0 0.0
    %2912 = vmatpush1.msra.mxu0 0.0
    %2913 = vmatprep.subr.mxu0 0.0
    %2914 = vmatpush1.msra.mxu0 0.0
    %2915 = vmatprep.subr.mxu0 0.0
    %2916 = vmatpush1.msra.mxu0 0.0
    %2917 = vmatprep.subr.mxu0 0.0
    %2918 = vmatpush1.msra.mxu0 0.0
    %2919 = vmatprep.subr.mxu0 0.0
    %2920 = vmatpush1.msra.mxu0 0.0
    %2921 = vmatprep.subr.mxu0 0.0
    %2922 = vmatpush1.msra.mxu0 0.0
    %2923 = vmatprep.subr.mxu0 0.0
    %2924 = vmatpush1.msra.mxu0 0.0
    %2925 = vmatprep.subr.mxu0 0.0
    %2926 = vmatpush1.msra.mxu0 0.0
    %2927 = vmatprep.subr.mxu0 0.0
    %2928 = vmatpush1.msra.mxu0 0.0
    %2929 = vmatprep.mubr.f32.mxu0 0.0
    %2930 = vmatmul.mubr.f32.gmra.mrb[0].mxu0 %v2864
    %v2931 = vpop.f32.mrb[0].mxu0
    %v2932 = vadd.f32 0.0, %v2931
    %v2933 = vpop.f32.mrb[0].mxu0
    %2934 = vdwg.mxu0
    %v2935 = vsub.f32 %v2793, %v2861
    %v2936 = vmul.f32 %v2861, %v2861
    %v2937 = vsub.f32 %v2932, %v2936
    %v2938 = vadd.f32 %v2937, 1e-05
    %v2939 = vrsqrt.pop %v2938
    %v2940 = vmul.f32 %v2935, %v2939
    %vm2941 = vcmp.gt.f32.partialorder %v2940, 0.0
    %v2942 = vmul.f32 %v2940, 0.01
    %v2943 = vsel %vm2941, %v2940, %v2942
    %v2944 = vld [vmem:[%s6] sm:$0xff]
    %v2945 = vld [vmem:[%s6 + $0x8] sm:$0xff]
    %v2947 = vsel %vm2019, %v2944, 0
    %v2950 = vsel %vm2019, %v2945, 0
    %2952 = vmatprep.subr.mxu0 0.0
    %2953 = vmatpush1.msra.mxu0 %v2943
    %2954 = vmatprep.subr.mxu0 0.0
    %2955 = vmatpush1.msra.mxu0 0.0
    %2956 = vmatprep.subr.mxu0 0.0
    %2957 = vmatpush1.msra.mxu0 0.0
    %2958 = vmatprep.subr.mxu0 0.0
    %2959 = vmatpush1.msra.mxu0 0.0
    %2960 = vmatprep.subr.mxu0 0.0
    %2961 = vmatpush1.msra.mxu0 0.0
    %2962 = vmatprep.subr.mxu0 0.0
    %2963 = vmatpush1.msra.mxu0 0.0
    %2964 = vmatprep.subr.mxu0 0.0
    %2965 = vmatpush1.msra.mxu0 0.0
    %2966 = vmatprep.subr.mxu0 0.0
    %2967 = vmatpush1.msra.mxu0 0.0
    %2968 = vmatprep.subr.mxu0 0.0
    %2969 = vmatpush1.msra.mxu0 0.0
    %2970 = vmatprep.subr.mxu0 0.0
    %2971 = vmatpush1.msra.mxu0 0.0
    %2972 = vmatprep.subr.mxu0 0.0
    %2973 = vmatpush1.msra.mxu0 0.0
    %2974 = vmatprep.subr.mxu0 0.0
    %2975 = vmatpush1.msra.mxu0 0.0
    %2976 = vmatprep.subr.mxu0 0.0
    %2977 = vmatpush1.msra.mxu0 0.0
    %2978 = vmatprep.subr.mxu0 0.0
    %2979 = vmatpush1.msra.mxu0 0.0
    %2980 = vmatprep.subr.mxu0 0.0
    %2981 = vmatpush1.msra.mxu0 0.0
    %2982 = vmatprep.subr.mxu0 0.0
    %2983 = vmatpush1.msra.mxu0 0.0
    %2984 = vmatprep.subr.mxu0 0.0
    %2985 = vmatpush1.msra.mxu0 0.0
    %2986 = vmatprep.subr.mxu0 0.0
    %2987 = vmatpush1.msra.mxu0 0.0
    %2988 = vmatprep.subr.mxu0 0.0
    %2989 = vmatpush1.msra.mxu0 0.0
    %2990 = vmatprep.subr.mxu0 0.0
    %2991 = vmatpush1.msra.mxu0 0.0
    %2992 = vmatprep.subr.mxu0 0.0
    %2993 = vmatpush1.msra.mxu0 0.0
    %2994 = vmatprep.subr.mxu0 0.0
    %2995 = vmatpush1.msra.mxu0 0.0
    %2996 = vmatprep.subr.mxu0 0.0
    %2997 = vmatpush1.msra.mxu0 0.0
    %2998 = vmatprep.subr.mxu0 0.0
    %2999 = vmatpush1.msra.mxu0 0.0
    %3000 = vmatprep.subr.mxu0 0.0
    %3001 = vmatpush1.msra.mxu0 0.0
    %3002 = vmatprep.subr.mxu0 0.0
    %3003 = vmatpush1.msra.mxu0 0.0
    %3004 = vmatprep.subr.mxu0 0.0
    %3005 = vmatpush1.msra.mxu0 0.0
    %3006 = vmatprep.subr.mxu0 0.0
    %3007 = vmatpush1.msra.mxu0 0.0
    %3008 = vmatprep.subr.mxu0 0.0
    %3009 = vmatpush1.msra.mxu0 0.0
    %3010 = vmatprep.subr.mxu0 0.0
    %3011 = vmatpush1.msra.mxu0 0.0
    %3012 = vmatprep.subr.mxu0 0.0
    %3013 = vmatpush1.msra.mxu0 0.0
    %3014 = vmatprep.subr.mxu0 0.0
    %3015 = vmatpush1.msra.mxu0 0.0
    %3016 = vmatprep.mubr.f32.mxu0 0.0
    %3017 = vmatmul.mubr.f32.gmra.mrb[0].mxu0 %v2947
    %v3018 = vpop.f32.mrb[0].mxu0
    %v3019 = vadd.f32 0.0, %v3018
    %v3020 = vpop.f32.mrb[0].mxu0
    %3021 = vmatprep.mubr.f32.mxu0 0.0
    %3022 = vmatmul.mubr.f32.gmra.mrb[0].mxu0 %v2950
    %v3023 = vpop.f32.mrb[0].mxu0
    %v3024 = vadd.f32 0.0, %v3023
    %v3025 = vpop.f32.mrb[0].mxu0
    %3026 = vdwg.mxu0
    %v3027 = vld [vmem:[#allocation6] sm:$0xff]
    %v3028 = vld [vmem:[#allocation6 + $0x8] sm:$0xff]
    %v3029 = vld [vmem:[#allocation6 + $0x10] sm:$0xff]
    %v3030 = vld [vmem:[#allocation6 + $0x18] sm:$0xff]
    %v3031 = vld [vmem:[#allocation6 + $0x20] sm:$0xff]
    %v3032 = vld [vmem:[#allocation6 + $0x28] sm:$0xff]
    %v3033 = vld [vmem:[#allocation6 + $0x30] sm:$0xff]
    %v3034 = vld [vmem:[#allocation6 + $0x38] sm:$0xff]
    %v3035 = vld [vmem:[#allocation6 + $0x40] sm:$0xff]
    %v3036 = vld [vmem:[#allocation6 + $0x48] sm:$0xff]
    %v3037 = vld [vmem:[#allocation6 + $0x50] sm:$0xff]
    %v3038 = vld [vmem:[#allocation6 + $0x58] sm:$0xff]
    %v3039 = vld [vmem:[#allocation6 + $0x60] sm:$0xff]
    %v3040 = vld [vmem:[#allocation6 + $0x68] sm:$0xff]
    %v3041 = vld [vmem:[#allocation6 + $0x70] sm:$0xff]
    %v3042 = vld [vmem:[#allocation6 + $0x78] sm:$0xff]
    %v3043 = vld [vmem:[#allocation6 + $0x80] sm:$0xff]
    %v3044 = vld [vmem:[#allocation6 + $0x88] sm:$0xff]
    %v3045 = vld [vmem:[#allocation6 + $0x90] sm:$0xff]
    %v3046 = vld [vmem:[#allocation6 + $0x98] sm:$0xff]
    %v3047 = vld [vmem:[#allocation6 + $0xa0] sm:$0xff]
    %v3048 = vld [vmem:[#allocation6 + $0xa8] sm:$0xff]
    %v3049 = vld [vmem:[#allocation6 + $0xb0] sm:$0xff]
    %v3050 = vld [vmem:[#allocation6 + $0xb8] sm:$0xff]
    %v3051 = vld [vmem:[#allocation6 + $0xc0] sm:$0xff]
    %v3052 = vld [vmem:[#allocation6 + $0xc8] sm:$0xff]
    %v3053 = vld [vmem:[#allocation6 + $0xd0] sm:$0xff]
    %v3054 = vld [vmem:[#allocation6 + $0xd8] sm:$0xff]
    %v3055 = vld [vmem:[#allocation6 + $0xe0] sm:$0xff]
    %v3056 = vld [vmem:[#allocation6 + $0xe8] sm:$0xff]
    %v3057 = vld [vmem:[#allocation6 + $0xf0] sm:$0xff]
    %v3058 = vld [vmem:[#allocation6 + $0xf8] sm:$0xff]
    %v3059 = vld [vmem:[#allocation6 + $0x100] sm:$0xff]
    %v3060 = vld [vmem:[#allocation6 + $0x108] sm:$0xff]
    %v3061 = vld [vmem:[#allocation6 + $0x110] sm:$0xff]
    %v3062 = vld [vmem:[#allocation6 + $0x118] sm:$0xff]
    %v3063 = vld [vmem:[#allocation6 + $0x120] sm:$0xff]
    %v3064 = vld [vmem:[#allocation6 + $0x128] sm:$0xff]
    %v3065 = vld [vmem:[#allocation6 + $0x130] sm:$0xff]
    %v3066 = vld [vmem:[#allocation6 + $0x138] sm:$0xff]
    %v3067 = vld [vmem:[#allocation6 + $0x140] sm:$0xff]
    %v3068 = vld [vmem:[#allocation6 + $0x148] sm:$0xff]
    %v3069 = vld [vmem:[#allocation6 + $0x150] sm:$0xff]
    %v3070 = vld [vmem:[#allocation6 + $0x158] sm:$0xff]
    %v3071 = vld [vmem:[#allocation6 + $0x160] sm:$0xff]
    %v3072 = vld [vmem:[#allocation6 + $0x168] sm:$0xff]
    %v3073 = vld [vmem:[#allocation6 + $0x170] sm:$0xff]
    %v3074 = vld [vmem:[#allocation6 + $0x178] sm:$0xff]
    %v3075 = vld [vmem:[#allocation6 + $0x180] sm:$0xff]
    %v3076 = vld [vmem:[#allocation6 + $0x188] sm:$0xff]
    %v3077 = vld [vmem:[#allocation6 + $0x190] sm:$0xff]
    %v3078 = vld [vmem:[#allocation6 + $0x198] sm:$0xff]
    %v3079 = vld [vmem:[#allocation6 + $0x1a0] sm:$0xff]
    %v3080 = vld [vmem:[#allocation6 + $0x1a8] sm:$0xff]
    %v3081 = vld [vmem:[#allocation6 + $0x1b0] sm:$0xff]
    %v3082 = vld [vmem:[#allocation6 + $0x1b8] sm:$0xff]
    %v3083 = vld [vmem:[#allocation6 + $0x1c0] sm:$0xff]
    %v3084 = vld [vmem:[#allocation6 + $0x1c8] sm:$0xff]
    %v3085 = vld [vmem:[#allocation6 + $0x1d0] sm:$0xff]
    %v3086 = vld [vmem:[#allocation6 + $0x1d8] sm:$0xff]
    %v3087 = vld [vmem:[#allocation6 + $0x1e0] sm:$0xff]
    %v3088 = vld [vmem:[#allocation6 + $0x1e8] sm:$0xff]
    %v3089 = vld [vmem:[#allocation6 + $0x1f0] sm:$0xff]
    %v3090 = vld [vmem:[#allocation6 + $0x1f8] sm:$0xff]
    %s3091 = scalar_lea.vmem [#allocation6], 512
    %v3092 = vld [vmem:[%s3091] sm:$0xff]
    %v3093 = vld [vmem:[%s3091 + $0x8] sm:$0xff]
    %v3094 = vld [vmem:[%s3091 + $0x10] sm:$0xff]
    %v3095 = vld [vmem:[%s3091 + $0x18] sm:$0xff]
    %v3096 = vld [vmem:[%s3091 + $0x20] sm:$0xff]
    %v3097 = vld [vmem:[%s3091 + $0x28] sm:$0xff]
    %v3098 = vld [vmem:[%s3091 + $0x30] sm:$0xff]
    %v3099 = vld [vmem:[%s3091 + $0x38] sm:$0xff]
    %v3100 = vld [vmem:[%s3091 + $0x40] sm:$0xff]
    %v3101 = vld [vmem:[%s3091 + $0x48] sm:$0xff]
    %v3102 = vld [vmem:[%s3091 + $0x50] sm:$0xff]
    %v3103 = vld [vmem:[%s3091 + $0x58] sm:$0xff]
    %v3104 = vld [vmem:[%s3091 + $0x60] sm:$0xff]
    %v3105 = vld [vmem:[%s3091 + $0x68] sm:$0xff]
    %v3106 = vld [vmem:[%s3091 + $0x70] sm:$0xff]
    %v3107 = vld [vmem:[%s3091 + $0x78] sm:$0xff]
    %v3108 = vld [vmem:[%s3091 + $0x80] sm:$0xff]
    %v3109 = vld [vmem:[%s3091 + $0x88] sm:$0xff]
    %v3110 = vld [vmem:[%s3091 + $0x90] sm:$0xff]
    %v3111 = vld [vmem:[%s3091 + $0x98] sm:$0xff]
    %v3112 = vld [vmem:[%s3091 + $0xa0] sm:$0xff]
    %v3113 = vld [vmem:[%s3091 + $0xa8] sm:$0xff]
    %v3114 = vld [vmem:[%s3091 + $0xb0] sm:$0xff]
    %v3115 = vld [vmem:[%s3091 + $0xb8] sm:$0xff]
    %v3116 = vld [vmem:[%s3091 + $0xc0] sm:$0xff]
    %v3117 = vld [vmem:[%s3091 + $0xc8] sm:$0xff]
    %v3118 = vld [vmem:[%s3091 + $0xd0] sm:$0xff]
    %v3119 = vld [vmem:[%s3091 + $0xd8] sm:$0xff]
    %v3120 = vld [vmem:[%s3091 + $0xe0] sm:$0xff]
    %v3121 = vld [vmem:[%s3091 + $0xe8] sm:$0xff]
    %v3122 = vld [vmem:[%s3091 + $0xf0] sm:$0xff]
    %v3123 = vld [vmem:[%s3091 + $0xf8] sm:$0xff]
    %v3124 = vld [vmem:[%s3091 + $0x100] sm:$0xff]
    %v3125 = vld [vmem:[%s3091 + $0x108] sm:$0xff]
    %v3126 = vld [vmem:[%s3091 + $0x110] sm:$0xff]
    %v3127 = vld [vmem:[%s3091 + $0x118] sm:$0xff]
    %v3128 = vld [vmem:[%s3091 + $0x120] sm:$0xff]
    %v3129 = vld [vmem:[%s3091 + $0x128] sm:$0xff]
    %v3130 = vld [vmem:[%s3091 + $0x130] sm:$0xff]
    %v3131 = vld [vmem:[%s3091 + $0x138] sm:$0xff]
    %v3132 = vld [vmem:[%s3091 + $0x140] sm:$0xff]
    %v3133 = vld [vmem:[%s3091 + $0x148] sm:$0xff]
    %v3134 = vld [vmem:[%s3091 + $0x150] sm:$0xff]
    %v3135 = vld [vmem:[%s3091 + $0x158] sm:$0xff]
    %v3136 = vld [vmem:[%s3091 + $0x160] sm:$0xff]
    %v3137 = vld [vmem:[%s3091 + $0x168] sm:$0xff]
    %v3138 = vld [vmem:[%s3091 + $0x170] sm:$0xff]
    %v3139 = vld [vmem:[%s3091 + $0x178] sm:$0xff]
    %v3140 = vld [vmem:[%s3091 + $0x180] sm:$0xff]
    %v3141 = vld [vmem:[%s3091 + $0x188] sm:$0xff]
    %v3142 = vld [vmem:[%s3091 + $0x190] sm:$0xff]
    %v3143 = vld [vmem:[%s3091 + $0x198] sm:$0xff]
    %v3144 = vld [vmem:[%s3091 + $0x1a0] sm:$0xff]
    %v3145 = vld [vmem:[%s3091 + $0x1a8] sm:$0xff]
    %v3146 = vld [vmem:[%s3091 + $0x1b0] sm:$0xff]
    %v3147 = vld [vmem:[%s3091 + $0x1b8] sm:$0xff]
    %v3148 = vld [vmem:[%s3091 + $0x1c0] sm:$0xff]
    %v3149 = vld [vmem:[%s3091 + $0x1c8] sm:$0xff]
    %v3150 = vld [vmem:[%s3091 + $0x1d0] sm:$0xff]
    %v3151 = vld [vmem:[%s3091 + $0x1d8] sm:$0xff]
    %v3152 = vld [vmem:[%s3091 + $0x1e0] sm:$0xff]
    %v3153 = vld [vmem:[%s3091 + $0x1e8] sm:$0xff]
    %v3154 = vld [vmem:[%s3091 + $0x1f0] sm:$0xff]
    %v3155 = vld [vmem:[%s3091 + $0x1f8] sm:$0xff]
    %v3157 = vrot.slane %v3019, 4
    %3159 = vmatprep.subr.mxu0 %v3093
    %3160 = vmatpush1.msra.mxu0 %v3092
    %3161 = vmatprep.subr.mxu0 %v3097
    %3162 = vmatpush1.msra.mxu0 %v3096
    %3163 = vmatprep.subr.mxu0 %v3101
    %3164 = vmatpush1.msra.mxu0 %v3100
    %3165 = vmatprep.subr.mxu0 %v3105
    %3166 = vmatpush1.msra.mxu0 %v3104
    %3167 = vmatprep.subr.mxu0 %v3109
    %3168 = vmatpush1.msra.mxu0 %v3108
    %3169 = vmatprep.subr.mxu0 %v3113
    %3170 = vmatpush1.msra.mxu0 %v3112
    %3171 = vmatprep.subr.mxu0 %v3117
    %3172 = vmatpush1.msra.mxu0 %v3116
    %3173 = vmatprep.subr.mxu0 %v3121
    %3174 = vmatpush1.msra.mxu0 %v3120
    %3175 = vmatprep.subr.mxu0 %v3125
    %3176 = vmatpush1.msra.mxu0 %v3124
    %3177 = vmatprep.subr.mxu0 %v3129
    %3178 = vmatpush1.msra.mxu0 %v3128
    %3179 = vmatprep.subr.mxu0 %v3133
    %3180 = vmatpush1.msra.mxu0 %v3132
    %3181 = vmatprep.subr.mxu0 %v3137
    %3182 = vmatpush1.msra.mxu0 %v3136
    %3183 = vmatprep.subr.mxu0 %v3141
    %3184 = vmatpush1.msra.mxu0 %v3140
    %3185 = vmatprep.subr.mxu0 %v3145
    %3186 = vmatpush1.msra.mxu0 %v3144
    %3187 = vmatprep.subr.mxu0 %v3149
    %3188 = vmatpush1.msra.mxu0 %v3148
    %3189 = vmatprep.subr.mxu0 %v3153
    %3190 = vmatpush1.msra.mxu0 %v3152
    %3191 = vmatprep.subr.mxu0 0.0
    %3192 = vmatpush1.msra.mxu0 0.0
    %3193 = vmatprep.subr.mxu0 0.0
    %3194 = vmatpush1.msra.mxu0 0.0
    %3195 = vmatprep.subr.mxu0 0.0
    %3196 = vmatpush1.msra.mxu0 0.0
    %3197 = vmatprep.subr.mxu0 0.0
    %3198 = vmatpush1.msra.mxu0 0.0
    %3199 = vmatprep.subr.mxu0 0.0
    %3200 = vmatpush1.msra.mxu0 0.0
    %3201 = vmatprep.subr.mxu0 0.0
    %3202 = vmatpush1.msra.mxu0 0.0
    %3203 = vmatprep.subr.mxu0 0.0
    %3204 = vmatpush1.msra.mxu0 0.0
    %3205 = vmatprep.subr.mxu0 0.0
    %3206 = vmatpush1.msra.mxu0 0.0
    %3207 = vmatprep.subr.mxu0 0.0
    %3208 = vmatpush1.msra.mxu0 0.0
    %3209 = vmatprep.subr.mxu0 0.0
    %3210 = vmatpush1.msra.mxu0 0.0
    %3211 = vmatprep.subr.mxu0 0.0
    %3212 = vmatpush1.msra.mxu0 0.0
    %3213 = vmatprep.subr.mxu0 0.0
    %3214 = vmatpush1.msra.mxu0 0.0
    %3215 = vmatprep.subr.mxu0 0.0
    %3216 = vmatpush1.msra.mxu0 0.0
    %3217 = vmatprep.subr.mxu0 0.0
    %3218 = vmatpush1.msra.mxu0 0.0
    %3219 = vmatprep.subr.mxu0 0.0
    %3220 = vmatpush1.msra.mxu0 0.0
    %3221 = vmatprep.subr.mxu0 0.0
    %3222 = vmatpush1.msra.mxu0 0.0
    %3223 = vmatprep.mubr.f32.mxu0 0.0
    %3224 = vmatmul.mubr.f32.gmra.mrb[0].mxu0 %v3157
    %v3225 = vpop.f32.mrb[0].mxu0
    %v3226 = vadd.f32 0.0, %v3225
    %v3227 = vpop.f32.mrb[0].mxu0
    %v3228 = vadd.f32 0.0, %v3227
    %3229 = vdwg.mxu0
    %3230 = vmatprep.subr.mxu0 %v3095
    %3231 = vmatpush1.msra.mxu0 %v3094
    %3232 = vmatprep.subr.mxu0 %v3099
    %3233 = vmatpush1.msra.mxu0 %v3098
    %3234 = vmatprep.subr.mxu0 %v3103
    %3235 = vmatpush1.msra.mxu0 %v3102
    %3236 = vmatprep.subr.mxu0 %v3107
    %3237 = vmatpush1.msra.mxu0 %v3106
    %3238 = vmatprep.subr.mxu0 %v3111
    %3239 = vmatpush1.msra.mxu0 %v3110
    %3240 = vmatprep.subr.mxu0 %v3115
    %3241 = vmatpush1.msra.mxu0 %v3114
    %3242 = vmatprep.subr.mxu0 %v3119
    %3243 = vmatpush1.msra.mxu0 %v3118
    %3244 = vmatprep.subr.mxu0 %v3123
    %3245 = vmatpush1.msra.mxu0 %v3122
    %3246 = vmatprep.subr.mxu0 %v3127
    %3247 = vmatpush1.msra.mxu0 %v3126
    %3248 = vmatprep.subr.mxu0 %v3131
    %3249 = vmatpush1.msra.mxu0 %v3130
    %3250 = vmatprep.subr.mxu0 %v3135
    %3251 = vmatpush1.msra.mxu0 %v3134
    %3252 = vmatprep.subr.mxu0 %v3139
    %3253 = vmatpush1.msra.mxu0 %v3138
    %3254 = vmatprep.subr.mxu0 %v3143
    %3255 = vmatpush1.msra.mxu0 %v3142
    %3256 = vmatprep.subr.mxu0 %v3147
    %3257 = vmatpush1.msra.mxu0 %v3146
    %3258 = vmatprep.subr.mxu0 %v3151
    %3259 = vmatpush1.msra.mxu0 %v3150
    %3260 = vmatprep.subr.mxu0 %v3155
    %3261 = vmatpush1.msra.mxu0 %v3154
    %3262 = vmatprep.subr.mxu0 0.0
    %3263 = vmatpush1.msra.mxu0 0.0
    %3264 = vmatprep.subr.mxu0 0.0
    %3265 = vmatpush1.msra.mxu0 0.0
    %3266 = vmatprep.subr.mxu0 0.0
    %3267 = vmatpush1.msra.mxu0 0.0
    %3268 = vmatprep.subr.mxu0 0.0
    %3269 = vmatpush1.msra.mxu0 0.0
    %3270 = vmatprep.subr.mxu0 0.0
    %3271 = vmatpush1.msra.mxu0 0.0
    %3272 = vmatprep.subr.mxu0 0.0
    %3273 = vmatpush1.msra.mxu0 0.0
    %3274 = vmatprep.subr.mxu0 0.0
    %3275 = vmatpush1.msra.mxu0 0.0
    %3276 = vmatprep.subr.mxu0 0.0
    %3277 = vmatpush1.msra.mxu0 0.0
    %3278 = vmatprep.subr.mxu0 0.0
    %3279 = vmatpush1.msra.mxu0 0.0
    %3280 = vmatprep.subr.mxu0 0.0
    %3281 = vmatpush1.msra.mxu0 0.0
    %3282 = vmatprep.subr.mxu0 0.0
    %3283 = vmatpush1.msra.mxu0 0.0
    %3284 = vmatprep.subr.mxu0 0.0
    %3285 = vmatpush1.msra.mxu0 0.0
    %3286 = vmatprep.subr.mxu0 0.0
    %3287 = vmatpush1.msra.mxu0 0.0
    %3288 = vmatprep.subr.mxu0 0.0
    %3289 = vmatpush1.msra.mxu0 0.0
    %3290 = vmatprep.subr.mxu0 0.0
    %3291 = vmatpush1.msra.mxu0 0.0
    %3292 = vmatprep.subr.mxu0 0.0
    %3293 = vmatpush1.msra.mxu0 0.0
    %3294 = vmatprep.mubr.f32.mxu0 0.0
    %3295 = vmatmul.mubr.f32.gmra.mrb[0].mxu0 %v3157
    %v3296 = vpop.f32.mrb[0].mxu0
    %v3297 = vadd.f32 0.0, %v3296
    %v3298 = vpop.f32.mrb[0].mxu0
    %v3299 = vadd.f32 0.0, %v3298
    %3300 = vdwg.mxu0
    %3301 = vmatprep.subr.mxu0 %v3028
    %3302 = vmatpush1.msra.mxu0 %v3027
    %3303 = vmatprep.subr.mxu0 %v3032
    %3304 = vmatpush1.msra.mxu0 %v3031
    %3305 = vmatprep.subr.mxu0 %v3036
    %3306 = vmatpush1.msra.mxu0 %v3035
    %3307 = vmatprep.subr.mxu0 %v3040
    %3308 = vmatpush1.msra.mxu0 %v3039
    %3309 = vmatprep.subr.mxu0 %v3044
    %3310 = vmatpush1.msra.mxu0 %v3043
    %3311 = vmatprep.subr.mxu0 %v3048
    %3312 = vmatpush1.msra.mxu0 %v3047
    %3313 = vmatprep.subr.mxu0 %v3052
    %3314 = vmatpush1.msra.mxu0 %v3051
    %3315 = vmatprep.subr.mxu0 %v3056
    %3316 = vmatpush1.msra.mxu0 %v3055
    %3317 = vmatprep.subr.mxu0 %v3060
    %3318 = vmatpush1.msra.mxu0 %v3059
    %3319 = vmatprep.subr.mxu0 %v3064
    %3320 = vmatpush1.msra.mxu0 %v3063
    %3321 = vmatprep.subr.mxu0 %v3068
    %3322 = vmatpush1.msra.mxu0 %v3067
    %3323 = vmatprep.subr.mxu0 %v3072
    %3324 = vmatpush1.msra.mxu0 %v3071
    %3325 = vmatprep.subr.mxu0 %v3076
    %3326 = vmatpush1.msra.mxu0 %v3075
    %3327 = vmatprep.subr.mxu0 %v3080
    %3328 = vmatpush1.msra.mxu0 %v3079
    %3329 = vmatprep.subr.mxu0 %v3084
    %3330 = vmatpush1.msra.mxu0 %v3083
    %3331 = vmatprep.subr.mxu0 %v3088
    %3332 = vmatpush1.msra.mxu0 %v3087
    %3333 = vmatprep.subr.mxu0 0.0
    %3334 = vmatpush1.msra.mxu0 0.0
    %3335 = vmatprep.subr.mxu0 0.0
    %3336 = vmatpush1.msra.mxu0 0.0
    %3337 = vmatprep.subr.mxu0 0.0
    %3338 = vmatpush1.msra.mxu0 0.0
    %3339 = vmatprep.subr.mxu0 0.0
    %3340 = vmatpush1.msra.mxu0 0.0
    %3341 = vmatprep.subr.mxu0 0.0
    %3342 = vmatpush1.msra.mxu0 0.0
    %3343 = vmatprep.subr.mxu0 0.0
    %3344 = vmatpush1.msra.mxu0 0.0
    %3345 = vmatprep.subr.mxu0 0.0
    %3346 = vmatpush1.msra.mxu0 0.0
    %3347 = vmatprep.subr.mxu0 0.0
    %3348 = vmatpush1.msra.mxu0 0.0
    %3349 = vmatprep.subr.mxu0 0.0
    %3350 = vmatpush1.msra.mxu0 0.0
    %3351 = vmatprep.subr.mxu0 0.0
    %3352 = vmatpush1.msra.mxu0 0.0
    %3353 = vmatprep.subr.mxu0 0.0
    %3354 = vmatpush1.msra.mxu0 0.0
    %3355 = vmatprep.subr.mxu0 0.0
    %3356 = vmatpush1.msra.mxu0 0.0
    %3357 = vmatprep.subr.mxu0 0.0
    %3358 = vmatpush1.msra.mxu0 0.0
    %3359 = vmatprep.subr.mxu0 0.0
    %3360 = vmatpush1.msra.mxu0 0.0
    %3361 = vmatprep.subr.mxu0 0.0
    %3362 = vmatpush1.msra.mxu0 0.0
    %3363 = vmatprep.subr.mxu0 0.0
    %3364 = vmatpush1.msra.mxu0 0.0
    %3365 = vmatprep.mubr.f32.mxu0 0.0
    %3366 = vmatmul.mubr.f32.gmra.mrb[0].mxu0 %v3019
    %v3367 = vpop.f32.mrb[0].mxu0
    %v3368 = vadd.f32 %v3226, %v3367
    %v3369 = vpop.f32.mrb[0].mxu0
    %v3370 = vadd.f32 %v3228, %v3369
    %3371 = vdwg.mxu0
    %3372 = vmatprep.subr.mxu0 %v3030
    %3373 = vmatpush1.msra.mxu0 %v3029
    %3374 = vmatprep.subr.mxu0 %v3034
    %3375 = vmatpush1.msra.mxu0 %v3033
    %3376 = vmatprep.subr.mxu0 %v3038
    %3377 = vmatpush1.msra.mxu0 %v3037
    %3378 = vmatprep.subr.mxu0 %v3042
    %3379 = vmatpush1.msra.mxu0 %v3041
    %3380 = vmatprep.subr.mxu0 %v3046
    %3381 = vmatpush1.msra.mxu0 %v3045
    %3382 = vmatprep.subr.mxu0 %v3050
    %3383 = vmatpush1.msra.mxu0 %v3049
    %3384 = vmatprep.subr.mxu0 %v3054
    %3385 = vmatpush1.msra.mxu0 %v3053
    %3386 = vmatprep.subr.mxu0 %v3058
    %3387 = vmatpush1.msra.mxu0 %v3057
    %3388 = vmatprep.subr.mxu0 %v3062
    %3389 = vmatpush1.msra.mxu0 %v3061
    %3390 = vmatprep.subr.mxu0 %v3066
    %3391 = vmatpush1.msra.mxu0 %v3065
    %3392 = vmatprep.subr.mxu0 %v3070
    %3393 = vmatpush1.msra.mxu0 %v3069
    %3394 = vmatprep.subr.mxu0 %v3074
    %3395 = vmatpush1.msra.mxu0 %v3073
    %3396 = vmatprep.subr.mxu0 %v3078
    %3397 = vmatpush1.msra.mxu0 %v3077
    %3398 = vmatprep.subr.mxu0 %v3082
    %3399 = vmatpush1.msra.mxu0 %v3081
    %3400 = vmatprep.subr.mxu0 %v3086
    %3401 = vmatpush1.msra.mxu0 %v3085
    %3402 = vmatprep.subr.mxu0 %v3090
    %3403 = vmatpush1.msra.mxu0 %v3089
    %3404 = vmatprep.subr.mxu0 0.0
    %3405 = vmatpush1.msra.mxu0 0.0
    %3406 = vmatprep.subr.mxu0 0.0
    %3407 = vmatpush1.msra.mxu0 0.0
    %3408 = vmatprep.subr.mxu0 0.0
    %3409 = vmatpush1.msra.mxu0 0.0
    %3410 = vmatprep.subr.mxu0 0.0
    %3411 = vmatpush1.msra.mxu0 0.0
    %3412 = vmatprep.subr.mxu0 0.0
    %3413 = vmatpush1.msra.mxu0 0.0
    %3414 = vmatprep.subr.mxu0 0.0
    %3415 = vmatpush1.msra.mxu0 0.0
    %3416 = vmatprep.subr.mxu0 0.0
    %3417 = vmatpush1.msra.mxu0 0.0
    %3418 = vmatprep.subr.mxu0 0.0
    %3419 = vmatpush1.msra.mxu0 0.0
    %3420 = vmatprep.subr.mxu0 0.0
    %3421 = vmatpush1.msra.mxu0 0.0
    %3422 = vmatprep.subr.mxu0 0.0
    %3423 = vmatpush1.msra.mxu0 0.0
    %3424 = vmatprep.subr.mxu0 0.0
    %3425 = vmatpush1.msra.mxu0 0.0
    %3426 = vmatprep.subr.mxu0 0.0
    %3427 = vmatpush1.msra.mxu0 0.0
    %3428 = vmatprep.subr.mxu0 0.0
    %3429 = vmatpush1.msra.mxu0 0.0
    %3430 = vmatprep.subr.mxu0 0.0
    %3431 = vmatpush1.msra.mxu0 0.0
    %3432 = vmatprep.subr.mxu0 0.0
    %3433 = vmatpush1.msra.mxu0 0.0
    %3434 = vmatprep.subr.mxu0 0.0
    %3435 = vmatpush1.msra.mxu0 0.0
    %3436 = vmatprep.mubr.f32.mxu0 0.0
    %3437 = vmatmul.mubr.f32.gmra.mrb[0].mxu0 %v3019
    %v3438 = vpop.f32.mrb[0].mxu0
    %v3439 = vadd.f32 %v3297, %v3438
    %v3440 = vpop.f32.mrb[0].mxu0
    %v3441 = vadd.f32 %v3299, %v3440
    %3442 = vdwg.mxu0
    %s3443 = scalar_lea.vmem [#allocation6], 1024
    %v3444 = vld [vmem:[%s3443] sm:$0xff]
    %v3445 = vld [vmem:[%s3443 + $0x8] sm:$0xff]
    %v3446 = vld [vmem:[%s3443 + $0x10] sm:$0xff]
    %v3447 = vld [vmem:[%s3443 + $0x18] sm:$0xff]
    %v3448 = vld [vmem:[%s3443 + $0x20] sm:$0xff]
    %v3449 = vld [vmem:[%s3443 + $0x28] sm:$0xff]
    %v3450 = vld [vmem:[%s3443 + $0x30] sm:$0xff]
    %v3451 = vld [vmem:[%s3443 + $0x38] sm:$0xff]
    %v3452 = vld [vmem:[%s3443 + $0x40] sm:$0xff]
    %v3453 = vld [vmem:[%s3443 + $0x48] sm:$0xff]
    %v3454 = vld [vmem:[%s3443 + $0x50] sm:$0xff]
    %v3455 = vld [vmem:[%s3443 + $0x58] sm:$0xff]
    %v3456 = vld [vmem:[%s3443 + $0x60] sm:$0xff]
    %v3457 = vld [vmem:[%s3443 + $0x68] sm:$0xff]
    %v3458 = vld [vmem:[%s3443 + $0x70] sm:$0xff]
    %v3459 = vld [vmem:[%s3443 + $0x78] sm:$0xff]
    %v3460 = vld [vmem:[%s3443 + $0x80] sm:$0xff]
    %v3461 = vld [vmem:[%s3443 + $0x88] sm:$0xff]
    %v3462 = vld [vmem:[%s3443 + $0x90] sm:$0xff]
    %v3463 = vld [vmem:[%s3443 + $0x98] sm:$0xff]
    %v3464 = vld [vmem:[%s3443 + $0xa0] sm:$0xff]
    %v3465 = vld [vmem:[%s3443 + $0xa8] sm:$0xff]
    %v3466 = vld [vmem:[%s3443 + $0xb0] sm:$0xff]
    %v3467 = vld [vmem:[%s3443 + $0xb8] sm:$0xff]
    %v3468 = vld [vmem:[%s3443 + $0xc0] sm:$0xff]
    %v3469 = vld [vmem:[%s3443 + $0xc8] sm:$0xff]
    %v3470 = vld [vmem:[%s3443 + $0xd0] sm:$0xff]
    %v3471 = vld [vmem:[%s3443 + $0xd8] sm:$0xff]
    %v3472 = vld [vmem:[%s3443 + $0xe0] sm:$0xff]
    %v3473 = vld [vmem:[%s3443 + $0xe8] sm:$0xff]
    %v3474 = vld [vmem:[%s3443 + $0xf0] sm:$0xff]
    %v3475 = vld [vmem:[%s3443 + $0xf8] sm:$0xff]
    %v3476 = vld [vmem:[%s3443 + $0x100] sm:$0xff]
    %v3477 = vld [vmem:[%s3443 + $0x108] sm:$0xff]
    %v3478 = vld [vmem:[%s3443 + $0x110] sm:$0xff]
    %v3479 = vld [vmem:[%s3443 + $0x118] sm:$0xff]
    %v3480 = vld [vmem:[%s3443 + $0x120] sm:$0xff]
    %v3481 = vld [vmem:[%s3443 + $0x128] sm:$0xff]
    %v3482 = vld [vmem:[%s3443 + $0x130] sm:$0xff]
    %v3483 = vld [vmem:[%s3443 + $0x138] sm:$0xff]
    %v3484 = vld [vmem:[%s3443 + $0x140] sm:$0xff]
    %v3485 = vld [vmem:[%s3443 + $0x148] sm:$0xff]
    %v3486 = vld [vmem:[%s3443 + $0x150] sm:$0xff]
    %v3487 = vld [vmem:[%s3443 + $0x158] sm:$0xff]
    %v3488 = vld [vmem:[%s3443 + $0x160] sm:$0xff]
    %v3489 = vld [vmem:[%s3443 + $0x168] sm:$0xff]
    %v3490 = vld [vmem:[%s3443 + $0x170] sm:$0xff]
    %v3491 = vld [vmem:[%s3443 + $0x178] sm:$0xff]
    %v3492 = vld [vmem:[%s3443 + $0x180] sm:$0xff]
    %v3493 = vld [vmem:[%s3443 + $0x188] sm:$0xff]
    %v3494 = vld [vmem:[%s3443 + $0x190] sm:$0xff]
    %v3495 = vld [vmem:[%s3443 + $0x198] sm:$0xff]
    %v3496 = vld [vmem:[%s3443 + $0x1a0] sm:$0xff]
    %v3497 = vld [vmem:[%s3443 + $0x1a8] sm:$0xff]
    %v3498 = vld [vmem:[%s3443 + $0x1b0] sm:$0xff]
    %v3499 = vld [vmem:[%s3443 + $0x1b8] sm:$0xff]
    %v3500 = vld [vmem:[%s3443 + $0x1c0] sm:$0xff]
    %v3501 = vld [vmem:[%s3443 + $0x1c8] sm:$0xff]
    %v3502 = vld [vmem:[%s3443 + $0x1d0] sm:$0xff]
    %v3503 = vld [vmem:[%s3443 + $0x1d8] sm:$0xff]
    %v3504 = vld [vmem:[%s3443 + $0x1e0] sm:$0xff]
    %v3505 = vld [vmem:[%s3443 + $0x1e8] sm:$0xff]
    %v3506 = vld [vmem:[%s3443 + $0x1f0] sm:$0xff]
    %v3507 = vld [vmem:[%s3443 + $0x1f8] sm:$0xff]
    %3508 = vmatprep.subr.mxu0 %v3445
    %3509 = vmatpush1.msra.mxu0 %v3444
    %3510 = vmatprep.subr.mxu0 %v3449
    %3511 = vmatpush1.msra.mxu0 %v3448
    %3512 = vmatprep.subr.mxu0 %v3453
    %3513 = vmatpush1.msra.mxu0 %v3452
    %3514 = vmatprep.subr.mxu0 %v3457
    %3515 = vmatpush1.msra.mxu0 %v3456
    %3516 = vmatprep.subr.mxu0 %v3461
    %3517 = vmatpush1.msra.mxu0 %v3460
    %3518 = vmatprep.subr.mxu0 %v3465
    %3519 = vmatpush1.msra.mxu0 %v3464
    %3520 = vmatprep.subr.mxu0 %v3469
    %3521 = vmatpush1.msra.mxu0 %v3468
    %3522 = vmatprep.subr.mxu0 %v3473
    %3523 = vmatpush1.msra.mxu0 %v3472
    %3524 = vmatprep.subr.mxu0 %v3477
    %3525 = vmatpush1.msra.mxu0 %v3476
    %3526 = vmatprep.subr.mxu0 %v3481
    %3527 = vmatpush1.msra.mxu0 %v3480
    %3528 = vmatprep.subr.mxu0 %v3485
    %3529 = vmatpush1.msra.mxu0 %v3484
    %3530 = vmatprep.subr.mxu0 %v3489
    %3531 = vmatpush1.msra.mxu0 %v3488
    %3532 = vmatprep.subr.mxu0 %v3493
    %3533 = vmatpush1.msra.mxu0 %v3492
    %3534 = vmatprep.subr.mxu0 %v3497
    %3535 = vmatpush1.msra.mxu0 %v3496
    %3536 = vmatprep.subr.mxu0 %v3501
    %3537 = vmatpush1.msra.mxu0 %v3500
    %3538 = vmatprep.subr.mxu0 %v3505
    %3539 = vmatpush1.msra.mxu0 %v3504
    %3540 = vmatprep.subr.mxu0 0.0
    %3541 = vmatpush1.msra.mxu0 0.0
    %3542 = vmatprep.subr.mxu0 0.0
    %3543 = vmatpush1.msra.mxu0 0.0
    %3544 = vmatprep.subr.mxu0 0.0
    %3545 = vmatpush1.msra.mxu0 0.0
    %3546 = vmatprep.subr.mxu0 0.0
    %3547 = vmatpush1.msra.mxu0 0.0
    %3548 = vmatprep.subr.mxu0 0.0
    %3549 = vmatpush1.msra.mxu0 0.0
    %3550 = vmatprep.subr.mxu0 0.0
    %3551 = vmatpush1.msra.mxu0 0.0
    %3552 = vmatprep.subr.mxu0 0.0
    %3553 = vmatpush1.msra.mxu0 0.0
    %3554 = vmatprep.subr.mxu0 0.0
    %3555 = vmatpush1.msra.mxu0 0.0
    %3556 = vmatprep.subr.mxu0 0.0
    %3557 = vmatpush1.msra.mxu0 0.0
    %3558 = vmatprep.subr.mxu0 0.0
    %3559 = vmatpush1.msra.mxu0 0.0
    %3560 = vmatprep.subr.mxu0 0.0
    %3561 = vmatpush1.msra.mxu0 0.0
    %3562 = vmatprep.subr.mxu0 0.0
    %3563 = vmatpush1.msra.mxu0 0.0
    %3564 = vmatprep.subr.mxu0 0.0
    %3565 = vmatpush1.msra.mxu0 0.0
    %3566 = vmatprep.subr.mxu0 0.0
    %3567 = vmatpush1.msra.mxu0 0.0
    %3568 = vmatprep.subr.mxu0 0.0
    %3569 = vmatpush1.msra.mxu0 0.0
    %3570 = vmatprep.subr.mxu0 0.0
    %3571 = vmatpush1.msra.mxu0 0.0
    %3572 = vmatprep.mubr.f32.mxu0 0.0
    %3573 = vmatmul.mubr.f32.gmra.mrb[0].mxu0 %v3024
    %v3574 = vpop.f32.mrb[0].mxu0
    %v3575 = vadd.f32 0.0, %v3574
    %v3576 = vpop.f32.mrb[0].mxu0
    %v3577 = vadd.f32 0.0, %v3576
    %3578 = vdwg.mxu0
    %3579 = vmatprep.subr.mxu0 %v3447
    %3580 = vmatpush1.msra.mxu0 %v3446
    %3581 = vmatprep.subr.mxu0 %v3451
    %3582 = vmatpush1.msra.mxu0 %v3450
    %3583 = vmatprep.subr.mxu0 %v3455
    %3584 = vmatpush1.msra.mxu0 %v3454
    %3585 = vmatprep.subr.mxu0 %v3459
    %3586 = vmatpush1.msra.mxu0 %v3458
    %3587 = vmatprep.subr.mxu0 %v3463
    %3588 = vmatpush1.msra.mxu0 %v3462
    %3589 = vmatprep.subr.mxu0 %v3467
    %3590 = vmatpush1.msra.mxu0 %v3466
    %3591 = vmatprep.subr.mxu0 %v3471
    %3592 = vmatpush1.msra.mxu0 %v3470
    %3593 = vmatprep.subr.mxu0 %v3475
    %3594 = vmatpush1.msra.mxu0 %v3474
    %3595 = vmatprep.subr.mxu0 %v3479
    %3596 = vmatpush1.msra.mxu0 %v3478
    %3597 = vmatprep.subr.mxu0 %v3483
    %3598 = vmatpush1.msra.mxu0 %v3482
    %3599 = vmatprep.subr.mxu0 %v3487
    %3600 = vmatpush1.msra.mxu0 %v3486
    %3601 = vmatprep.subr.mxu0 %v3491
    %3602 = vmatpush1.msra.mxu0 %v3490
    %3603 = vmatprep.subr.mxu0 %v3495
    %3604 = vmatpush1.msra.mxu0 %v3494
    %3605 = vmatprep.subr.mxu0 %v3499
    %3606 = vmatpush1.msra.mxu0 %v3498
    %3607 = vmatprep.subr.mxu0 %v3503
    %3608 = vmatpush1.msra.mxu0 %v3502
    %3609 = vmatprep.subr.mxu0 %v3507
    %3610 = vmatpush1.msra.mxu0 %v3506
    %3611 = vmatprep.subr.mxu0 0.0
    %3612 = vmatpush1.msra.mxu0 0.0
    %3613 = vmatprep.subr.mxu0 0.0
    %3614 = vmatpush1.msra.mxu0 0.0
    %3615 = vmatprep.subr.mxu0 0.0
    %3616 = vmatpush1.msra.mxu0 0.0
    %3617 = vmatprep.subr.mxu0 0.0
    %3618 = vmatpush1.msra.mxu0 0.0
    %3619 = vmatprep.subr.mxu0 0.0
    %3620 = vmatpush1.msra.mxu0 0.0
    %3621 = vmatprep.subr.mxu0 0.0
    %3622 = vmatpush1.msra.mxu0 0.0
    %3623 = vmatprep.subr.mxu0 0.0
    %3624 = vmatpush1.msra.mxu0 0.0
    %3625 = vmatprep.subr.mxu0 0.0
    %3626 = vmatpush1.msra.mxu0 0.0
    %3627 = vmatprep.subr.mxu0 0.0
    %3628 = vmatpush1.msra.mxu0 0.0
    %3629 = vmatprep.subr.mxu0 0.0
    %3630 = vmatpush1.msra.mxu0 0.0
    %3631 = vmatprep.subr.mxu0 0.0
    %3632 = vmatpush1.msra.mxu0 0.0
    %3633 = vmatprep.subr.mxu0 0.0
    %3634 = vmatpush1.msra.mxu0 0.0
    %3635 = vmatprep.subr.mxu0 0.0
    %3636 = vmatpush1.msra.mxu0 0.0
    %3637 = vmatprep.subr.mxu0 0.0
    %3638 = vmatpush1.msra.mxu0 0.0
    %3639 = vmatprep.subr.mxu0 0.0
    %3640 = vmatpush1.msra.mxu0 0.0
    %3641 = vmatprep.subr.mxu0 0.0
    %3642 = vmatpush1.msra.mxu0 0.0
    %3643 = vmatprep.mubr.f32.mxu0 0.0
    %3644 = vmatmul.mubr.f32.gmra.mrb[0].mxu0 %v3024
    %v3645 = vpop.f32.mrb[0].mxu0
    %v3646 = vadd.f32 0.0, %v3645
    %v3647 = vpop.f32.mrb[0].mxu0
    %v3648 = vadd.f32 0.0, %v3647
    %3649 = vdwg.mxu0
    %v3650 = vadd.f32 %v3368, %v3575
    %v3651 = vadd.f32 %v3370, %v3577
    %v3652 = vadd.f32 %v3439, %v3646
    %v3653 = vadd.f32 %v3441, %v3648
    %s3654 = scalar_lea.vmem [#allocation6], 1536
    %v3655 = vld [vmem:[%s3654] sm:$0xff]
    %v3656 = vld [vmem:[%s3654 + $0x8] sm:$0xff]
    %v3657 = vld [vmem:[%s3654 + $0x10] sm:$0xff]
    %v3658 = vld [vmem:[%s3654 + $0x18] sm:$0xff]
    %v3659 = vld [vmem:[%s3654 + $0x20] sm:$0xff]
    %v3660 = vld [vmem:[%s3654 + $0x28] sm:$0xff]
    %v3661 = vld [vmem:[%s3654 + $0x30] sm:$0xff]
    %v3662 = vld [vmem:[%s3654 + $0x38] sm:$0xff]
    %v3663 = vld [vmem:[%s3654 + $0x40] sm:$0xff]
    %v3664 = vld [vmem:[%s3654 + $0x48] sm:$0xff]
    %v3665 = vld [vmem:[%s3654 + $0x50] sm:$0xff]
    %v3666 = vld [vmem:[%s3654 + $0x58] sm:$0xff]
    %v3667 = vld [vmem:[%s3654 + $0x60] sm:$0xff]
    %v3668 = vld [vmem:[%s3654 + $0x68] sm:$0xff]
    %v3669 = vld [vmem:[%s3654 + $0x70] sm:$0xff]
    %v3670 = vld [vmem:[%s3654 + $0x78] sm:$0xff]
    %v3671 = vld [vmem:[%s3654 + $0x80] sm:$0xff]
    %v3672 = vld [vmem:[%s3654 + $0x88] sm:$0xff]
    %v3673 = vld [vmem:[%s3654 + $0x90] sm:$0xff]
    %v3674 = vld [vmem:[%s3654 + $0x98] sm:$0xff]
    %v3675 = vld [vmem:[%s3654 + $0xa0] sm:$0xff]
    %v3676 = vld [vmem:[%s3654 + $0xa8] sm:$0xff]
    %v3677 = vld [vmem:[%s3654 + $0xb0] sm:$0xff]
    %v3678 = vld [vmem:[%s3654 + $0xb8] sm:$0xff]
    %v3679 = vld [vmem:[%s3654 + $0xc0] sm:$0xff]
    %v3680 = vld [vmem:[%s3654 + $0xc8] sm:$0xff]
    %v3681 = vld [vmem:[%s3654 + $0xd0] sm:$0xff]
    %v3682 = vld [vmem:[%s3654 + $0xd8] sm:$0xff]
    %v3683 = vld [vmem:[%s3654 + $0xe0] sm:$0xff]
    %v3684 = vld [vmem:[%s3654 + $0xe8] sm:$0xff]
    %v3685 = vld [vmem:[%s3654 + $0xf0] sm:$0xff]
    %v3686 = vld [vmem:[%s3654 + $0xf8] sm:$0xff]
    %v3687 = vld [vmem:[%s3654 + $0x100] sm:$0xff]
    %v3688 = vld [vmem:[%s3654 + $0x108] sm:$0xff]
    %v3689 = vld [vmem:[%s3654 + $0x110] sm:$0xff]
    %v3690 = vld [vmem:[%s3654 + $0x118] sm:$0xff]
    %v3691 = vld [vmem:[%s3654 + $0x120] sm:$0xff]
    %v3692 = vld [vmem:[%s3654 + $0x128] sm:$0xff]
    %v3693 = vld [vmem:[%s3654 + $0x130] sm:$0xff]
    %v3694 = vld [vmem:[%s3654 + $0x138] sm:$0xff]
    %v3695 = vld [vmem:[%s3654 + $0x140] sm:$0xff]
    %v3696 = vld [vmem:[%s3654 + $0x148] sm:$0xff]
    %v3697 = vld [vmem:[%s3654 + $0x150] sm:$0xff]
    %v3698 = vld [vmem:[%s3654 + $0x158] sm:$0xff]
    %v3699 = vld [vmem:[%s3654 + $0x160] sm:$0xff]
    %v3700 = vld [vmem:[%s3654 + $0x168] sm:$0xff]
    %v3701 = vld [vmem:[%s3654 + $0x170] sm:$0xff]
    %v3702 = vld [vmem:[%s3654 + $0x178] sm:$0xff]
    %v3703 = vld [vmem:[%s3654 + $0x180] sm:$0xff]
    %v3704 = vld [vmem:[%s3654 + $0x188] sm:$0xff]
    %v3705 = vld [vmem:[%s3654 + $0x190] sm:$0xff]
    %v3706 = vld [vmem:[%s3654 + $0x198] sm:$0xff]
    %v3707 = vld [vmem:[%s3654 + $0x1a0] sm:$0xff]
    %v3708 = vld [vmem:[%s3654 + $0x1a8] sm:$0xff]
    %v3709 = vld [vmem:[%s3654 + $0x1b0] sm:$0xff]
    %v3710 = vld [vmem:[%s3654 + $0x1b8] sm:$0xff]
    %v3711 = vld [vmem:[%s3654 + $0x1c0] sm:$0xff]
    %v3712 = vld [vmem:[%s3654 + $0x1c8] sm:$0xff]
    %v3713 = vld [vmem:[%s3654 + $0x1d0] sm:$0xff]
    %v3714 = vld [vmem:[%s3654 + $0x1d8] sm:$0xff]
    %v3715 = vld [vmem:[%s3654 + $0x1e0] sm:$0xff]
    %v3716 = vld [vmem:[%s3654 + $0x1e8] sm:$0xff]
    %v3717 = vld [vmem:[%s3654 + $0x1f0] sm:$0xff]
    %v3718 = vld [vmem:[%s3654 + $0x1f8] sm:$0xff]
    %v3720 = vrot.slane %v3024, 4
    %3722 = vmatprep.subr.mxu0 %v3656
    %3723 = vmatpush1.msra.mxu0 %v3655
    %3724 = vmatprep.subr.mxu0 %v3660
    %3725 = vmatpush1.msra.mxu0 %v3659
    %3726 = vmatprep.subr.mxu0 %v3664
    %3727 = vmatpush1.msra.mxu0 %v3663
    %3728 = vmatprep.subr.mxu0 %v3668
    %3729 = vmatpush1.msra.mxu0 %v3667
    %3730 = vmatprep.subr.mxu0 %v3672
    %3731 = vmatpush1.msra.mxu0 %v3671
    %3732 = vmatprep.subr.mxu0 %v3676
    %3733 = vmatpush1.msra.mxu0 %v3675
    %3734 = vmatprep.subr.mxu0 %v3680
    %3735 = vmatpush1.msra.mxu0 %v3679
    %3736 = vmatprep.subr.mxu0 %v3684
    %3737 = vmatpush1.msra.mxu0 %v3683
    %3738 = vmatprep.subr.mxu0 %v3688
    %3739 = vmatpush1.msra.mxu0 %v3687
    %3740 = vmatprep.subr.mxu0 %v3692
    %3741 = vmatpush1.msra.mxu0 %v3691
    %3742 = vmatprep.subr.mxu0 %v3696
    %3743 = vmatpush1.msra.mxu0 %v3695
    %3744 = vmatprep.subr.mxu0 %v3700
    %3745 = vmatpush1.msra.mxu0 %v3699
    %3746 = vmatprep.subr.mxu0 %v3704
    %3747 = vmatpush1.msra.mxu0 %v3703
    %3748 = vmatprep.subr.mxu0 %v3708
    %3749 = vmatpush1.msra.mxu0 %v3707
    %3750 = vmatprep.subr.mxu0 %v3712
    %3751 = vmatpush1.msra.mxu0 %v3711
    %3752 = vmatprep.subr.mxu0 %v3716
    %3753 = vmatpush1.msra.mxu0 %v3715
    %3754 = vmatprep.subr.mxu0 0.0
    %3755 = vmatpush1.msra.mxu0 0.0
    %3756 = vmatprep.subr.mxu0 0.0
    %3757 = vmatpush1.msra.mxu0 0.0
    %3758 = vmatprep.subr.mxu0 0.0
    %3759 = vmatpush1.msra.mxu0 0.0
    %3760 = vmatprep.subr.mxu0 0.0
    %3761 = vmatpush1.msra.mxu0 0.0
    %3762 = vmatprep.subr.mxu0 0.0
    %3763 = vmatpush1.msra.mxu0 0.0
    %3764 = vmatprep.subr.mxu0 0.0
    %3765 = vmatpush1.msra.mxu0 0.0
    %3766 = vmatprep.subr.mxu0 0.0
    %3767 = vmatpush1.msra.mxu0 0.0
    %3768 = vmatprep.subr.mxu0 0.0
    %3769 = vmatpush1.msra.mxu0 0.0
    %3770 = vmatprep.subr.mxu0 0.0
    %3771 = vmatpush1.msra.mxu0 0.0
    %3772 = vmatprep.subr.mxu0 0.0
    %3773 = vmatpush1.msra.mxu0 0.0
    %3774 = vmatprep.subr.mxu0 0.0
    %3775 = vmatpush1.msra.mxu0 0.0
    %3776 = vmatprep.subr.mxu0 0.0
    %3777 = vmatpush1.msra.mxu0 0.0
    %3778 = vmatprep.subr.mxu0 0.0
    %3779 = vmatpush1.msra.mxu0 0.0
    %3780 = vmatprep.subr.mxu0 0.0
    %3781 = vmatpush1.msra.mxu0 0.0
    %3782 = vmatprep.subr.mxu0 0.0
    %3783 = vmatpush1.msra.mxu0 0.0
    %3784 = vmatprep.subr.mxu0 0.0
    %3785 = vmatpush1.msra.mxu0 0.0
    %3786 = vmatprep.mubr.f32.mxu0 0.0
    %3787 = vmatmul.mubr.f32.gmra.mrb[0].mxu0 %v3720
    %v3788 = vpop.f32.mrb[0].mxu0
    %v3789 = vadd.f32 0.0, %v3788
    %v3790 = vpop.f32.mrb[0].mxu0
    %v3791 = vadd.f32 0.0, %v3790
    %3792 = vdwg.mxu0
    %3793 = vmatprep.subr.mxu0 %v3658
    %3794 = vmatpush1.msra.mxu0 %v3657
    %3795 = vmatprep.subr.mxu0 %v3662
    %3796 = vmatpush1.msra.mxu0 %v3661
    %3797 = vmatprep.subr.mxu0 %v3666
    %3798 = vmatpush1.msra.mxu0 %v3665
    %3799 = vmatprep.subr.mxu0 %v3670
    %3800 = vmatpush1.msra.mxu0 %v3669
    %3801 = vmatprep.subr.mxu0 %v3674
    %3802 = vmatpush1.msra.mxu0 %v3673
    %3803 = vmatprep.subr.mxu0 %v3678
    %3804 = vmatpush1.msra.mxu0 %v3677
    %3805 = vmatprep.subr.mxu0 %v3682
    %3806 = vmatpush1.msra.mxu0 %v3681
    %3807 = vmatprep.subr.mxu0 %v3686
    %3808 = vmatpush1.msra.mxu0 %v3685
    %3809 = vmatprep.subr.mxu0 %v3690
    %3810 = vmatpush1.msra.mxu0 %v3689
    %3811 = vmatprep.subr.mxu0 %v3694
    %3812 = vmatpush1.msra.mxu0 %v3693
    %3813 = vmatprep.subr.mxu0 %v3698
    %3814 = vmatpush1.msra.mxu0 %v3697
    %3815 = vmatprep.subr.mxu0 %v3702
    %3816 = vmatpush1.msra.mxu0 %v3701
    %3817 = vmatprep.subr.mxu0 %v3706
    %3818 = vmatpush1.msra.mxu0 %v3705
    %3819 = vmatprep.subr.mxu0 %v3710
    %3820 = vmatpush1.msra.mxu0 %v3709
    %3821 = vmatprep.subr.mxu0 %v3714
    %3822 = vmatpush1.msra.mxu0 %v3713
    %3823 = vmatprep.subr.mxu0 %v3718
    %3824 = vmatpush1.msra.mxu0 %v3717
    %3825 = vmatprep.subr.mxu0 0.0
    %3826 = vmatpush1.msra.mxu0 0.0
    %3827 = vmatprep.subr.mxu0 0.0
    %3828 = vmatpush1.msra.mxu0 0.0
    %3829 = vmatprep.subr.mxu0 0.0
    %3830 = vmatpush1.msra.mxu0 0.0
    %3831 = vmatprep.subr.mxu0 0.0
    %3832 = vmatpush1.msra.mxu0 0.0
    %3833 = vmatprep.subr.mxu0 0.0
    %3834 = vmatpush1.msra.mxu0 0.0
    %3835 = vmatprep.subr.mxu0 0.0
    %3836 = vmatpush1.msra.mxu0 0.0
    %3837 = vmatprep.subr.mxu0 0.0
    %3838 = vmatpush1.msra.mxu0 0.0
    %3839 = vmatprep.subr.mxu0 0.0
    %3840 = vmatpush1.msra.mxu0 0.0
    %3841 = vmatprep.subr.mxu0 0.0
    %3842 = vmatpush1.msra.mxu0 0.0
    %3843 = vmatprep.subr.mxu0 0.0
    %3844 = vmatpush1.msra.mxu0 0.0
    %3845 = vmatprep.subr.mxu0 0.0
    %3846 = vmatpush1.msra.mxu0 0.0
    %3847 = vmatprep.subr.mxu0 0.0
    %3848 = vmatpush1.msra.mxu0 0.0
    %3849 = vmatprep.subr.mxu0 0.0
    %3850 = vmatpush1.msra.mxu0 0.0
    %3851 = vmatprep.subr.mxu0 0.0
    %3852 = vmatpush1.msra.mxu0 0.0
    %3853 = vmatprep.subr.mxu0 0.0
    %3854 = vmatpush1.msra.mxu0 0.0
    %3855 = vmatprep.subr.mxu0 0.0
    %3856 = vmatpush1.msra.mxu0 0.0
    %3857 = vmatprep.mubr.f32.mxu0 0.0
    %3858 = vmatmul.mubr.f32.gmra.mrb[0].mxu0 %v3720
    %v3859 = vpop.f32.mrb[0].mxu0
    %v3860 = vadd.f32 0.0, %v3859
    %v3861 = vpop.f32.mrb[0].mxu0
    %v3862 = vadd.f32 0.0, %v3861
    %3863 = vdwg.mxu0
    %v3864 = vadd.f32 %v3650, %v3789
    %v3865 = vadd.f32 %v3651, %v3791
    %v3866 = vadd.f32 %v3652, %v3860
    %v3867 = vadd.f32 %v3653, %v3862
    %v3868 = vld [vmem:[%s8] sm:$0xf]
    %3870 = vset.pattern.permute.xlu0 0
    %3871 = vperm.xlu0 %3870, %v3868
    %v3872 = vpop.permute.xlu0 %3871
    %v3874 = vadd.f32 %v3864, %v3872
    %v3875 = vadd.f32 %v3865, %v3872
    %v3876 = vadd.f32 %v3866, %v3872
    %v3877 = vadd.f32 %v3867, %v3872
    %3878 = vst [vmem:[%s9] sm:$0xf] %v73
    %3879 = vst [vmem:[%s9 + $0x8] sm:$0xf] %v77
    %s3880 = scalar_lea.vmem %s9, 16
    %3881 = vst [vmem:[%s3880] sm:$0xf] %v75
    %3882 = vst [vmem:[%s3880 + $0x8] sm:$0xf] %v80
    %v3885 = vrot.slane %v3874, 4
    %v3886 = vrot.slane %v3875, 4
    %3889 = vst [vmem:[%s9] sm:$0xf0] %v3885
    %3890 = vst [vmem:[%s9 + $0x8] sm:$0xf0] %v3886
    %v3893 = vrot.slane %v3876, 4
    %v3894 = vrot.slane %v3877, 4
    %3897 = vst [vmem:[%s3880] sm:$0xf0] %v3893
    %3898 = vst [vmem:[%s3880 + $0x8] sm:$0xf0] %v3894
    // Predicated region
    $region50: #{unet_innermost_forward.1} parent=1 // pred_check
      _
    $region51: #{unet_innermost_forward.1} parent=1 // pred_check_branch
      %3900 = sbr.rel (0) target = $region53
    $region52: #{unet_innermost_forward.1} parent=1 // pred_region
      _
    $region53: #{unet_innermost_forward.1} parent=1 // pred_fallthru
      _
    // Predicated region
    $region54: #{unet_innermost_forward.1} parent=1 // pred_check
      _
    $region55: #{unet_innermost_forward.1} parent=1 // pred_check_branch
      %3902 = sbr.rel (0) target = $region57
    $region56: #{unet_innermost_forward.1} parent=1 // pred_region
      _
    $region57: #{unet_innermost_forward.1} parent=1 // pred_fallthru
      _
    %3903 = vsyncpa [#allocation3], 1
    %3904 = vsyncpa [#allocation5], 1

</llo_original>
